<compile_context>
chip_gen: v7x
topology: tpu7x:2x2x1
jax: 0.10.0
libtpu: 0.0.40
codegen_flags: <defaults>
</compile_context>

<pallas_src>
import functools
import math

import jax
import jax.numpy as jnp
import numpy as np
from jax.experimental import pallas as pl
from jax.experimental.pallas import tpu as pltpu


# ------------------------------ in-kernel helpers ------------------------------

def _ln_rows(x, g, b, eps=1e-5):
    """LayerNorm over the last dim; x (M, D) f32, g/b (1, D) f32."""
    mean = jnp.mean(x, axis=-1, keepdims=True)
    var = jnp.mean(jnp.square(x - mean), axis=-1, keepdims=True)
    return (x - mean) * jax.lax.rsqrt(var + eps) * g + b


# --------------------- fused full decoder stack (all layers) ---------------------

def _stack_kernel(x_ref, pe_ref, ln1_g, ln1_b, in_w, in_b, out_w, out_b,
                  ln2_g, ln2_b, fc_w, fc_b, proj_w, proj_b,
                  o_ref, res_ref, *, num_heads, bc, seq):
    """Grid = (batch_chunk, layer).  One ResidualAttentionBlock per grid step.

    x_ref/o_ref: (bc, S, D); weights are the current layer's slice (leading
    layer dim squeezed).  res_ref: (bc*S, D) f32 residual stream, resident in
    VMEM across the layer axis.
    """
    l = pl.program_id(1)
    n_layers = pl.num_programs(1)
    D = x_ref.shape[-1]
    M = bc * seq
    H = num_heads
    hd = D // H
    scale = 1.0 / math.sqrt(hd)

    # Layer 0: load the residual stream once and fold in the positional encoding.
    @pl.when(l == 0)
    def _():
        xin = x_ref[...].astype(jnp.float32) + pe_ref[...].astype(jnp.float32)
        res_ref[...] = xin.reshape(M, D)

    x = res_ref[...]                                       # (M, D) f32

    # ---------------- self-attention branch ----------------
    y = _ln_rows(x, ln1_g[...], ln1_b[...])
    qkv = jnp.dot(y.astype(jnp.bfloat16), in_w[...],
                  preferred_element_type=jnp.float32) + in_b[...]
    # Single bf16 cast of qkv; reshape only splits the (row) leading dim.
    qkv3 = qkv.astype(jnp.bfloat16).reshape(bc, seq, 3 * D)

    head_outs = []
    for h in range(H):                                     # H is tiny and static
        qh = qkv3[:, :, h * hd:(h + 1) * hd]               # (bc, S, hd) bf16
        kh = qkv3[:, :, D + h * hd:D + (h + 1) * hd]
        vh = qkv3[:, :, 2 * D + h * hd:2 * D + (h + 1) * hd]
        s = jnp.einsum('bqd,bkd->bqk', qh, kh,
                       preferred_element_type=jnp.float32) * scale
        s = s - jnp.max(s, axis=-1, keepdims=True)
        p = jnp.exp(s)
        p = p * pl.reciprocal(jnp.sum(p, axis=-1, keepdims=True), approx=True)
        head_outs.append(
            jnp.einsum('bqk,bkd->bqd', p.astype(jnp.bfloat16), vh,
                       preferred_element_type=jnp.float32))
    # Head concat followed by ONE (M,D)@(D,D) out-projection.
    attn = jnp.concatenate(head_outs, axis=-1).reshape(M, D)
    attn = jnp.dot(attn.astype(jnp.bfloat16), out_w[...],
                   preferred_element_type=jnp.float32) + out_b[...]
    x = x + attn

    # ---------------- MLP branch ----------------
    y = _ln_rows(x, ln2_g[...], ln2_b[...])
    hbuf = jnp.dot(y.astype(jnp.bfloat16), fc_w[...],
                   preferred_element_type=jnp.float32) + fc_b[...]
    hbuf = hbuf * jax.nn.sigmoid(1.702 * hbuf)             # QuickGELU (f32)
    m = jnp.dot(hbuf.astype(jnp.bfloat16), proj_w[...],
                preferred_element_type=jnp.float32) + proj_b[...]
    x = x + m

    res_ref[...] = x

    @pl.when(l == n_layers - 1)
    def _():
        o_ref[...] = x.reshape(bc, seq, D).astype(o_ref.dtype)


def decoder_stack(x, pe, blk, num_heads, max_rows=512):
    """x: (B, S, D), pe: (1, S, D).  Runs all layers in a single pallas_call."""
    B, S, D = x.shape
    NL = blk['in_w'].shape[0]
    # Fold as many batch elements as possible into the row dim (<= max_rows rows),
    # keeping bc a divisor of B so every block is full.
    bc = max(1, min(B, max_rows // max(S, 1)))
    while B % bc:
        bc -= 1

    kern = functools.partial(_stack_kernel, num_heads=num_heads, bc=bc, seq=S)
    wmap = lambda c, l: (l, 0, 0)       # per-layer weights follow the layer axis
    xmap = lambda c, l: (c, 0, 0)       # residual block constant across layers

    return pl.pallas_call(
        kern,
        grid=(B // bc, NL),
        in_specs=[
            pl.BlockSpec((bc, S, D), xmap),                 # x
            pl.BlockSpec((1, S, D), lambda c, l: (0, 0, 0)),  # pe (resident)
            pl.BlockSpec((None, 1, D), wmap),               # ln1_g
            pl.BlockSpec((None, 1, D), wmap),               # ln1_b
            pl.BlockSpec((None, D, 3 * D), wmap),           # in_w
            pl.BlockSpec((None, 1, 3 * D), wmap),           # in_b
            pl.BlockSpec((None, D, D), wmap),               # out_w
            pl.BlockSpec((None, 1, D), wmap),               # out_b
            pl.BlockSpec((None, 1, D), wmap),               # ln2_g
            pl.BlockSpec((None, 1, D), wmap),               # ln2_b
            pl.BlockSpec((None, D, 4 * D), wmap),           # fc_w
            pl.BlockSpec((None, 1, 4 * D), wmap),           # fc_b
            pl.BlockSpec((None, 4 * D, D), wmap),           # proj_w
            pl.BlockSpec((None, 1, D), wmap),               # proj_b
        ],
        out_specs=pl.BlockSpec((bc, S, D), xmap),
        out_shape=jax.ShapeDtypeStruct((B, S, D), jnp.float32),
        scratch_shapes=[pltpu.VMEM((bc * S, D), jnp.float32)],   # residual stream
        compiler_params=pltpu.CompilerParams(
            dimension_semantics=("parallel", "arbitrary"),
            vmem_limit_bytes=32 * 1024 * 1024),             # fits v7x scoped default
    )(x, pe, blk['ln1_g'], blk['ln1_b'], blk['in_w'], blk['in_b'],
      blk['out_w'], blk['out_b'], blk['ln2_g'], blk['ln2_b'],
      blk['fc_w'], blk['fc_b'], blk['proj_w'], blk['proj_b'])


# ------------------------------ embed / head kernels ------------------------------

def _embed_kernel(x_ref, w_ref, b_ref, o_ref):
    o = jnp.dot(x_ref[...].astype(jnp.bfloat16), w_ref[...],
                preferred_element_type=jnp.float32) + b_ref[...]
    o_ref[...] = o.astype(o_ref.dtype)


def decoder_embed(x, w, b, tm=256):
    """x: (M, hidden) -> (M, D); row-tiled grid so VMEM stays bounded for large M."""
    M, K = x.shape
    N = w.shape[1]
    return pl.pallas_call(
        _embed_kernel,
        grid=(pl.cdiv(M, tm),),
        in_specs=[pl.BlockSpec((tm, K), lambda i: (i, 0)),
                  pl.BlockSpec((K, N), lambda i: (0, 0)),
                  pl.BlockSpec((1, N), lambda i: (0, 0))],
        out_specs=pl.BlockSpec((tm, N), lambda i: (i, 0)),
        out_shape=jax.ShapeDtypeStruct((M, N), jnp.float32),
        compiler_params=pltpu.CompilerParams(
            dimension_semantics=("parallel",)),
    )(x, w, b)


def _head_kernel(x_ref, g_ref, b_ref, w_ref, pb_ref, o_ref):
    x = x_ref[...].astype(jnp.float32)
    y = _ln_rows(x, g_ref[...], b_ref[...])
    o = jnp.dot(y.astype(jnp.bfloat16), w_ref[...],
                preferred_element_type=jnp.float32) + pb_ref[...]
    o_ref[...] = o.astype(o_ref.dtype)


def norm_and_pred(x, g, b, w_pad, b_pad, tm=256):
    """Fused decoder_norm + decoder_pred; row-tiled, lane-dense (padded) output."""
    M, D = x.shape
    Np = w_pad.shape[1]
    return pl.pallas_call(
        _head_kernel,
        grid=(pl.cdiv(M, tm),),
        in_specs=[pl.BlockSpec((tm, D), lambda i: (i, 0)),
                  pl.BlockSpec((1, D), lambda i: (0, 0)),
                  pl.BlockSpec((1, D), lambda i: (0, 0)),
                  pl.BlockSpec((D, Np), lambda i: (0, 0)),
                  pl.BlockSpec((1, Np), lambda i: (0, 0))],
        out_specs=pl.BlockSpec((tm, Np), lambda i: (i, 0)),
        out_shape=jax.ShapeDtypeStruct((M, Np), jnp.float32),
        compiler_params=pltpu.CompilerParams(
            dimension_semantics=("parallel",)),
    )(x, g, b, w_pad, b_pad)


# ------------------------------- MIMHead forward -------------------------------

def mim_head_forward(params, x, ids_restore, num_heads, decoded_size):
    """x: (B, Lvis, hidden), ids_restore: (B, L) int32 -> (B, L, 12, decoded_size)."""
    B, Lvis, hidden = x.shape
    D = params['embed_w'].shape[1]
    L = ids_restore.shape[1]
    pred_out = decoded_size * 12

    # decoder_embed (row-tiled Pallas linear)
    x = decoder_embed(x.reshape(B * Lvis, hidden),
                      params['embed_w'], params['embed_b']).reshape(B, Lvis, D)

    # append mask tokens + unshuffle (MAE-style); data-dependent gather stays in JAX.
    # TODO(synk): fuse this gather into the fused stack via scalar-prefetched ids.
    n_mask = L + 1 - Lvis
    mask_tokens = jnp.broadcast_to(params['mask_token'], (B, n_mask, D))
    x_ = jnp.concatenate([x[:, 1:, :], mask_tokens], axis=1)            # (B, L, D)
    idx = jnp.broadcast_to(ids_restore[:, :, None], (B, L, D))
    x_ = jnp.take_along_axis(x_, idx, axis=1)
    x = jnp.concatenate([x[:, :1, :], x_], axis=1)                      # (B, L+1, D)

    # Full decoder stack (pos-encoding add fused into layer 0 of the kernel).
    # Batch-first == seq-first here because MHA is called without any mask.
    S = L + 1
    pe = params['pe'][:, :S]                                            # (1, S, D)
    x = decoder_stack(x, pe, params['blocks'], num_heads)

    # final LayerNorm + prediction head (lane-dense padded output, slice off pad)
    out = norm_and_pred(x.reshape(B * S, D), params['norm_g'], params['norm_b'],
                        params['pred_w_pad'], params['pred_b_pad'])
    out = out[:, :pred_out].reshape(B, S, pred_out)
    out = out[:, 1:, :]                                                 # drop CLS
    return out.reshape(B, L, -1, decoded_size)                          # (B, L, 12, ds)


# ------------------------------- parameter init -------------------------------

def make_positional_encoding(d_model, max_len):
    position = np.arange(max_len)[:, None].astype(np.float32)
    div_term = np.exp(np.arange(0, d_model, 2).astype(np.float32) *
                      (-math.log(10000.0) / d_model))
    pe = np.zeros((1, max_len, d_model), dtype=np.float32)
    pe[0, :, 0::2] = np.sin(position * div_term)
    pe[0, :, 1::2] = np.cos(position * div_term)
    return jnp.asarray(pe)


def init_params(key, hidden_dim, dec_dim, num_layers, num_heads, pred_out):
    keys = iter(jax.random.split(key, 64))

    def w_bf16(shape, std=0.02):
        return (jax.random.normal(next(keys), shape, jnp.float32) * std).astype(jnp.bfloat16)

    pred_pad = ((pred_out + 127) // 128) * 128          # 300 -> 384 lane-dense
    pred_w = w_bf16((dec_dim, pred_out))
    pred_w_pad = jnp.zeros((dec_dim, pred_pad), jnp.bfloat16).at[:, :pred_out].set(pred_w)

    NL = num_layers
    params = {
        'embed_w': w_bf16((hidden_dim, dec_dim)),
        'embed_b': jnp.zeros((1, dec_dim), jnp.float32),
        'mask_token': (jax.random.normal(next(keys), (1, 1, dec_dim), jnp.float32) * 0.02),
        'pe': make_positional_encoding(dec_dim, 512),
        'norm_g': jnp.ones((1, dec_dim), jnp.float32),
        'norm_b': jnp.zeros((1, dec_dim), jnp.float32),
        'pred_w_pad': pred_w_pad,
        'pred_b_pad': jnp.zeros((1, pred_pad), jnp.float32),
        # Per-layer weights stacked along a leading layer axis (layer-indexed
        # BlockSpecs in the fused stack kernel pipeline layer l+1 behind layer l).
        'blocks': {
            'ln1_g': jnp.ones((NL, 1, dec_dim), jnp.float32),
            'ln1_b': jnp.zeros((NL, 1, dec_dim), jnp.float32),
            'in_w': w_bf16((NL, dec_dim, 3 * dec_dim)),
            'in_b': jnp.zeros((NL, 1, 3 * dec_dim), jnp.float32),
            'out_w': w_bf16((NL, dec_dim, dec_dim)),
            'out_b': jnp.zeros((NL, 1, dec_dim), jnp.float32),
            'ln2_g': jnp.ones((NL, 1, dec_dim), jnp.float32),
            'ln2_b': jnp.zeros((NL, 1, dec_dim), jnp.float32),
            'fc_w': w_bf16((NL, dec_dim, 4 * dec_dim)),
            'fc_b': jnp.zeros((NL, 1, 4 * dec_dim), jnp.float32),
            'proj_w': w_bf16((NL, 4 * dec_dim, dec_dim)),
            'proj_b': jnp.zeros((NL, 1, dec_dim), jnp.float32),
        },
    }
    return params


# ------------------------------------ main ------------------------------------

if __name__ == "__main__":
    # config (small, consistent with the module)
    hidden_dim = 32
    dec_dim = 32
    mim_decoder_num_layers = 2      # Transformer(layers=num_layers+1) -> num_layers resblocks
    mim_decoder_num_heads = 4
    conv_feature_layers = [(32, 5, 5), (32, 5, 5)]

    # inferred_decoded_size exactly as in __init__
    dummy_input_length = 5000
    inferred = float(dummy_input_length)
    for (_, ksz, stride) in conv_feature_layers:
        inferred = np.floor((inferred - ksz) / stride + 1)
    inferred_decoded_size = int(np.floor(dummy_input_length / inferred))   # 25
    pred_out = inferred_decoded_size * 12                                  # 300

    # inputs: x is (B, 1 + n_visible, hidden_dim), ids_restore is (B, L) permutation
    B, L, n_vis = 2, 8, 4
    Lvis = 1 + n_vis

    key = jax.random.PRNGKey(0)
    k_param, k_x, k_perm = jax.random.split(key, 3)
    params = init_params(k_param, hidden_dim, dec_dim,
                         mim_decoder_num_layers, mim_decoder_num_heads, pred_out)

    x = jax.random.normal(k_x, (B, Lvis, hidden_dim), jnp.float32)
    ids_restore = jnp.stack(
        [jax.random.permutation(k, L) for k in jax.random.split(k_perm, B)]
    ).astype(jnp.int32)

    fwd = jax.jit(functools.partial(mim_head_forward,
                                    num_heads=mim_decoder_num_heads,
                                    decoded_size=inferred_decoded_size))
    out = fwd(params, x, ids_restore)
    out = jax.block_until_ready(out)

    assert out.shape == (B, L, 12, inferred_decoded_size), out.shape
    assert bool(jnp.all(jnp.isfinite(out)))
    print("KERNEL_OK")
</pallas_src>

<mosaic_0001>
module attributes {stable_mosaic.version = 11 : i64} {
  func.func @_embed_kernel(%arg0: i32, %arg1: memref<256x32xf32, #tpu.memory_space<vmem>>, %arg2: memref<32x32xbf16, #tpu.memory_space<vmem>>, %arg3: memref<1x32xf32, #tpu.memory_space<vmem>>, %arg4: memref<256x32xf32, #tpu.memory_space<vmem>>) attributes {dimension_semantics = [#tpu.dimension_semantics<parallel>], iteration_bounds = array<i64: 1>, scalar_prefetch = 0 : i64, scratch_operands = 0 : i64, tpu.core_type = #tpu.core_type<tc>, window_params = [{transform_indices = @transform_0, window_bounds = array<i64: 256, 32>}, {pipeline_mode = #tpu.pipeline_mode<synchronous>, transform_indices = @transform_1, window_bounds = array<i64: 32, 32>}, {pipeline_mode = #tpu.pipeline_mode<synchronous>, transform_indices = @transform_2, window_bounds = array<i64: 1, 32>}, {transform_indices = @transform_3, window_bounds = array<i64: 256, 32>}]} {
    %c0 = arith.constant 0 : index
    %c0_0 = arith.constant 0 : index
    %0 = vector.load %arg1[%c0, %c0_0] : memref<256x32xf32, #tpu.memory_space<vmem>>, vector<256x32xf32>
    %1 = arith.truncf %0 : vector<256x32xf32> to vector<256x32xbf16>
    %c0_1 = arith.constant 0 : index
    %c0_2 = arith.constant 0 : index
    %2 = vector.load %arg2[%c0_1, %c0_2] : memref<32x32xbf16, #tpu.memory_space<vmem>>, vector<32x32xbf16>
    %cst = arith.constant dense<0.000000e+00> : vector<256x32xf32>
    %3 = tpu.matmul %1, %2, %cst {dimension_numbers = #tpu.dot_dimension_numbers<[1], [0], [0], [1], [0, 0, 1, 1], [], []>} : vector<256x32xbf16>, vector<32x32xbf16>, vector<256x32xf32> -> vector<256x32xf32>
    %c0_3 = arith.constant 0 : index
    %c0_4 = arith.constant 0 : index
    %4 = vector.load %arg3[%c0_3, %c0_4] : memref<1x32xf32, #tpu.memory_space<vmem>>, vector<1x32xf32>
    %5 = vector.broadcast %4 : vector<1x32xf32> to vector<256x32xf32>
    %6 = arith.addf %3, %5 : vector<256x32xf32>
    %c0_5 = arith.constant 0 : index
    %c0_6 = arith.constant 0 : index
    %7 = vector.load %arg4[%c0_5, %c0_6] : memref<256x32xf32, #tpu.memory_space<vmem>>, vector<256x32xf32>
    tpu.vector_store %arg4[%c0_5, %c0_6], %6 {strides = array<i32>} : memref<256x32xf32, #tpu.memory_space<vmem>>, vector<256x32xf32>,
    return
  }
  func.func @transform_0(%arg0: i32) -> (i32, i32) {
    %c0_i32 = arith.constant 0 : i32
    %c0_i32_0 = arith.constant 0 : i32
    return %arg0, %c0_i32 : i32, i32
  }
  func.func @transform_1(%arg0: i32) -> (i32, i32) {
    %c0_i32 = arith.constant 0 : i32
    %c0_i32_0 = arith.constant 0 : i32
    %c0_i32_1 = arith.constant 0 : i32
    return %c0_i32, %c0_i32_0 : i32, i32
  }
  func.func @transform_2(%arg0: i32) -> (i32, i32) {
    %c0_i32 = arith.constant 0 : i32
    %c0_i32_0 = arith.constant 0 : i32
    %c0_i32_1 = arith.constant 0 : i32
    return %c0_i32, %c0_i32_0 : i32, i32
  }
  func.func @transform_3(%arg0: i32) -> (i32, i32) {
    %c0_i32 = arith.constant 0 : i32
    %c0_i32_0 = arith.constant 0 : i32
    return %arg0, %c0_i32 : i32, i32
  }
}

module attributes {stable_mosaic.version = 11 : i64} {
  func.func @_stack_kernel(%arg0: i32, %arg1: i32, %arg2: memref<2x9x32xf32, #tpu.memory_space<vmem>>, %arg3: memref<1x9x32xf32, #tpu.memory_space<vmem>>, %arg4: memref<1x1x32xf32, #tpu.memory_space<vmem>>, %arg5: memref<1x1x32xf32, #tpu.memory_space<vmem>>, %arg6: memref<1x32x96xbf16, #tpu.memory_space<vmem>>, %arg7: memref<1x1x96xf32, #tpu.memory_space<vmem>>, %arg8: memref<1x32x32xbf16, #tpu.memory_space<vmem>>, %arg9: memref<1x1x32xf32, #tpu.memory_space<vmem>>, %arg10: memref<1x1x32xf32, #tpu.memory_space<vmem>>, %arg11: memref<1x1x32xf32, #tpu.memory_space<vmem>>, %arg12: memref<1x32x128xbf16, #tpu.memory_space<vmem>>, %arg13: memref<1x1x128xf32, #tpu.memory_space<vmem>>, %arg14: memref<1x128x32xbf16, #tpu.memory_space<vmem>>, %arg15: memref<1x1x32xf32, #tpu.memory_space<vmem>>, %arg16: memref<2x9x32xf32, #tpu.memory_space<vmem>>, %arg17: memref<18x32xf32, #tpu.memory_space<vmem>>) attributes {dimension_semantics = [#tpu.dimension_semantics<parallel>, #tpu.dimension_semantics<arbitrary>], iteration_bounds = array<i64: 1, 2>, scalar_prefetch = 0 : i64, scratch_operands = 1 : i64, tpu.core_type = #tpu.core_type<tc>, window_params = [{transform_indices = @transform_0, window_bounds = array<i64: 2, 9, 32>}, {pipeline_mode = #tpu.pipeline_mode<synchronous>, transform_indices = @transform_1, window_bounds = array<i64: 1, 9, 32>}, {transform_indices = @transform_2, window_bounds = array<i64: 1, 1, 32>}, {transform_indices = @transform_3, window_bounds = array<i64: 1, 1, 32>}, {transform_indices = @transform_4, window_bounds = array<i64: 1, 32, 96>}, {transform_indices = @transform_5, window_bounds = array<i64: 1, 1, 96>}, {transform_indices = @transform_6, window_bounds = array<i64: 1, 32, 32>}, {transform_indices = @transform_7, window_bounds = array<i64: 1, 1, 32>}, {transform_indices = @transform_8, window_bounds = array<i64: 1, 1, 32>}, {transform_indices = @transform_9, window_bounds = array<i64: 1, 1, 32>}, {transform_indices = @transform_10, window_bounds = array<i64: 1, 32, 128>}, {transform_indices = @transform_11, window_bounds = array<i64: 1, 1, 128>}, {transform_indices = @transform_12, window_bounds = array<i64: 1, 128, 32>}, {transform_indices = @transform_13, window_bounds = array<i64: 1, 1, 32>}, {transform_indices = @transform_14, window_bounds = array<i64: 2, 9, 32>}]} {
    %c0_i32 = arith.constant 0 : i32
    %0 = arith.cmpi eq, %arg1, %c0_i32 : i32
    %1 = arith.extui %0 : i1 to i32
    %c0_i32_0 = arith.constant 0 : i32
    %2 = arith.cmpi ne, %1, %c0_i32_0 : i32
    scf.if %2 {
      %c0_76 = arith.constant 0 : index
      %c0_77 = arith.constant 0 : index
      %c0_78 = arith.constant 0 : index
      %178 = vector.load %arg2[%c0_76, %c0_77, %c0_78] : memref<2x9x32xf32, #tpu.memory_space<vmem>>, vector<2x9x32xf32>
      %c0_79 = arith.constant 0 : index
      %c0_80 = arith.constant 0 : index
      %c0_81 = arith.constant 0 : index
      %179 = vector.load %arg3[%c0_79, %c0_80, %c0_81] : memref<1x9x32xf32, #tpu.memory_space<vmem>>, vector<1x9x32xf32>
      %180 = vector.broadcast %179 : vector<1x9x32xf32> to vector<2x9x32xf32>
      %181 = arith.addf %178, %180 : vector<2x9x32xf32>
      %182 = vector.shape_cast %181 : vector<2x9x32xf32> to vector<18x32xf32>
      %c0_82 = arith.constant 0 : index
      %c0_83 = arith.constant 0 : index
      %183 = vector.load %arg17[%c0_82, %c0_83] : memref<18x32xf32, #tpu.memory_space<vmem>>, vector<18x32xf32>
      tpu.vector_store %arg17[%c0_82, %c0_83], %182 {strides = array<i32>} : memref<18x32xf32, #tpu.memory_space<vmem>>, vector<18x32xf32>,
    } else {
    }
    %c0 = arith.constant 0 : index
    %c0_1 = arith.constant 0 : index
    %3 = vector.load %arg17[%c0, %c0_1] : memref<18x32xf32, #tpu.memory_space<vmem>>, vector<18x32xf32>
    %c0_2 = arith.constant 0 : index
    %c0_3 = arith.constant 0 : index
    %c0_4 = arith.constant 0 : index
    %4 = vector.load %arg4[%c0_2, %c0_3, %c0_4] : memref<1x1x32xf32, #tpu.memory_space<vmem>>, vector<1x1x32xf32>
    %5 = vector.shape_cast %4 : vector<1x1x32xf32> to vector<1x32xf32>
    %c0_5 = arith.constant 0 : index
    %c0_6 = arith.constant 0 : index
    %c0_7 = arith.constant 0 : index
    %6 = vector.load %arg5[%c0_5, %c0_6, %c0_7] : memref<1x1x32xf32, #tpu.memory_space<vmem>>, vector<1x1x32xf32>
    %7 = vector.shape_cast %6 : vector<1x1x32xf32> to vector<1x32xf32>
    %cst = arith.constant dense<0.000000e+00> : vector<18xf32>
    %8 = vector.multi_reduction <add>, %3, %cst [1] : vector<18x32xf32> to vector<18xf32>
    %9 = vector.shape_cast %8 : vector<18xf32> to vector<18x1xf32>
    %cst_8 = arith.constant 3.200000e+01 : f32
    %10 = vector.broadcast %cst_8 : f32 to vector<18x1xf32>
    %11 = arith.divf %9, %10 : vector<18x1xf32>
    %12 = vector.broadcast %11 : vector<18x1xf32> to vector<18x32xf32>
    %13 = arith.subf %3, %12 : vector<18x32xf32>
    %14 = arith.mulf %13, %13 : vector<18x32xf32>
    %cst_9 = arith.constant dense<0.000000e+00> : vector<18xf32>
    %15 = vector.multi_reduction <add>, %14, %cst_9 [1] : vector<18x32xf32> to vector<18xf32>
    %16 = vector.shape_cast %15 : vector<18xf32> to vector<18x1xf32>
    %cst_10 = arith.constant 3.200000e+01 : f32
    %17 = vector.broadcast %cst_10 : f32 to vector<18x1xf32>
    %18 = arith.divf %16, %17 : vector<18x1xf32>
    %19 = vector.broadcast %11 : vector<18x1xf32> to vector<18x32xf32>
    %20 = arith.subf %3, %19 : vector<18x32xf32>
    %cst_11 = arith.constant 9.99999974E-6 : f32
    %21 = vector.broadcast %cst_11 : f32 to vector<18x1xf32>
    %22 = arith.addf %18, %21 : vector<18x1xf32>
    %23 = math.rsqrt %22 : vector<18x1xf32>
    %24 = vector.broadcast %23 : vector<18x1xf32> to vector<18x32xf32>
    %25 = arith.mulf %20, %24 : vector<18x32xf32>
    %26 = vector.broadcast %5 : vector<1x32xf32> to vector<18x32xf32>
    %27 = arith.mulf %25, %26 : vector<18x32xf32>
    %28 = vector.broadcast %7 : vector<1x32xf32> to vector<18x32xf32>
    %29 = arith.addf %27, %28 : vector<18x32xf32>
    %30 = arith.truncf %29 : vector<18x32xf32> to vector<18x32xbf16>
    %c0_12 = arith.constant 0 : index
    %c0_13 = arith.constant 0 : index
    %c0_14 = arith.constant 0 : index
    %31 = vector.load %arg6[%c0_12, %c0_13, %c0_14] : memref<1x32x96xbf16, #tpu.memory_space<vmem>>, vector<1x32x96xbf16>
    %32 = vector.shape_cast %31 : vector<1x32x96xbf16> to vector<32x96xbf16>
    %cst_15 = arith.constant dense<0.000000e+00> : vector<18x96xf32>
    %33 = tpu.matmul %30, %32, %cst_15 {dimension_numbers = #tpu.dot_dimension_numbers<[1], [0], [0], [1], [0, 0, 1, 1], [], []>} : vector<18x32xbf16>, vector<32x96xbf16>, vector<18x96xf32> -> vector<18x96xf32>
    %c0_16 = arith.constant 0 : index
    %c0_17 = arith.constant 0 : index
    %c0_18 = arith.constant 0 : index
    %34 = vector.load %arg7[%c0_16, %c0_17, %c0_18] : memref<1x1x96xf32, #tpu.memory_space<vmem>>, vector<1x1x96xf32>
    %35 = vector.shape_cast %34 : vector<1x1x96xf32> to vector<1x96xf32>
    %36 = vector.broadcast %35 : vector<1x96xf32> to vector<18x96xf32>
    %37 = arith.addf %33, %36 : vector<18x96xf32>
    %38 = arith.truncf %37 : vector<18x96xf32> to vector<18x96xbf16>
    %39 = vector.shape_cast %38 : vector<18x96xbf16> to vector<2x9x96xbf16>
    %40 = vector.extract_strided_slice %39 {offsets = [0, 0, 0], sizes = [2, 9, 8], strides = [1, 1, 1]} : vector<2x9x96xbf16> to vector<2x9x8xbf16>
    %41 = vector.extract_strided_slice %39 {offsets = [0, 0, 32], sizes = [2, 9, 8], strides = [1, 1, 1]} : vector<2x9x96xbf16> to vector<2x9x8xbf16>
    %42 = vector.extract_strided_slice %39 {offsets = [0, 0, 64], sizes = [2, 9, 8], strides = [1, 1, 1]} : vector<2x9x96xbf16> to vector<2x9x8xbf16>
    "tpu.trace_start"() <{level = 10 : i32, message = "bqd,bkd->bqk"}> : () -> ()
    %cst_19 = arith.constant dense<0.000000e+00> : vector<2x9x9xf32>
    %43 = tpu.matmul %40, %41, %cst_19 {dimension_numbers = #tpu.dot_dimension_numbers<[2], [2], [1], [1], [0, 0, 0, 1, 1, 1], [0], [0]>} : vector<2x9x8xbf16>, vector<2x9x8xbf16>, vector<2x9x9xf32> -> vector<2x9x9xf32>
    "tpu.trace_stop"() : () -> ()
    %cst_20 = arith.constant 0.353553385 : f32
    %44 = vector.broadcast %cst_20 : f32 to vector<2x9x9xf32>
    %45 = arith.mulf %43, %44 : vector<2x9x9xf32>
    %cst_21 = arith.constant dense<0xFF800000> : vector<2x9xf32>
    %46 = vector.multi_reduction <maximumf>, %45, %cst_21 [2] : vector<2x9x9xf32> to vector<2x9xf32>
    %47 = vector.shape_cast %46 : vector<2x9xf32> to vector<2x9x1xf32>
    %48 = vector.broadcast %47 : vector<2x9x1xf32> to vector<2x9x9xf32>
    %49 = arith.subf %45, %48 : vector<2x9x9xf32>
    %50 = math.exp %49 : vector<2x9x9xf32>
    %cst_22 = arith.constant dense<0.000000e+00> : vector<2x9xf32>
    %51 = vector.multi_reduction <add>, %50, %cst_22 [2] : vector<2x9x9xf32> to vector<2x9xf32>
    %52 = vector.shape_cast %51 : vector<2x9xf32> to vector<2x9x1xf32>
    %53 = tpu.reciprocal %52 {approx = true} : vector<2x9x1xf32> -> vector<2x9x1xf32>
    %54 = vector.broadcast %53 : vector<2x9x1xf32> to vector<2x9x9xf32>
    %55 = arith.mulf %50, %54 : vector<2x9x9xf32>
    %56 = arith.truncf %55 : vector<2x9x9xf32> to vector<2x9x9xbf16>
    "tpu.trace_start"() <{level = 10 : i32, message = "bqk,bkd->bqd"}> : () -> ()
    %cst_23 = arith.constant dense<0.000000e+00> : vector<2x9x8xf32>
    %57 = tpu.matmul %56, %42, %cst_23 {dimension_numbers = #tpu.dot_dimension_numbers<[2], [1], [1], [2], [0, 0, 0, 1, 1, 2], [0], [0]>} : vector<2x9x9xbf16>, vector<2x9x8xbf16>, vector<2x9x8xf32> -> vector<2x9x8xf32>
    "tpu.trace_stop"() : () -> ()
    %58 = vector.extract_strided_slice %39 {offsets = [0, 0, 8], sizes = [2, 9, 8], strides = [1, 1, 1]} : vector<2x9x96xbf16> to vector<2x9x8xbf16>
    %59 = vector.extract_strided_slice %39 {offsets = [0, 0, 40], sizes = [2, 9, 8], strides = [1, 1, 1]} : vector<2x9x96xbf16> to vector<2x9x8xbf16>
    %60 = vector.extract_strided_slice %39 {offsets = [0, 0, 72], sizes = [2, 9, 8], strides = [1, 1, 1]} : vector<2x9x96xbf16> to vector<2x9x8xbf16>
    "tpu.trace_start"() <{level = 10 : i32, message = "bqd,bkd->bqk"}> : () -> ()
    %cst_24 = arith.constant dense<0.000000e+00> : vector<2x9x9xf32>
    %61 = tpu.matmul %58, %59, %cst_24 {dimension_numbers = #tpu.dot_dimension_numbers<[2], [2], [1], [1], [0, 0, 0, 1, 1, 1], [0], [0]>} : vector<2x9x8xbf16>, vector<2x9x8xbf16>, vector<2x9x9xf32> -> vector<2x9x9xf32>
    "tpu.trace_stop"() : () -> ()
    %cst_25 = arith.constant 0.353553385 : f32
    %62 = vector.broadcast %cst_25 : f32 to vector<2x9x9xf32>
    %63 = arith.mulf %61, %62 : vector<2x9x9xf32>
    %cst_26 = arith.constant dense<0xFF800000> : vector<2x9xf32>
    %64 = vector.multi_reduction <maximumf>, %63, %cst_26 [2] : vector<2x9x9xf32> to vector<2x9xf32>
    %65 = vector.shape_cast %64 : vector<2x9xf32> to vector<2x9x1xf32>
    %66 = vector.broadcast %65 : vector<2x9x1xf32> to vector<2x9x9xf32>
    %67 = arith.subf %63, %66 : vector<2x9x9xf32>
    %68 = math.exp %67 : vector<2x9x9xf32>
    %cst_27 = arith.constant dense<0.000000e+00> : vector<2x9xf32>
    %69 = vector.multi_reduction <add>, %68, %cst_27 [2] : vector<2x9x9xf32> to vector<2x9xf32>
    %70 = vector.shape_cast %69 : vector<2x9xf32> to vector<2x9x1xf32>
    %71 = tpu.reciprocal %70 {approx = true} : vector<2x9x1xf32> -> vector<2x9x1xf32>
    %72 = vector.broadcast %71 : vector<2x9x1xf32> to vector<2x9x9xf32>
    %73 = arith.mulf %68, %72 : vector<2x9x9xf32>
    %74 = arith.truncf %73 : vector<2x9x9xf32> to vector<2x9x9xbf16>
    "tpu.trace_start"() <{level = 10 : i32, message = "bqk,bkd->bqd"}> : () -> ()
    %cst_28 = arith.constant dense<0.000000e+00> : vector<2x9x8xf32>
    %75 = tpu.matmul %74, %60, %cst_28 {dimension_numbers = #tpu.dot_dimension_numbers<[2], [1], [1], [2], [0, 0, 0, 1, 1, 2], [0], [0]>} : vector<2x9x9xbf16>, vector<2x9x8xbf16>, vector<2x9x8xf32> -> vector<2x9x8xf32>
    "tpu.trace_stop"() : () -> ()
    %76 = vector.extract_strided_slice %39 {offsets = [0, 0, 16], sizes = [2, 9, 8], strides = [1, 1, 1]} : vector<2x9x96xbf16> to vector<2x9x8xbf16>
    %77 = vector.extract_strided_slice %39 {offsets = [0, 0, 48], sizes = [2, 9, 8], strides = [1, 1, 1]} : vector<2x9x96xbf16> to vector<2x9x8xbf16>
    %78 = vector.extract_strided_slice %39 {offsets = [0, 0, 80], sizes = [2, 9, 8], strides = [1, 1, 1]} : vector<2x9x96xbf16> to vector<2x9x8xbf16>
    "tpu.trace_start"() <{level = 10 : i32, message = "bqd,bkd->bqk"}> : () -> ()
    %cst_29 = arith.constant dense<0.000000e+00> : vector<2x9x9xf32>
    %79 = tpu.matmul %76, %77, %cst_29 {dimension_numbers = #tpu.dot_dimension_numbers<[2], [2], [1], [1], [0, 0, 0, 1, 1, 1], [0], [0]>} : vector<2x9x8xbf16>, vector<2x9x8xbf16>, vector<2x9x9xf32> -> vector<2x9x9xf32>
    "tpu.trace_stop"() : () -> ()
    %cst_30 = arith.constant 0.353553385 : f32
    %80 = vector.broadcast %cst_30 : f32 to vector<2x9x9xf32>
    %81 = arith.mulf %79, %80 : vector<2x9x9xf32>
    %cst_31 = arith.constant dense<0xFF800000> : vector<2x9xf32>
    %82 = vector.multi_reduction <maximumf>, %81, %cst_31 [2] : vector<2x9x9xf32> to vector<2x9xf32>
    %83 = vector.shape_cast %82 : vector<2x9xf32> to vector<2x9x1xf32>
    %84 = vector.broadcast %83 : vector<2x9x1xf32> to vector<2x9x9xf32>
    %85 = arith.subf %81, %84 : vector<2x9x9xf32>
    %86 = math.exp %85 : vector<2x9x9xf32>
    %cst_32 = arith.constant dense<0.000000e+00> : vector<2x9xf32>
    %87 = vector.multi_reduction <add>, %86, %cst_32 [2] : vector<2x9x9xf32> to vector<2x9xf32>
    %88 = vector.shape_cast %87 : vector<2x9xf32> to vector<2x9x1xf32>
    %89 = tpu.reciprocal %88 {approx = true} : vector<2x9x1xf32> -> vector<2x9x1xf32>
    %90 = vector.broadcast %89 : vector<2x9x1xf32> to vector<2x9x9xf32>
    %91 = arith.mulf %86, %90 : vector<2x9x9xf32>
    %92 = arith.truncf %91 : vector<2x9x9xf32> to vector<2x9x9xbf16>
    "tpu.trace_start"() <{level = 10 : i32, message = "bqk,bkd->bqd"}> : () -> ()
    %cst_33 = arith.constant dense<0.000000e+00> : vector<2x9x8xf32>
    %93 = tpu.matmul %92, %78, %cst_33 {dimension_numbers = #tpu.dot_dimension_numbers<[2], [1], [1], [2], [0, 0, 0, 1, 1, 2], [0], [0]>} : vector<2x9x9xbf16>, vector<2x9x8xbf16>, vector<2x9x8xf32> -> vector<2x9x8xf32>
    "tpu.trace_stop"() : () -> ()
    %94 = vector.extract_strided_slice %39 {offsets = [0, 0, 24], sizes = [2, 9, 8], strides = [1, 1, 1]} : vector<2x9x96xbf16> to vector<2x9x8xbf16>
    %95 = vector.extract_strided_slice %39 {offsets = [0, 0, 56], sizes = [2, 9, 8], strides = [1, 1, 1]} : vector<2x9x96xbf16> to vector<2x9x8xbf16>
    %96 = vector.extract_strided_slice %39 {offsets = [0, 0, 88], sizes = [2, 9, 8], strides = [1, 1, 1]} : vector<2x9x96xbf16> to vector<2x9x8xbf16>
    "tpu.trace_start"() <{level = 10 : i32, message = "bqd,bkd->bqk"}> : () -> ()
    %cst_34 = arith.constant dense<0.000000e+00> : vector<2x9x9xf32>
    %97 = tpu.matmul %94, %95, %cst_34 {dimension_numbers = #tpu.dot_dimension_numbers<[2], [2], [1], [1], [0, 0, 0, 1, 1, 1], [0], [0]>} : vector<2x9x8xbf16>, vector<2x9x8xbf16>, vector<2x9x9xf32> -> vector<2x9x9xf32>
    "tpu.trace_stop"() : () -> ()
    %cst_35 = arith.constant 0.353553385 : f32
    %98 = vector.broadcast %cst_35 : f32 to vector<2x9x9xf32>
    %99 = arith.mulf %97, %98 : vector<2x9x9xf32>
    %cst_36 = arith.constant dense<0xFF800000> : vector<2x9xf32>
    %100 = vector.multi_reduction <maximumf>, %99, %cst_36 [2] : vector<2x9x9xf32> to vector<2x9xf32>
    %101 = vector.shape_cast %100 : vector<2x9xf32> to vector<2x9x1xf32>
    %102 = vector.broadcast %101 : vector<2x9x1xf32> to vector<2x9x9xf32>
    %103 = arith.subf %99, %102 : vector<2x9x9xf32>
    %104 = math.exp %103 : vector<2x9x9xf32>
    %cst_37 = arith.constant dense<0.000000e+00> : vector<2x9xf32>
    %105 = vector.multi_reduction <add>, %104, %cst_37 [2] : vector<2x9x9xf32> to vector<2x9xf32>
    %106 = vector.shape_cast %105 : vector<2x9xf32> to vector<2x9x1xf32>
    %107 = tpu.reciprocal %106 {approx = true} : vector<2x9x1xf32> -> vector<2x9x1xf32>
    %108 = vector.broadcast %107 : vector<2x9x1xf32> to vector<2x9x9xf32>
    %109 = arith.mulf %104, %108 : vector<2x9x9xf32>
    %110 = arith.truncf %109 : vector<2x9x9xf32> to vector<2x9x9xbf16>
    "tpu.trace_start"() <{level = 10 : i32, message = "bqk,bkd->bqd"}> : () -> ()
    %cst_38 = arith.constant dense<0.000000e+00> : vector<2x9x8xf32>
    %111 = tpu.matmul %110, %96, %cst_38 {dimension_numbers = #tpu.dot_dimension_numbers<[2], [1], [1], [2], [0, 0, 0, 1, 1, 2], [0], [0]>} : vector<2x9x9xbf16>, vector<2x9x8xbf16>, vector<2x9x8xf32> -> vector<2x9x8xf32>
    "tpu.trace_stop"() : () -> ()
    %112 = tpu.concatenate %57, %75, %93, %111 in 2 : vector<2x9x8xf32>, vector<2x9x8xf32>, vector<2x9x8xf32>, vector<2x9x8xf32> -> vector<2x9x32xf32>
    %113 = vector.shape_cast %112 : vector<2x9x32xf32> to vector<18x32xf32>
    %114 = arith.truncf %113 : vector<18x32xf32> to vector<18x32xbf16>
    %c0_39 = arith.constant 0 : index
    %c0_40 = arith.constant 0 : index
    %c0_41 = arith.constant 0 : index
    %115 = vector.load %arg8[%c0_39, %c0_40, %c0_41] : memref<1x32x32xbf16, #tpu.memory_space<vmem>>, vector<1x32x32xbf16>
    %116 = vector.shape_cast %115 : vector<1x32x32xbf16> to vector<32x32xbf16>
    %cst_42 = arith.constant dense<0.000000e+00> : vector<18x32xf32>
    %117 = tpu.matmul %114, %116, %cst_42 {dimension_numbers = #tpu.dot_dimension_numbers<[1], [0], [0], [1], [0, 0, 1, 1], [], []>} : vector<18x32xbf16>, vector<32x32xbf16>, vector<18x32xf32> -> vector<18x32xf32>
    %c0_43 = arith.constant 0 : index
    %c0_44 = arith.constant 0 : index
    %c0_45 = arith.constant 0 : index
    %118 = vector.load %arg9[%c0_43, %c0_44, %c0_45] : memref<1x1x32xf32, #tpu.memory_space<vmem>>, vector<1x1x32xf32>
    %119 = vector.shape_cast %118 : vector<1x1x32xf32> to vector<1x32xf32>
    %120 = vector.broadcast %119 : vector<1x32xf32> to vector<18x32xf32>
    %121 = arith.addf %117, %120 : vector<18x32xf32>
    %122 = arith.addf %3, %121 : vector<18x32xf32>
    %c0_46 = arith.constant 0 : index
    %c0_47 = arith.constant 0 : index
    %c0_48 = arith.constant 0 : index
    %123 = vector.load %arg10[%c0_46, %c0_47, %c0_48] : memref<1x1x32xf32, #tpu.memory_space<vmem>>, vector<1x1x32xf32>
    %124 = vector.shape_cast %123 : vector<1x1x32xf32> to vector<1x32xf32>
    %c0_49 = arith.constant 0 : index
    %c0_50 = arith.constant 0 : index
    %c0_51 = arith.constant 0 : index
    %125 = vector.load %arg11[%c0_49, %c0_50, %c0_51] : memref<1x1x32xf32, #tpu.memory_space<vmem>>, vector<1x1x32xf32>
    %126 = vector.shape_cast %125 : vector<1x1x32xf32> to vector<1x32xf32>
    %cst_52 = arith.constant dense<0.000000e+00> : vector<18xf32>
    %127 = vector.multi_reduction <add>, %122, %cst_52 [1] : vector<18x32xf32> to vector<18xf32>
    %128 = vector.shape_cast %127 : vector<18xf32> to vector<18x1xf32>
    %cst_53 = arith.constant 3.200000e+01 : f32
    %129 = vector.broadcast %cst_53 : f32 to vector<18x1xf32>
    %130 = arith.divf %128, %129 : vector<18x1xf32>
    %131 = vector.broadcast %130 : vector<18x1xf32> to vector<18x32xf32>
    %132 = arith.subf %122, %131 : vector<18x32xf32>
    %133 = arith.mulf %132, %132 : vector<18x32xf32>
    %cst_54 = arith.constant dense<0.000000e+00> : vector<18xf32>
    %134 = vector.multi_reduction <add>, %133, %cst_54 [1] : vector<18x32xf32> to vector<18xf32>
    %135 = vector.shape_cast %134 : vector<18xf32> to vector<18x1xf32>
    %cst_55 = arith.constant 3.200000e+01 : f32
    %136 = vector.broadcast %cst_55 : f32 to vector<18x1xf32>
    %137 = arith.divf %135, %136 : vector<18x1xf32>
    %138 = vector.broadcast %130 : vector<18x1xf32> to vector<18x32xf32>
    %139 = arith.subf %122, %138 : vector<18x32xf32>
    %cst_56 = arith.constant 9.99999974E-6 : f32
    %140 = vector.broadcast %cst_56 : f32 to vector<18x1xf32>
    %141 = arith.addf %137, %140 : vector<18x1xf32>
    %142 = math.rsqrt %141 : vector<18x1xf32>
    %143 = vector.broadcast %142 : vector<18x1xf32> to vector<18x32xf32>
    %144 = arith.mulf %139, %143 : vector<18x32xf32>
    %145 = vector.broadcast %124 : vector<1x32xf32> to vector<18x32xf32>
    %146 = arith.mulf %144, %145 : vector<18x32xf32>
    %147 = vector.broadcast %126 : vector<1x32xf32> to vector<18x32xf32>
    %148 = arith.addf %146, %147 : vector<18x32xf32>
    %149 = arith.truncf %148 : vector<18x32xf32> to vector<18x32xbf16>
    %c0_57 = arith.constant 0 : index
    %c0_58 = arith.constant 0 : index
    %c0_59 = arith.constant 0 : index
    %150 = vector.load %arg12[%c0_57, %c0_58, %c0_59] : memref<1x32x128xbf16, #tpu.memory_space<vmem>>, vector<1x32x128xbf16>
    %151 = vector.shape_cast %150 : vector<1x32x128xbf16> to vector<32x128xbf16>
    %cst_60 = arith.constant dense<0.000000e+00> : vector<18x128xf32>
    %152 = tpu.matmul %149, %151, %cst_60 {dimension_numbers = #tpu.dot_dimension_numbers<[1], [0], [0], [1], [0, 0, 1, 1], [], []>} : vector<18x32xbf16>, vector<32x128xbf16>, vector<18x128xf32> -> vector<18x128xf32>
    %c0_61 = arith.constant 0 : index
    %c0_62 = arith.constant 0 : index
    %c0_63 = arith.constant 0 : index
    %153 = vector.load %arg13[%c0_61, %c0_62, %c0_63] : memref<1x1x128xf32, #tpu.memory_space<vmem>>, vector<1x1x128xf32>
    %154 = vector.shape_cast %153 : vector<1x1x128xf32> to vector<1x128xf32>
    %155 = vector.broadcast %154 : vector<1x128xf32> to vector<18x128xf32>
    %156 = arith.addf %152, %155 : vector<18x128xf32>
    %cst_64 = arith.constant 1.702000e+00 : f32
    %157 = vector.broadcast %cst_64 : f32 to vector<18x128xf32>
    %158 = arith.mulf %157, %156 : vector<18x128xf32>
    %159 = arith.negf %158 : vector<18x128xf32>
    %160 = math.exp %159 : vector<18x128xf32>
    %cst_65 = arith.constant 1.000000e+00 : f32
    %161 = vector.broadcast %cst_65 : f32 to vector<18x128xf32>
    %162 = arith.addf %161, %160 : vector<18x128xf32>
    %163 = arith.divf %161, %162 : vector<18x128xf32>
    %164 = arith.mulf %156, %163 : vector<18x128xf32>
    %165 = arith.truncf %164 : vector<18x128xf32> to vector<18x128xbf16>
    %c0_66 = arith.constant 0 : index
    %c0_67 = arith.constant 0 : index
    %c0_68 = arith.constant 0 : index
    %166 = vector.load %arg14[%c0_66, %c0_67, %c0_68] : memref<1x128x32xbf16, #tpu.memory_space<vmem>>, vector<1x128x32xbf16>
    %167 = vector.shape_cast %166 : vector<1x128x32xbf16> to vector<128x32xbf16>
    %cst_69 = arith.constant dense<0.000000e+00> : vector<18x32xf32>
    %168 = tpu.matmul %165, %167, %cst_69 {dimension_numbers = #tpu.dot_dimension_numbers<[1], [0], [0], [1], [0, 0, 1, 1], [], []>} : vector<18x128xbf16>, vector<128x32xbf16>, vector<18x32xf32> -> vector<18x32xf32>
    %c0_70 = arith.constant 0 : index
    %c0_71 = arith.constant 0 : index
    %c0_72 = arith.constant 0 : index
    %169 = vector.load %arg15[%c0_70, %c0_71, %c0_72] : memref<1x1x32xf32, #tpu.memory_space<vmem>>, vector<1x1x32xf32>
    %170 = vector.shape_cast %169 : vector<1x1x32xf32> to vector<1x32xf32>
    %171 = vector.broadcast %170 : vector<1x32xf32> to vector<18x32xf32>
    %172 = arith.addf %168, %171 : vector<18x32xf32>
    %173 = arith.addf %122, %172 : vector<18x32xf32>
    %c0_73 = arith.constant 0 : index
    %c0_74 = arith.constant 0 : index
    %174 = vector.load %arg17[%c0_73, %c0_74] : memref<18x32xf32, #tpu.memory_space<vmem>>, vector<18x32xf32>
    tpu.vector_store %arg17[%c0_73, %c0_74], %173 {strides = array<i32>} : memref<18x32xf32, #tpu.memory_space<vmem>>, vector<18x32xf32>,
    %c1_i32 = arith.constant 1 : i32
    %175 = arith.cmpi eq, %arg1, %c1_i32 : i32
    %176 = arith.extui %175 : i1 to i32
    %c0_i32_75 = arith.constant 0 : i32
    %177 = arith.cmpi ne, %176, %c0_i32_75 : i32
    scf.if %177 {
      %178 = vector.shape_cast %173 : vector<18x32xf32> to vector<2x9x32xf32>
      %c0_76 = arith.constant 0 : index
      %c0_77 = arith.constant 0 : index
      %c0_78 = arith.constant 0 : index
      %179 = vector.load %arg16[%c0_76, %c0_77, %c0_78] : memref<2x9x32xf32, #tpu.memory_space<vmem>>, vector<2x9x32xf32>
      tpu.vector_store %arg16[%c0_76, %c0_77, %c0_78], %178 {strides = array<i32>} : memref<2x9x32xf32, #tpu.memory_space<vmem>>, vector<2x9x32xf32>,
    } else {
    }
    return
  }
  func.func @transform_0(%arg0: i32, %arg1: i32) -> (i32, i32, i32) {
    %c0_i32 = arith.constant 0 : i32
    %c0_i32_0 = arith.constant 0 : i32
    %c0_i32_1 = arith.constant 0 : i32
    return %arg0, %c0_i32, %c0_i32_0 : i32, i32, i32
  }
  func.func @transform_1(%arg0: i32, %arg1: i32) -> (i32, i32, i32) {
    %c0_i32 = arith.constant 0 : i32
    %c0_i32_0 = arith.constant 0 : i32
    %c0_i32_1 = arith.constant 0 : i32
    %c0_i32_2 = arith.constant 0 : i32
    return %c0_i32, %c0_i32_0, %c0_i32_1 : i32, i32, i32
  }
  func.func @transform_2(%arg0: i32, %arg1: i32) -> (i32, i32, i32) {
    %c0_i32 = arith.constant 0 : i32
    %c0_i32_0 = arith.constant 0 : i32
    %c0_i32_1 = arith.constant 0 : i32
    return %arg1, %c0_i32, %c0_i32_0 : i32, i32, i32
  }
  func.func @transform_3(%arg0: i32, %arg1: i32) -> (i32, i32, i32) {
    %c0_i32 = arith.constant 0 : i32
    %c0_i32_0 = arith.constant 0 : i32
    %c0_i32_1 = arith.constant 0 : i32
    return %arg1, %c0_i32, %c0_i32_0 : i32, i32, i32
  }
  func.func @transform_4(%arg0: i32, %arg1: i32) -> (i32, i32, i32) {
    %c0_i32 = arith.constant 0 : i32
    %c0_i32_0 = arith.constant 0 : i32
    %c0_i32_1 = arith.constant 0 : i32
    return %arg1, %c0_i32, %c0_i32_0 : i32, i32, i32
  }
  func.func @transform_5(%arg0: i32, %arg1: i32) -> (i32, i32, i32) {
    %c0_i32 = arith.constant 0 : i32
    %c0_i32_0 = arith.constant 0 : i32
    %c0_i32_1 = arith.constant 0 : i32
    return %arg1, %c0_i32, %c0_i32_0 : i32, i32, i32
  }
  func.func @transform_6(%arg0: i32, %arg1: i32) -> (i32, i32, i32) {
    %c0_i32 = arith.constant 0 : i32
    %c0_i32_0 = arith.constant 0 : i32
    %c0_i32_1 = arith.constant 0 : i32
    return %arg1, %c0_i32, %c0_i32_0 : i32, i32, i32
  }
  func.func @transform_7(%arg0: i32, %arg1: i32) -> (i32, i32, i32) {
    %c0_i32 = arith.constant 0 : i32
    %c0_i32_0 = arith.constant 0 : i32
    %c0_i32_1 = arith.constant 0 : i32
    return %arg1, %c0_i32, %c0_i32_0 : i32, i32, i32
  }
  func.func @transform_8(%arg0: i32, %arg1: i32) -> (i32, i32, i32) {
    %c0_i32 = arith.constant 0 : i32
    %c0_i32_0 = arith.constant 0 : i32
    %c0_i32_1 = arith.constant 0 : i32
    return %arg1, %c0_i32, %c0_i32_0 : i32, i32, i32
  }
  func.func @transform_9(%arg0: i32, %arg1: i32) -> (i32, i32, i32) {
    %c0_i32 = arith.constant 0 : i32
    %c0_i32_0 = arith.constant 0 : i32
    %c0_i32_1 = arith.constant 0 : i32
    return %arg1, %c0_i32, %c0_i32_0 : i32, i32, i32
  }
  func.func @transform_10(%arg0: i32, %arg1: i32) -> (i32, i32, i32) {
    %c0_i32 = arith.constant 0 : i32
    %c0_i32_0 = arith.constant 0 : i32
    %c0_i32_1 = arith.constant 0 : i32
    return %arg1, %c0_i32, %c0_i32_0 : i32, i32, i32
  }
  func.func @transform_11(%arg0: i32, %arg1: i32) -> (i32, i32, i32) {
    %c0_i32 = arith.constant 0 : i32
    %c0_i32_0 = arith.constant 0 : i32
    %c0_i32_1 = arith.constant 0 : i32
    return %arg1, %c0_i32, %c0_i32_0 : i32, i32, i32
  }
  func.func @transform_12(%arg0: i32, %arg1: i32) -> (i32, i32, i32) {
    %c0_i32 = arith.constant 0 : i32
    %c0_i32_0 = arith.constant 0 : i32
    %c0_i32_1 = arith.constant 0 : i32
    return %arg1, %c0_i32, %c0_i32_0 : i32, i32, i32
  }
  func.func @transform_13(%arg0: i32, %arg1: i32) -> (i32, i32, i32) {
    %c0_i32 = arith.constant 0 : i32
    %c0_i32_0 = arith.constant 0 : i32
    %c0_i32_1 = arith.constant 0 : i32
    return %arg1, %c0_i32, %c0_i32_0 : i32, i32, i32
  }
  func.func @transform_14(%arg0: i32, %arg1: i32) -> (i32, i32, i32) {
    %c0_i32 = arith.constant 0 : i32
    %c0_i32_0 = arith.constant 0 : i32
    %c0_i32_1 = arith.constant 0 : i32
    return %arg0, %c0_i32, %c0_i32_0 : i32, i32, i32
  }
}

module attributes {stable_mosaic.version = 11 : i64} {
  func.func @_head_kernel(%arg0: i32, %arg1: memref<256x32xf32, #tpu.memory_space<vmem>>, %arg2: memref<1x32xf32, #tpu.memory_space<vmem>>, %arg3: memref<1x32xf32, #tpu.memory_space<vmem>>, %arg4: memref<32x384xbf16, #tpu.memory_space<vmem>>, %arg5: memref<1x384xf32, #tpu.memory_space<vmem>>, %arg6: memref<256x384xf32, #tpu.memory_space<vmem>>) attributes {dimension_semantics = [#tpu.dimension_semantics<parallel>], iteration_bounds = array<i64: 1>, scalar_prefetch = 0 : i64, scratch_operands = 0 : i64, tpu.core_type = #tpu.core_type<tc>, window_params = [{transform_indices = @transform_0, window_bounds = array<i64: 256, 32>}, {pipeline_mode = #tpu.pipeline_mode<synchronous>, transform_indices = @transform_1, window_bounds = array<i64: 1, 32>}, {pipeline_mode = #tpu.pipeline_mode<synchronous>, transform_indices = @transform_2, window_bounds = array<i64: 1, 32>}, {pipeline_mode = #tpu.pipeline_mode<synchronous>, transform_indices = @transform_3, window_bounds = array<i64: 32, 384>}, {pipeline_mode = #tpu.pipeline_mode<synchronous>, transform_indices = @transform_4, window_bounds = array<i64: 1, 384>}, {transform_indices = @transform_5, window_bounds = array<i64: 256, 384>}]} {
    %c0 = arith.constant 0 : index
    %c0_0 = arith.constant 0 : index
    %0 = vector.load %arg1[%c0, %c0_0] : memref<256x32xf32, #tpu.memory_space<vmem>>, vector<256x32xf32>
    %c0_1 = arith.constant 0 : index
    %c0_2 = arith.constant 0 : index
    %1 = vector.load %arg2[%c0_1, %c0_2] : memref<1x32xf32, #tpu.memory_space<vmem>>, vector<1x32xf32>
    %c0_3 = arith.constant 0 : index
    %c0_4 = arith.constant 0 : index
    %2 = vector.load %arg3[%c0_3, %c0_4] : memref<1x32xf32, #tpu.memory_space<vmem>>, vector<1x32xf32>
    %cst = arith.constant dense<0.000000e+00> : vector<256xf32>
    %3 = vector.multi_reduction <add>, %0, %cst [1] : vector<256x32xf32> to vector<256xf32>
    %4 = vector.shape_cast %3 : vector<256xf32> to vector<256x1xf32>
    %cst_5 = arith.constant 3.200000e+01 : f32
    %5 = vector.broadcast %cst_5 : f32 to vector<256x1xf32>
    %6 = arith.divf %4, %5 : vector<256x1xf32>
    %7 = vector.broadcast %6 : vector<256x1xf32> to vector<256x32xf32>
    %8 = arith.subf %0, %7 : vector<256x32xf32>
    %9 = arith.mulf %8, %8 : vector<256x32xf32>
    %cst_6 = arith.constant dense<0.000000e+00> : vector<256xf32>
    %10 = vector.multi_reduction <add>, %9, %cst_6 [1] : vector<256x32xf32> to vector<256xf32>
    %11 = vector.shape_cast %10 : vector<256xf32> to vector<256x1xf32>
    %cst_7 = arith.constant 3.200000e+01 : f32
    %12 = vector.broadcast %cst_7 : f32 to vector<256x1xf32>
    %13 = arith.divf %11, %12 : vector<256x1xf32>
    %14 = vector.broadcast %6 : vector<256x1xf32> to vector<256x32xf32>
    %15 = arith.subf %0, %14 : vector<256x32xf32>
    %cst_8 = arith.constant 9.99999974E-6 : f32
    %16 = vector.broadcast %cst_8 : f32 to vector<256x1xf32>
    %17 = arith.addf %13, %16 : vector<256x1xf32>
    %18 = math.rsqrt %17 : vector<256x1xf32>
    %19 = vector.broadcast %18 : vector<256x1xf32> to vector<256x32xf32>
    %20 = arith.mulf %15, %19 : vector<256x32xf32>
    %21 = vector.broadcast %1 : vector<1x32xf32> to vector<256x32xf32>
    %22 = arith.mulf %20, %21 : vector<256x32xf32>
    %23 = vector.broadcast %2 : vector<1x32xf32> to vector<256x32xf32>
    %24 = arith.addf %22, %23 : vector<256x32xf32>
    %25 = arith.truncf %24 : vector<256x32xf32> to vector<256x32xbf16>
    %c0_9 = arith.constant 0 : index
    %c0_10 = arith.constant 0 : index
    %26 = vector.load %arg4[%c0_9, %c0_10] : memref<32x384xbf16, #tpu.memory_space<vmem>>, vector<32x384xbf16>
    %cst_11 = arith.constant dense<0.000000e+00> : vector<256x384xf32>
    %27 = tpu.matmul %25, %26, %cst_11 {dimension_numbers = #tpu.dot_dimension_numbers<[1], [0], [0], [1], [0, 0, 1, 1], [], []>} : vector<256x32xbf16>, vector<32x384xbf16>, vector<256x384xf32> -> vector<256x384xf32>
    %c0_12 = arith.constant 0 : index
    %c0_13 = arith.constant 0 : index
    %28 = vector.load %arg5[%c0_12, %c0_13] : memref<1x384xf32, #tpu.memory_space<vmem>>, vector<1x384xf32>
    %29 = vector.broadcast %28 : vector<1x384xf32> to vector<256x384xf32>
    %30 = arith.addf %27, %29 : vector<256x384xf32>
    %c0_14 = arith.constant 0 : index
    %c0_15 = arith.constant 0 : index
    %31 = vector.load %arg6[%c0_14, %c0_15] : memref<256x384xf32, #tpu.memory_space<vmem>>, vector<256x384xf32>
    tpu.vector_store %arg6[%c0_14, %c0_15], %30 {strides = array<i32>} : memref<256x384xf32, #tpu.memory_space<vmem>>, vector<256x384xf32>,
    return
  }
  func.func @transform_0(%arg0: i32) -> (i32, i32) {
    %c0_i32 = arith.constant 0 : i32
    %c0_i32_0 = arith.constant 0 : i32
    return %arg0, %c0_i32 : i32, i32
  }
  func.func @transform_1(%arg0: i32) -> (i32, i32) {
    %c0_i32 = arith.constant 0 : i32
    %c0_i32_0 = arith.constant 0 : i32
    %c0_i32_1 = arith.constant 0 : i32
    return %c0_i32, %c0_i32_0 : i32, i32
  }
  func.func @transform_2(%arg0: i32) -> (i32, i32) {
    %c0_i32 = arith.constant 0 : i32
    %c0_i32_0 = arith.constant 0 : i32
    %c0_i32_1 = arith.constant 0 : i32
    return %c0_i32, %c0_i32_0 : i32, i32
  }
  func.func @transform_3(%arg0: i32) -> (i32, i32) {
    %c0_i32 = arith.constant 0 : i32
    %c0_i32_0 = arith.constant 0 : i32
    %c0_i32_1 = arith.constant 0 : i32
    return %c0_i32, %c0_i32_0 : i32, i32
  }
  func.func @transform_4(%arg0: i32) -> (i32, i32) {
    %c0_i32 = arith.constant 0 : i32
    %c0_i32_0 = arith.constant 0 : i32
    %c0_i32_1 = arith.constant 0 : i32
    return %c0_i32, %c0_i32_0 : i32, i32
  }
  func.func @transform_5(%arg0: i32) -> (i32, i32) {
    %c0_i32 = arith.constant 0 : i32
    %c0_i32_0 = arith.constant 0 : i32
    return %arg0, %c0_i32 : i32, i32
  }
}

</mosaic_0001>

<llo_original>
// kernel: mim_head_forward.3
$region0: #{mim_head_forward.3}
  #allocation0 [shape = 'u32[]', space=smem, size = 0x4, offset = 0x4, fixed_abs, tag = 'smem constant byte address 0x4 - core index']
  #allocation1 [shape = 'u32[144,128]{1,0:T(1,128)}', space=vmem, size = 0x12000, scoped, tag = 'internal scratch']
  %s0 = inlined_call_operand.vmem [shape: f32[10,32], index: 0, kind: input, shape index: {}]
  %s1 = inlined_call_operand.vmem [shape: bf16[32,32], index: 1, kind: input, shape index: {}]
  %s2 = inlined_call_operand.vmem [shape: f32[1,32], index: 2, kind: input, shape index: {}]
  %s3 = inlined_call_operand.vmem [shape: f32[10,32], index: 3, kind: output, shape index: {}]
  %s4 = sld [smem:[#allocation0]]
  $region56: #{mim_head_forward.3} parent=0
    _
  %s6 = ssub.s32 1, %s4
  %s7 = scalar_select 0, %s6, %s4
  $region1: #{mim_head_forward.3} parent=0
    #allocation2 [shape = 'u8[131072]{0}', space=vmem, size = 0x20000, scoped, tag = 'output window, operand 0, single buffered']
    // Predicated region
    $region2: #{mim_head_forward.3} parent=1 // pred_check
      _
    $region3: #{mim_head_forward.3} parent=1 // pred_check_branch
      %9 = sbr.rel (0) target = $region5
    $region4: #{mim_head_forward.3} parent=1 // pred_region
      _
    $region5: #{mim_head_forward.3} parent=1 // pred_fallthru
      _
    // Predicated region
    $region6: #{mim_head_forward.3} parent=1 // pred_check
      _
    $region7: #{mim_head_forward.3} parent=1 // pred_check_branch
      %11 = sbr.rel (0) target = $region9
    $region8: #{mim_head_forward.3} parent=1 // pred_region
      _
    $region9: #{mim_head_forward.3} parent=1 // pred_fallthru
      _
    // Predicated region
    $region10: #{mim_head_forward.3} parent=1 // pred_check
      _
    $region11: #{mim_head_forward.3} parent=1 // pred_check_branch
      %13 = sbr.rel (0) target = $region13
    $region12: #{mim_head_forward.3} parent=1 // pred_region
      _
    $region13: #{mim_head_forward.3} parent=1 // pred_fallthru
      _
    %v15 = vld [vmem:[%s0] sm:$0xff]
    %v16 = vld [vmem:[%s0 + $0x8] sm:$0xff]
    %v17 = vld [vmem:[%s0 + $0x10] sm:$0xff]
    %v18 = vld [vmem:[%s0 + $0x18] sm:$0xff]
    %v19 = vld [vmem:[%s0 + $0x20] sm:$0xff]
    %v20 = vld [vmem:[%s0 + $0x28] sm:$0xff]
    %v21 = vld [vmem:[%s0 + $0x30] sm:$0xff]
    %v22 = vld [vmem:[%s0 + $0x38] sm:$0xff]
    %v23 = vld [vmem:[%s0 + $0x40] sm:$0xff]
    %v24 = vld [vmem:[%s0 + $0x48] sm:$0xff]
    %v25 = vld [vmem:[%s0 + $0x50] sm:$0xff]
    %v26 = vld [vmem:[%s0 + $0x58] sm:$0xff]
    %v27 = vld [vmem:[%s0 + $0x60] sm:$0xff]
    %v28 = vld [vmem:[%s0 + $0x68] sm:$0xff]
    %v29 = vld [vmem:[%s0 + $0x70] sm:$0xff]
    %v30 = vld [vmem:[%s0 + $0x78] sm:$0xff]
    %v31 = vld [vmem:[%s0 + $0x80] sm:$0xff]
    %v32 = vld [vmem:[%s0 + $0x88] sm:$0xff]
    %v33 = vld [vmem:[%s0 + $0x90] sm:$0xff]
    %v34 = vld [vmem:[%s0 + $0x98] sm:$0xff]
    %v35 = vld [vmem:[%s0 + $0xa0] sm:$0xff]
    %v36 = vld [vmem:[%s0 + $0xa8] sm:$0xff]
    %v37 = vld [vmem:[%s0 + $0xb0] sm:$0xff]
    %v38 = vld [vmem:[%s0 + $0xb8] sm:$0xff]
    %v39 = vld [vmem:[%s0 + $0xc0] sm:$0xff]
    %v40 = vld [vmem:[%s0 + $0xc8] sm:$0xff]
    %v41 = vld [vmem:[%s0 + $0xd0] sm:$0xff]
    %v42 = vld [vmem:[%s0 + $0xd8] sm:$0xff]
    %v43 = vld [vmem:[%s0 + $0xe0] sm:$0xff]
    %v44 = vld [vmem:[%s0 + $0xe8] sm:$0xff]
    %v45 = vld [vmem:[%s0 + $0xf0] sm:$0xff]
    %v46 = vld [vmem:[%s0 + $0xf8] sm:$0xff]
    %v47 = vpack.c.bf16 %v16, %v15
    %v48 = vpack.c.bf16 %v18, %v17
    %v49 = vpack.c.bf16 %v20, %v19
    %v50 = vpack.c.bf16 %v22, %v21
    %v51 = vpack.c.bf16 %v24, %v23
    %v52 = vpack.c.bf16 %v26, %v25
    %v53 = vpack.c.bf16 %v28, %v27
    %v54 = vpack.c.bf16 %v30, %v29
    %v55 = vpack.c.bf16 %v32, %v31
    %v56 = vpack.c.bf16 %v34, %v33
    %v57 = vpack.c.bf16 %v36, %v35
    %v58 = vpack.c.bf16 %v38, %v37
    %v59 = vpack.c.bf16 %v40, %v39
    %v60 = vpack.c.bf16 %v42, %v41
    %v61 = vpack.c.bf16 %v44, %v43
    %v62 = vpack.c.bf16 %v46, %v45
    %v63 = vld [vmem:[%s1] sm:$0xf]
    %v64 = vld [vmem:[%s1 + $0x4] sm:$0xf]
    %v65 = vld [vmem:[%s1 + $0x8] sm:$0xf]
    %v66 = vld [vmem:[%s1 + $0xc] sm:$0xf]
    %v67 = vld [vmem:[%s2] sm:$0x1]
    %v69 = vlaneseq
    %v70 = vshrl.u32 %v69, 7
    %v71 = vsub.s32 0, %v70
    %v72 = vrot.slane %v67, %v71
    %v78 = vunpack.c.l.b16 %v63
    %v79 = vunpack.c.l.b16 %v64
    %v80 = vunpack.c.l.b16 %v65
    %v81 = vunpack.c.l.b16 %v66
    %v82 = vpack.c.b16 %v79, %v78
    %v83 = vpack.c.b16 %v81, %v80
    %vm86 = vcmask 261120
    %v88 = vsel %vm86, %v47, 0
    %v91 = vsel %vm86, %v48, 0
    %v94 = vsel %vm86, %v49, 0
    %v97 = vsel %vm86, %v50, 0
    %v100 = vsel %vm86, %v51, 0
    %v103 = vsel %vm86, %v52, 0
    %v106 = vsel %vm86, %v53, 0
    %v109 = vsel %vm86, %v54, 0
    %v112 = vsel %vm86, %v55, 0
    %v115 = vsel %vm86, %v56, 0
    %v118 = vsel %vm86, %v57, 0
    %v121 = vsel %vm86, %v58, 0
    %v124 = vsel %vm86, %v59, 0
    %v127 = vsel %vm86, %v60, 0
    %v130 = vsel %vm86, %v61, 0
    %v133 = vsel %vm86, %v62, 0
    %135 = vmatprep.subr.bf16.mxu0 0
    %136 = vmatpush1.bf16.msra.mxu0 %v82
    %137 = vmatprep.subr.bf16.mxu0 0
    %138 = vmatpush1.bf16.msra.mxu0 %v83
    %139 = vmatprep.subr.bf16.mxu0 0
    %140 = vmatpush1.bf16.msra.mxu0 0
    %141 = vmatprep.subr.bf16.mxu0 0
    %142 = vmatpush1.bf16.msra.mxu0 0
    %143 = vmatprep.subr.bf16.mxu0 0
    %144 = vmatpush1.bf16.msra.mxu0 0
    %145 = vmatprep.subr.bf16.mxu0 0
    %146 = vmatpush1.bf16.msra.mxu0 0
    %147 = vmatprep.subr.bf16.mxu0 0
    %148 = vmatpush1.bf16.msra.mxu0 0
    %149 = vmatprep.subr.bf16.mxu0 0
    %150 = vmatpush1.bf16.msra.mxu0 0
    %151 = vmatprep.subr.bf16.mxu0 0
    %152 = vmatpush1.bf16.msra.mxu0 0
    %153 = vmatprep.subr.bf16.mxu0 0
    %154 = vmatpush1.bf16.msra.mxu0 0
    %155 = vmatprep.subr.bf16.mxu0 0
    %156 = vmatpush1.bf16.msra.mxu0 0
    %157 = vmatprep.subr.bf16.mxu0 0
    %158 = vmatpush1.bf16.msra.mxu0 0
    %159 = vmatprep.subr.bf16.mxu0 0
    %160 = vmatpush1.bf16.msra.mxu0 0
    %161 = vmatprep.subr.bf16.mxu0 0
    %162 = vmatpush1.bf16.msra.mxu0 0
    %163 = vmatprep.subr.bf16.mxu0 0
    %164 = vmatpush1.bf16.msra.mxu0 0
    %165 = vmatprep.subr.bf16.mxu0 0
    %166 = vmatpush1.bf16.msra.mxu0 0
    %167 = vmatprep.mubr.bf16.mxu0 0
    %168 = vmatmul.mubr.bf16.gmra.mrb[0].mxu0 %v88
    %v169 = vpop.f32.mrb[0].mxu0
    %v170 = vadd.f32 %v72, %v169
    %v171 = vpop.f32.mrb[0].mxu0
    %v172 = vpop.f32.mrb[0].mxu0
    %v173 = vadd.f32 %v72, %v172
    %v174 = vpop.f32.mrb[0].mxu0
    %175 = vmatprep.mubr.bf16.mxu0 0
    %176 = vmatmul.mubr.bf16.gmra.mrb[0].mxu0 %v91
    %v177 = vpop.f32.mrb[0].mxu0
    %v178 = vadd.f32 %v72, %v177
    %v179 = vpop.f32.mrb[0].mxu0
    %v180 = vpop.f32.mrb[0].mxu0
    %v181 = vadd.f32 %v72, %v180
    %v182 = vpop.f32.mrb[0].mxu0
    %183 = vmatprep.mubr.bf16.mxu0 0
    %184 = vmatmul.mubr.bf16.gmra.mrb[0].mxu0 %v94
    %v185 = vpop.f32.mrb[0].mxu0
    %v186 = vadd.f32 %v72, %v185
    %v187 = vpop.f32.mrb[0].mxu0
    %v188 = vpop.f32.mrb[0].mxu0
    %v189 = vadd.f32 %v72, %v188
    %v190 = vpop.f32.mrb[0].mxu0
    %191 = vmatprep.mubr.bf16.mxu0 0
    %192 = vmatmul.mubr.bf16.gmra.mrb[0].mxu0 %v97
    %v193 = vpop.f32.mrb[0].mxu0
    %v194 = vadd.f32 %v72, %v193
    %v195 = vpop.f32.mrb[0].mxu0
    %v196 = vpop.f32.mrb[0].mxu0
    %v197 = vadd.f32 %v72, %v196
    %v198 = vpop.f32.mrb[0].mxu0
    %199 = vmatprep.mubr.bf16.mxu0 0
    %200 = vmatmul.mubr.bf16.gmra.mrb[0].mxu0 %v100
    %v201 = vpop.f32.mrb[0].mxu0
    %v202 = vadd.f32 %v72, %v201
    %v203 = vpop.f32.mrb[0].mxu0
    %v204 = vpop.f32.mrb[0].mxu0
    %v205 = vadd.f32 %v72, %v204
    %v206 = vpop.f32.mrb[0].mxu0
    %207 = vmatprep.mubr.bf16.mxu0 0
    %208 = vmatmul.mubr.bf16.gmra.mrb[0].mxu0 %v103
    %v209 = vpop.f32.mrb[0].mxu0
    %v210 = vadd.f32 %v72, %v209
    %v211 = vpop.f32.mrb[0].mxu0
    %v212 = vpop.f32.mrb[0].mxu0
    %v213 = vadd.f32 %v72, %v212
    %v214 = vpop.f32.mrb[0].mxu0
    %215 = vmatprep.mubr.bf16.mxu0 0
    %216 = vmatmul.mubr.bf16.gmra.mrb[0].mxu0 %v106
    %v217 = vpop.f32.mrb[0].mxu0
    %v218 = vadd.f32 %v72, %v217
    %v219 = vpop.f32.mrb[0].mxu0
    %v220 = vpop.f32.mrb[0].mxu0
    %v221 = vadd.f32 %v72, %v220
    %v222 = vpop.f32.mrb[0].mxu0
    %223 = vmatprep.mubr.bf16.mxu0 0
    %224 = vmatmul.mubr.bf16.gmra.mrb[0].mxu0 %v109
    %v225 = vpop.f32.mrb[0].mxu0
    %v226 = vadd.f32 %v72, %v225
    %v227 = vpop.f32.mrb[0].mxu0
    %v228 = vpop.f32.mrb[0].mxu0
    %v229 = vadd.f32 %v72, %v228
    %v230 = vpop.f32.mrb[0].mxu0
    %231 = vmatprep.mubr.bf16.mxu0 0
    %232 = vmatmul.mubr.bf16.gmra.mrb[0].mxu0 %v112
    %v233 = vpop.f32.mrb[0].mxu0
    %v234 = vadd.f32 %v72, %v233
    %v235 = vpop.f32.mrb[0].mxu0
    %v236 = vpop.f32.mrb[0].mxu0
    %v237 = vadd.f32 %v72, %v236
    %v238 = vpop.f32.mrb[0].mxu0
    %239 = vmatprep.mubr.bf16.mxu0 0
    %240 = vmatmul.mubr.bf16.gmra.mrb[0].mxu0 %v115
    %v241 = vpop.f32.mrb[0].mxu0
    %v242 = vadd.f32 %v72, %v241
    %v243 = vpop.f32.mrb[0].mxu0
    %v244 = vpop.f32.mrb[0].mxu0
    %v245 = vadd.f32 %v72, %v244
    %v246 = vpop.f32.mrb[0].mxu0
    %247 = vmatprep.mubr.bf16.mxu0 0
    %248 = vmatmul.mubr.bf16.gmra.mrb[0].mxu0 %v118
    %v249 = vpop.f32.mrb[0].mxu0
    %v250 = vadd.f32 %v72, %v249
    %v251 = vpop.f32.mrb[0].mxu0
    %v252 = vpop.f32.mrb[0].mxu0
    %v253 = vadd.f32 %v72, %v252
    %v254 = vpop.f32.mrb[0].mxu0
    %255 = vmatprep.mubr.bf16.mxu0 0
    %256 = vmatmul.mubr.bf16.gmra.mrb[0].mxu0 %v121
    %v257 = vpop.f32.mrb[0].mxu0
    %v258 = vadd.f32 %v72, %v257
    %v259 = vpop.f32.mrb[0].mxu0
    %v260 = vpop.f32.mrb[0].mxu0
    %v261 = vadd.f32 %v72, %v260
    %v262 = vpop.f32.mrb[0].mxu0
    %263 = vmatprep.mubr.bf16.mxu0 0
    %264 = vmatmul.mubr.bf16.gmra.mrb[0].mxu0 %v124
    %v265 = vpop.f32.mrb[0].mxu0
    %v266 = vadd.f32 %v72, %v265
    %v267 = vpop.f32.mrb[0].mxu0
    %v268 = vpop.f32.mrb[0].mxu0
    %v269 = vadd.f32 %v72, %v268
    %v270 = vpop.f32.mrb[0].mxu0
    %271 = vmatprep.mubr.bf16.mxu0 0
    %272 = vmatmul.mubr.bf16.gmra.mrb[0].mxu0 %v127
    %v273 = vpop.f32.mrb[0].mxu0
    %v274 = vadd.f32 %v72, %v273
    %v275 = vpop.f32.mrb[0].mxu0
    %v276 = vpop.f32.mrb[0].mxu0
    %v277 = vadd.f32 %v72, %v276
    %v278 = vpop.f32.mrb[0].mxu0
    %279 = vmatprep.mubr.bf16.mxu0 0
    %280 = vmatmul.mubr.bf16.gmra.mrb[0].mxu0 %v130
    %v281 = vpop.f32.mrb[0].mxu0
    %v282 = vadd.f32 %v72, %v281
    %v283 = vpop.f32.mrb[0].mxu0
    %v284 = vpop.f32.mrb[0].mxu0
    %v285 = vadd.f32 %v72, %v284
    %v286 = vpop.f32.mrb[0].mxu0
    %287 = vmatprep.mubr.bf16.mxu0 0
    %288 = vmatmul.mubr.bf16.gmra.mrb[0].mxu0 %v133
    %v289 = vpop.f32.mrb[0].mxu0
    %v290 = vadd.f32 %v72, %v289
    %v291 = vpop.f32.mrb[0].mxu0
    %v292 = vpop.f32.mrb[0].mxu0
    %v293 = vadd.f32 %v72, %v292
    %v294 = vpop.f32.mrb[0].mxu0
    %295 = vdwg.mxu0
    %296 = vst.msk [vmem:[#allocation2] sm:$0xff] %vm86, %v170
    %297 = vst.msk [vmem:[#allocation2 + $0x8] sm:$0xff] %vm86, %v173
    %298 = vst.msk [vmem:[#allocation2 + $0x10] sm:$0xff] %vm86, %v178
    %299 = vst.msk [vmem:[#allocation2 + $0x18] sm:$0xff] %vm86, %v181
    %300 = vst.msk [vmem:[#allocation2 + $0x20] sm:$0xff] %vm86, %v186
    %301 = vst.msk [vmem:[#allocation2 + $0x28] sm:$0xff] %vm86, %v189
    %302 = vst.msk [vmem:[#allocation2 + $0x30] sm:$0xff] %vm86, %v194
    %303 = vst.msk [vmem:[#allocation2 + $0x38] sm:$0xff] %vm86, %v197
    %304 = vst.msk [vmem:[#allocation2 + $0x40] sm:$0xff] %vm86, %v202
    %305 = vst.msk [vmem:[#allocation2 + $0x48] sm:$0xff] %vm86, %v205
    %306 = vst.msk [vmem:[#allocation2 + $0x50] sm:$0xff] %vm86, %v210
    %307 = vst.msk [vmem:[#allocation2 + $0x58] sm:$0xff] %vm86, %v213
    %308 = vst.msk [vmem:[#allocation2 + $0x60] sm:$0xff] %vm86, %v218
    %309 = vst.msk [vmem:[#allocation2 + $0x68] sm:$0xff] %vm86, %v221
    %310 = vst.msk [vmem:[#allocation2 + $0x70] sm:$0xff] %vm86, %v226
    %311 = vst.msk [vmem:[#allocation2 + $0x78] sm:$0xff] %vm86, %v229
    %312 = vst.msk [vmem:[#allocation2 + $0x80] sm:$0xff] %vm86, %v234
    %313 = vst.msk [vmem:[#allocation2 + $0x88] sm:$0xff] %vm86, %v237
    %314 = vst.msk [vmem:[#allocation2 + $0x90] sm:$0xff] %vm86, %v242
    %315 = vst.msk [vmem:[#allocation2 + $0x98] sm:$0xff] %vm86, %v245
    %316 = vst.msk [vmem:[#allocation2 + $0xa0] sm:$0xff] %vm86, %v250
    %317 = vst.msk [vmem:[#allocation2 + $0xa8] sm:$0xff] %vm86, %v253
    %318 = vst.msk [vmem:[#allocation2 + $0xb0] sm:$0xff] %vm86, %v258
    %319 = vst.msk [vmem:[#allocation2 + $0xb8] sm:$0xff] %vm86, %v261
    %320 = vst.msk [vmem:[#allocation2 + $0xc0] sm:$0xff] %vm86, %v266
    %321 = vst.msk [vmem:[#allocation2 + $0xc8] sm:$0xff] %vm86, %v269
    %322 = vst.msk [vmem:[#allocation2 + $0xd0] sm:$0xff] %vm86, %v274
    %323 = vst.msk [vmem:[#allocation2 + $0xd8] sm:$0xff] %vm86, %v277
    %324 = vst.msk [vmem:[#allocation2 + $0xe0] sm:$0xff] %vm86, %v282
    %325 = vst.msk [vmem:[#allocation2 + $0xe8] sm:$0xff] %vm86, %v285
    %326 = vst.msk [vmem:[#allocation2 + $0xf0] sm:$0xff] %vm86, %v290
    %327 = vst.msk [vmem:[#allocation2 + $0xf8] sm:$0xff] %vm86, %v293
    // Predicated region
    $region14: #{mim_head_forward.3} parent=1 // pred_check
      _
    $region15: #{mim_head_forward.3} parent=1 // pred_check_branch
      %329 = sbr.rel (0) target = $region17
    $region16: #{mim_head_forward.3} parent=1 // pred_region
      // Predicated region
      $region18: #{mim_head_forward.3} parent=16 // pred_check
        _
      $region19: #{mim_head_forward.3} parent=16 // pred_check_branch
        %331 = sbr.rel (0) target = $region21
      $region20: #{mim_head_forward.3} parent=16 // pred_region
        // Predicated region
        $region22: #{mim_head_forward.3} parent=20 // pred_check
          _
        $region23: #{mim_head_forward.3} parent=20 // pred_check_branch
          %333 = sbr.rel (0) target = $region25
        $region24: #{mim_head_forward.3} parent=20 // pred_region
          // Predicated region
          $region37: #{mim_head_forward.3} parent=24 // pred_check
            _
          $region38: #{mim_head_forward.3} parent=24 // pred_check_branch
            %350 = sbr.rel (0) target = $region40
          $region39: #{mim_head_forward.3} parent=24 // pred_region
            loop: start=0, step=1, limit=1
            $region41: #{mim_head_forward.3} parent=39 // loop_pre_header
              _
            $region42: #{mim_head_forward.3} parent=39 // loop_header
              %s352 = sphi 0, %s356
              %p353 = scmp.ge.s32.totalorder %s352, 1
              %s357 = sphi [#allocation2], [#allocation2]
              %s358 = sphi %s3, %s3
            $region43: #{mim_head_forward.3} parent=39 // loop_header_branch
              %355 = sbr.rel (%p353) target = $region47
            $region44: #{mim_head_forward.3} parent=39 // loop_body
              %v359 = vld [vmem:[%s357] sm:$0xff]
              %360 = vst [vmem:[%s358] sm:$0xff] %v359
              %v361 = vld [vmem:[%s357 + $0x8] sm:$0xff]
              %362 = vst [vmem:[%s358 + $0x8] sm:$0xff] %v361
            $region45: #{mim_head_forward.3} parent=39 // loop_footer
              %s356 = sadd.s32 1, %s352
            $region46: #{mim_head_forward.3} parent=39 // loop_footer_branch
              %351 = sbr.rel target = $region42
            $region47: #{mim_head_forward.3} parent=39 // loop_exit
              _
          $region40: #{mim_head_forward.3} parent=24 // pred_fallthru
            _
          // Predicated region
          $region48: #{mim_head_forward.3} parent=24 // pred_check
            _
          $region49: #{mim_head_forward.3} parent=24 // pred_check_branch
            %364 = sbr.rel target = $region51
          $region50: #{mim_head_forward.3} parent=24 // pred_region
            _
          $region51: #{mim_head_forward.3} parent=24 // pred_fallthru
            _
        $region25: #{mim_head_forward.3} parent=20 // pred_fallthru
          _
        // Predicated region
        $region26: #{mim_head_forward.3} parent=20 // pred_check
          _
        $region27: #{mim_head_forward.3} parent=20 // pred_check_branch
          %335 = sbr.rel target = $region29
        $region28: #{mim_head_forward.3} parent=20 // pred_region
          loop: start=0, step=1, limit=1
          $region30: #{mim_head_forward.3} parent=28 // loop_pre_header
            _
          $region31: #{mim_head_forward.3} parent=28 // loop_header
            %s338 = sphi 0, %s342
            %p339 = scmp.ge.s32.totalorder %s338, 1
            %s343 = sphi [#allocation2], [#allocation2]
            %s344 = sphi %s3, %s3
          $region32: #{mim_head_forward.3} parent=28 // loop_header_branch
            %341 = sbr.rel (%p339) target = $region36
          $region33: #{mim_head_forward.3} parent=28 // loop_body
            %v345 = vld [vmem:[%s343] sm:$0xff]
            %346 = vst [vmem:[%s344] sm:$0xff] %v345
            %v347 = vld [vmem:[%s343 + $0x8] sm:$0xff]
            %348 = vst [vmem:[%s344 + $0x8] sm:$0xff] %v347
          $region34: #{mim_head_forward.3} parent=28 // loop_footer
            %s342 = sadd.s32 1, %s338
          $region35: #{mim_head_forward.3} parent=28 // loop_footer_branch
            %337 = sbr.rel target = $region31
          $region36: #{mim_head_forward.3} parent=28 // loop_exit
            _
        $region29: #{mim_head_forward.3} parent=20 // pred_fallthru
          _
      $region21: #{mim_head_forward.3} parent=16 // pred_fallthru
        _
      %365 = vnop
    $region17: #{mim_head_forward.3} parent=1 // pred_fallthru
      _
    // Predicated region
    $region52: #{mim_head_forward.3} parent=1 // pred_check
      _
    $region53: #{mim_head_forward.3} parent=1 // pred_check_branch
      %367 = sbr.rel (0) target = $region55
    $region54: #{mim_head_forward.3} parent=1 // pred_region
      _
    $region55: #{mim_head_forward.3} parent=1 // pred_fallthru
      _

// kernel: mim_head_forward.5
$region0: #{mim_head_forward.5}
  #allocation0 [shape = 'u32[]', space=smem, size = 0x4, offset = 0x4, fixed_abs, tag = 'smem constant byte address 0x4 - core index']
  #allocation1 [shape = 'u32[144,128]{1,0:T(1,128)}', space=vmem, size = 0x12000, scoped, tag = 'internal scratch']
  %s0 = inlined_call_operand.vmem [shape: f32[18,32], index: 0, kind: input, shape index: {}]
  %s1 = inlined_call_operand.vmem [shape: f32[1,32], index: 1, kind: input, shape index: {}]
  %s2 = inlined_call_operand.vmem [shape: f32[1,32], index: 2, kind: input, shape index: {}]
  %s3 = inlined_call_operand.vmem [shape: bf16[32,384], index: 3, kind: input, shape index: {}]
  %s4 = inlined_call_operand.vmem [shape: f32[1,384], index: 4, kind: input, shape index: {}]
  %s5 = inlined_call_operand.vmem [shape: f32[18,384], index: 5, kind: output, shape index: {}]
  %s6 = sld [smem:[#allocation0]]
  $region49: #{mim_head_forward.5} parent=0
    _
  %s8 = ssub.s32 1, %s6
  %s9 = scalar_select 0, %s8, %s6
  $region1: #{mim_head_forward.5} parent=0
    #allocation2 [shape = 'u8[393216]{0}', space=vmem, size = 0x60000, scoped, tag = 'output window, operand 0, single buffered']
    // Predicated region
    $region2: #{mim_head_forward.5} parent=1 // pred_check
      _
    $region3: #{mim_head_forward.5} parent=1 // pred_check_branch
      %11 = sbr.rel (0) target = $region5
    $region4: #{mim_head_forward.5} parent=1 // pred_region
      _
    $region5: #{mim_head_forward.5} parent=1 // pred_fallthru
      _
    // Predicated region
    $region6: #{mim_head_forward.5} parent=1 // pred_check
      _
    $region7: #{mim_head_forward.5} parent=1 // pred_check_branch
      %13 = sbr.rel (0) target = $region9
    $region8: #{mim_head_forward.5} parent=1 // pred_region
      _
    $region9: #{mim_head_forward.5} parent=1 // pred_fallthru
      _
    // Predicated region
    $region10: #{mim_head_forward.5} parent=1 // pred_check
      _
    $region11: #{mim_head_forward.5} parent=1 // pred_check_branch
      %15 = sbr.rel (0) target = $region13
    $region12: #{mim_head_forward.5} parent=1 // pred_region
      _
    $region13: #{mim_head_forward.5} parent=1 // pred_fallthru
      _
    // Predicated region
    $region14: #{mim_head_forward.5} parent=1 // pred_check
      _
    $region15: #{mim_head_forward.5} parent=1 // pred_check_branch
      %17 = sbr.rel (0) target = $region17
    $region16: #{mim_head_forward.5} parent=1 // pred_region
      _
    $region17: #{mim_head_forward.5} parent=1 // pred_fallthru
      _
    // Predicated region
    $region18: #{mim_head_forward.5} parent=1 // pred_check
      _
    $region19: #{mim_head_forward.5} parent=1 // pred_check_branch
      %19 = sbr.rel (0) target = $region21
    $region20: #{mim_head_forward.5} parent=1 // pred_region
      _
    $region21: #{mim_head_forward.5} parent=1 // pred_fallthru
      _
    %v21 = vld [vmem:[%s0] sm:$0xff]
    %v22 = vld [vmem:[%s0 + $0x8] sm:$0xff]
    %v23 = vld [vmem:[%s0 + $0x10] sm:$0xff]
    %v24 = vld [vmem:[%s0 + $0x18] sm:$0xff]
    %v25 = vld [vmem:[%s0 + $0x20] sm:$0xff]
    %v26 = vld [vmem:[%s0 + $0x28] sm:$0xff]
    %v27 = vld [vmem:[%s0 + $0x30] sm:$0xff]
    %v28 = vld [vmem:[%s0 + $0x38] sm:$0xff]
    %v29 = vld [vmem:[%s0 + $0x40] sm:$0xff]
    %v30 = vld [vmem:[%s0 + $0x48] sm:$0xff]
    %v31 = vld [vmem:[%s0 + $0x50] sm:$0xff]
    %v32 = vld [vmem:[%s0 + $0x58] sm:$0xff]
    %v33 = vld [vmem:[%s0 + $0x60] sm:$0xff]
    %v34 = vld [vmem:[%s0 + $0x68] sm:$0xff]
    %v35 = vld [vmem:[%s0 + $0x70] sm:$0xff]
    %v36 = vld [vmem:[%s0 + $0x78] sm:$0xff]
    %v37 = vld [vmem:[%s0 + $0x80] sm:$0xff]
    %v38 = vld [vmem:[%s0 + $0x88] sm:$0xff]
    %v39 = vld [vmem:[%s0 + $0x90] sm:$0xff]
    %v40 = vld [vmem:[%s0 + $0x98] sm:$0xff]
    %v41 = vld [vmem:[%s0 + $0xa0] sm:$0xff]
    %v42 = vld [vmem:[%s0 + $0xa8] sm:$0xff]
    %v43 = vld [vmem:[%s0 + $0xb0] sm:$0xff]
    %v44 = vld [vmem:[%s0 + $0xb8] sm:$0xff]
    %v45 = vld [vmem:[%s0 + $0xc0] sm:$0xff]
    %v46 = vld [vmem:[%s0 + $0xc8] sm:$0xff]
    %v47 = vld [vmem:[%s0 + $0xd0] sm:$0xff]
    %v48 = vld [vmem:[%s0 + $0xd8] sm:$0xff]
    %v49 = vld [vmem:[%s0 + $0xe0] sm:$0xff]
    %v50 = vld [vmem:[%s0 + $0xe8] sm:$0xff]
    %v51 = vld [vmem:[%s0 + $0xf0] sm:$0xff]
    %v52 = vld [vmem:[%s0 + $0xf8] sm:$0xff]
    %v53 = vld [vmem:[%s1] sm:$0x1]
    %v54 = vld [vmem:[%s2] sm:$0x1]
    %vm55 = vcmask 261120
    %v56 = vsel %vm55, %v21, 0.0
    %57 = vadd.xlane.f32.xlu0 %v56
    %v58 = vpop.xlane.xlu0 %57
    %v59 = vsel %vm55, %v22, 0.0
    %60 = vadd.xlane.f32.xlu0 %v59
    %v61 = vpop.xlane.xlu0 %60
    %v62 = vsel %vm55, %v23, 0.0
    %63 = vadd.xlane.f32.xlu0 %v62
    %v64 = vpop.xlane.xlu0 %63
    %v65 = vsel %vm55, %v24, 0.0
    %66 = vadd.xlane.f32.xlu0 %v65
    %v67 = vpop.xlane.xlu0 %66
    %v68 = vsel %vm55, %v25, 0.0
    %69 = vadd.xlane.f32.xlu0 %v68
    %v70 = vpop.xlane.xlu0 %69
    %v71 = vsel %vm55, %v26, 0.0
    %72 = vadd.xlane.f32.xlu0 %v71
    %v73 = vpop.xlane.xlu0 %72
    %v74 = vsel %vm55, %v27, 0.0
    %75 = vadd.xlane.f32.xlu0 %v74
    %v76 = vpop.xlane.xlu0 %75
    %v77 = vsel %vm55, %v28, 0.0
    %78 = vadd.xlane.f32.xlu0 %v77
    %v79 = vpop.xlane.xlu0 %78
    %v80 = vsel %vm55, %v29, 0.0
    %81 = vadd.xlane.f32.xlu0 %v80
    %v82 = vpop.xlane.xlu0 %81
    %v83 = vsel %vm55, %v30, 0.0
    %84 = vadd.xlane.f32.xlu0 %v83
    %v85 = vpop.xlane.xlu0 %84
    %v86 = vsel %vm55, %v31, 0.0
    %87 = vadd.xlane.f32.xlu0 %v86
    %v88 = vpop.xlane.xlu0 %87
    %v89 = vsel %vm55, %v32, 0.0
    %90 = vadd.xlane.f32.xlu0 %v89
    %v91 = vpop.xlane.xlu0 %90
    %v92 = vsel %vm55, %v33, 0.0
    %93 = vadd.xlane.f32.xlu0 %v92
    %v94 = vpop.xlane.xlu0 %93
    %v95 = vsel %vm55, %v34, 0.0
    %96 = vadd.xlane.f32.xlu0 %v95
    %v97 = vpop.xlane.xlu0 %96
    %v98 = vsel %vm55, %v35, 0.0
    %99 = vadd.xlane.f32.xlu0 %v98
    %v100 = vpop.xlane.xlu0 %99
    %v101 = vsel %vm55, %v36, 0.0
    %102 = vadd.xlane.f32.xlu0 %v101
    %v103 = vpop.xlane.xlu0 %102
    %v104 = vsel %vm55, %v37, 0.0
    %105 = vadd.xlane.f32.xlu0 %v104
    %v106 = vpop.xlane.xlu0 %105
    %v107 = vsel %vm55, %v38, 0.0
    %108 = vadd.xlane.f32.xlu0 %v107
    %v109 = vpop.xlane.xlu0 %108
    %v110 = vsel %vm55, %v39, 0.0
    %111 = vadd.xlane.f32.xlu0 %v110
    %v112 = vpop.xlane.xlu0 %111
    %v113 = vsel %vm55, %v40, 0.0
    %114 = vadd.xlane.f32.xlu0 %v113
    %v115 = vpop.xlane.xlu0 %114
    %v116 = vsel %vm55, %v41, 0.0
    %117 = vadd.xlane.f32.xlu0 %v116
    %v118 = vpop.xlane.xlu0 %117
    %v119 = vsel %vm55, %v42, 0.0
    %120 = vadd.xlane.f32.xlu0 %v119
    %v121 = vpop.xlane.xlu0 %120
    %v122 = vsel %vm55, %v43, 0.0
    %123 = vadd.xlane.f32.xlu0 %v122
    %v124 = vpop.xlane.xlu0 %123
    %v125 = vsel %vm55, %v44, 0.0
    %126 = vadd.xlane.f32.xlu0 %v125
    %v127 = vpop.xlane.xlu0 %126
    %v128 = vsel %vm55, %v45, 0.0
    %129 = vadd.xlane.f32.xlu0 %v128
    %v130 = vpop.xlane.xlu0 %129
    %v131 = vsel %vm55, %v46, 0.0
    %132 = vadd.xlane.f32.xlu0 %v131
    %v133 = vpop.xlane.xlu0 %132
    %v134 = vsel %vm55, %v47, 0.0
    %135 = vadd.xlane.f32.xlu0 %v134
    %v136 = vpop.xlane.xlu0 %135
    %v137 = vsel %vm55, %v48, 0.0
    %138 = vadd.xlane.f32.xlu0 %v137
    %v139 = vpop.xlane.xlu0 %138
    %v140 = vsel %vm55, %v49, 0.0
    %141 = vadd.xlane.f32.xlu0 %v140
    %v142 = vpop.xlane.xlu0 %141
    %v143 = vsel %vm55, %v50, 0.0
    %144 = vadd.xlane.f32.xlu0 %v143
    %v145 = vpop.xlane.xlu0 %144
    %v146 = vsel %vm55, %v51, 0.0
    %147 = vadd.xlane.f32.xlu0 %v146
    %v148 = vpop.xlane.xlu0 %147
    %v149 = vsel %vm55, %v52, 0.0
    %150 = vadd.xlane.f32.xlu0 %v149
    %v151 = vpop.xlane.xlu0 %150
    %v152 = vrcp.pop 32.0
    %v153 = vmul.f32 %v58, %v152
    %v154 = vmul.f32 %v61, %v152
    %v155 = vmul.f32 %v64, %v152
    %v156 = vmul.f32 %v67, %v152
    %v157 = vmul.f32 %v70, %v152
    %v158 = vmul.f32 %v73, %v152
    %v159 = vmul.f32 %v76, %v152
    %v160 = vmul.f32 %v79, %v152
    %v161 = vmul.f32 %v82, %v152
    %v162 = vmul.f32 %v85, %v152
    %v163 = vmul.f32 %v88, %v152
    %v164 = vmul.f32 %v91, %v152
    %v165 = vmul.f32 %v94, %v152
    %v166 = vmul.f32 %v97, %v152
    %v167 = vmul.f32 %v100, %v152
    %v168 = vmul.f32 %v103, %v152
    %v169 = vmul.f32 %v106, %v152
    %v170 = vmul.f32 %v109, %v152
    %v171 = vmul.f32 %v112, %v152
    %v172 = vmul.f32 %v115, %v152
    %v173 = vmul.f32 %v118, %v152
    %v174 = vmul.f32 %v121, %v152
    %v175 = vmul.f32 %v124, %v152
    %v176 = vmul.f32 %v127, %v152
    %v177 = vmul.f32 %v130, %v152
    %v178 = vmul.f32 %v133, %v152
    %v179 = vmul.f32 %v136, %v152
    %v180 = vmul.f32 %v139, %v152
    %v181 = vmul.f32 %v142, %v152
    %v182 = vmul.f32 %v145, %v152
    %v183 = vmul.f32 %v148, %v152
    %v184 = vmul.f32 %v151, %v152
    %v185 = vsub.f32 %v21, %v153
    %v186 = vsub.f32 %v22, %v154
    %v187 = vsub.f32 %v23, %v155
    %v188 = vsub.f32 %v24, %v156
    %v189 = vsub.f32 %v25, %v157
    %v190 = vsub.f32 %v26, %v158
    %v191 = vsub.f32 %v27, %v159
    %v192 = vsub.f32 %v28, %v160
    %v193 = vsub.f32 %v29, %v161
    %v194 = vsub.f32 %v30, %v162
    %v195 = vsub.f32 %v31, %v163
    %v196 = vsub.f32 %v32, %v164
    %v197 = vsub.f32 %v33, %v165
    %v198 = vsub.f32 %v34, %v166
    %v199 = vsub.f32 %v35, %v167
    %v200 = vsub.f32 %v36, %v168
    %v201 = vsub.f32 %v37, %v169
    %v202 = vsub.f32 %v38, %v170
    %v203 = vsub.f32 %v39, %v171
    %v204 = vsub.f32 %v40, %v172
    %v205 = vsub.f32 %v41, %v173
    %v206 = vsub.f32 %v42, %v174
    %v207 = vsub.f32 %v43, %v175
    %v208 = vsub.f32 %v44, %v176
    %v209 = vsub.f32 %v45, %v177
    %v210 = vsub.f32 %v46, %v178
    %v211 = vsub.f32 %v47, %v179
    %v212 = vsub.f32 %v48, %v180
    %v213 = vsub.f32 %v49, %v181
    %v214 = vsub.f32 %v50, %v182
    %v215 = vsub.f32 %v51, %v183
    %v216 = vsub.f32 %v52, %v184
    %v217 = vmul.f32 %v185, %v185
    %v218 = vmul.f32 %v186, %v186
    %v219 = vmul.f32 %v187, %v187
    %v220 = vmul.f32 %v188, %v188
    %v221 = vmul.f32 %v189, %v189
    %v222 = vmul.f32 %v190, %v190
    %v223 = vmul.f32 %v191, %v191
    %v224 = vmul.f32 %v192, %v192
    %v225 = vmul.f32 %v193, %v193
    %v226 = vmul.f32 %v194, %v194
    %v227 = vmul.f32 %v195, %v195
    %v228 = vmul.f32 %v196, %v196
    %v229 = vmul.f32 %v197, %v197
    %v230 = vmul.f32 %v198, %v198
    %v231 = vmul.f32 %v199, %v199
    %v232 = vmul.f32 %v200, %v200
    %v233 = vmul.f32 %v201, %v201
    %v234 = vmul.f32 %v202, %v202
    %v235 = vmul.f32 %v203, %v203
    %v236 = vmul.f32 %v204, %v204
    %v237 = vmul.f32 %v205, %v205
    %v238 = vmul.f32 %v206, %v206
    %v239 = vmul.f32 %v207, %v207
    %v240 = vmul.f32 %v208, %v208
    %v241 = vmul.f32 %v209, %v209
    %v242 = vmul.f32 %v210, %v210
    %v243 = vmul.f32 %v211, %v211
    %v244 = vmul.f32 %v212, %v212
    %v245 = vmul.f32 %v213, %v213
    %v246 = vmul.f32 %v214, %v214
    %v247 = vmul.f32 %v215, %v215
    %v248 = vmul.f32 %v216, %v216
    %v249 = vsel %vm55, %v217, 0.0
    %250 = vadd.xlane.f32.xlu0 %v249
    %v251 = vpop.xlane.xlu0 %250
    %v252 = vsel %vm55, %v218, 0.0
    %253 = vadd.xlane.f32.xlu0 %v252
    %v254 = vpop.xlane.xlu0 %253
    %v255 = vsel %vm55, %v219, 0.0
    %256 = vadd.xlane.f32.xlu0 %v255
    %v257 = vpop.xlane.xlu0 %256
    %v258 = vsel %vm55, %v220, 0.0
    %259 = vadd.xlane.f32.xlu0 %v258
    %v260 = vpop.xlane.xlu0 %259
    %v261 = vsel %vm55, %v221, 0.0
    %262 = vadd.xlane.f32.xlu0 %v261
    %v263 = vpop.xlane.xlu0 %262
    %v264 = vsel %vm55, %v222, 0.0
    %265 = vadd.xlane.f32.xlu0 %v264
    %v266 = vpop.xlane.xlu0 %265
    %v267 = vsel %vm55, %v223, 0.0
    %268 = vadd.xlane.f32.xlu0 %v267
    %v269 = vpop.xlane.xlu0 %268
    %v270 = vsel %vm55, %v224, 0.0
    %271 = vadd.xlane.f32.xlu0 %v270
    %v272 = vpop.xlane.xlu0 %271
    %v273 = vsel %vm55, %v225, 0.0
    %274 = vadd.xlane.f32.xlu0 %v273
    %v275 = vpop.xlane.xlu0 %274
    %v276 = vsel %vm55, %v226, 0.0
    %277 = vadd.xlane.f32.xlu0 %v276
    %v278 = vpop.xlane.xlu0 %277
    %v279 = vsel %vm55, %v227, 0.0
    %280 = vadd.xlane.f32.xlu0 %v279
    %v281 = vpop.xlane.xlu0 %280
    %v282 = vsel %vm55, %v228, 0.0
    %283 = vadd.xlane.f32.xlu0 %v282
    %v284 = vpop.xlane.xlu0 %283
    %v285 = vsel %vm55, %v229, 0.0
    %286 = vadd.xlane.f32.xlu0 %v285
    %v287 = vpop.xlane.xlu0 %286
    %v288 = vsel %vm55, %v230, 0.0
    %289 = vadd.xlane.f32.xlu0 %v288
    %v290 = vpop.xlane.xlu0 %289
    %v291 = vsel %vm55, %v231, 0.0
    %292 = vadd.xlane.f32.xlu0 %v291
    %v293 = vpop.xlane.xlu0 %292
    %v294 = vsel %vm55, %v232, 0.0
    %295 = vadd.xlane.f32.xlu0 %v294
    %v296 = vpop.xlane.xlu0 %295
    %v297 = vsel %vm55, %v233, 0.0
    %298 = vadd.xlane.f32.xlu0 %v297
    %v299 = vpop.xlane.xlu0 %298
    %v300 = vsel %vm55, %v234, 0.0
    %301 = vadd.xlane.f32.xlu0 %v300
    %v302 = vpop.xlane.xlu0 %301
    %v303 = vsel %vm55, %v235, 0.0
    %304 = vadd.xlane.f32.xlu0 %v303
    %v305 = vpop.xlane.xlu0 %304
    %v306 = vsel %vm55, %v236, 0.0
    %307 = vadd.xlane.f32.xlu0 %v306
    %v308 = vpop.xlane.xlu0 %307
    %v309 = vsel %vm55, %v237, 0.0
    %310 = vadd.xlane.f32.xlu0 %v309
    %v311 = vpop.xlane.xlu0 %310
    %v312 = vsel %vm55, %v238, 0.0
    %313 = vadd.xlane.f32.xlu0 %v312
    %v314 = vpop.xlane.xlu0 %313
    %v315 = vsel %vm55, %v239, 0.0
    %316 = vadd.xlane.f32.xlu0 %v315
    %v317 = vpop.xlane.xlu0 %316
    %v318 = vsel %vm55, %v240, 0.0
    %319 = vadd.xlane.f32.xlu0 %v318
    %v320 = vpop.xlane.xlu0 %319
    %v321 = vsel %vm55, %v241, 0.0
    %322 = vadd.xlane.f32.xlu0 %v321
    %v323 = vpop.xlane.xlu0 %322
    %v324 = vsel %vm55, %v242, 0.0
    %325 = vadd.xlane.f32.xlu0 %v324
    %v326 = vpop.xlane.xlu0 %325
    %v327 = vsel %vm55, %v243, 0.0
    %328 = vadd.xlane.f32.xlu0 %v327
    %v329 = vpop.xlane.xlu0 %328
    %v330 = vsel %vm55, %v244, 0.0
    %331 = vadd.xlane.f32.xlu0 %v330
    %v332 = vpop.xlane.xlu0 %331
    %v333 = vsel %vm55, %v245, 0.0
    %334 = vadd.xlane.f32.xlu0 %v333
    %v335 = vpop.xlane.xlu0 %334
    %v336 = vsel %vm55, %v246, 0.0
    %337 = vadd.xlane.f32.xlu0 %v336
    %v338 = vpop.xlane.xlu0 %337
    %v339 = vsel %vm55, %v247, 0.0
    %340 = vadd.xlane.f32.xlu0 %v339
    %v341 = vpop.xlane.xlu0 %340
    %v342 = vsel %vm55, %v248, 0.0
    %343 = vadd.xlane.f32.xlu0 %v342
    %v344 = vpop.xlane.xlu0 %343
    %v345 = vmul.f32 %v251, %v152
    %v346 = vmul.f32 %v254, %v152
    %v347 = vmul.f32 %v257, %v152
    %v348 = vmul.f32 %v260, %v152
    %v349 = vmul.f32 %v263, %v152
    %v350 = vmul.f32 %v266, %v152
    %v351 = vmul.f32 %v269, %v152
    %v352 = vmul.f32 %v272, %v152
    %v353 = vmul.f32 %v275, %v152
    %v354 = vmul.f32 %v278, %v152
    %v355 = vmul.f32 %v281, %v152
    %v356 = vmul.f32 %v284, %v152
    %v357 = vmul.f32 %v287, %v152
    %v358 = vmul.f32 %v290, %v152
    %v359 = vmul.f32 %v293, %v152
    %v360 = vmul.f32 %v296, %v152
    %v361 = vmul.f32 %v299, %v152
    %v362 = vmul.f32 %v302, %v152
    %v363 = vmul.f32 %v305, %v152
    %v364 = vmul.f32 %v308, %v152
    %v365 = vmul.f32 %v311, %v152
    %v366 = vmul.f32 %v314, %v152
    %v367 = vmul.f32 %v317, %v152
    %v368 = vmul.f32 %v320, %v152
    %v369 = vmul.f32 %v323, %v152
    %v370 = vmul.f32 %v326, %v152
    %v371 = vmul.f32 %v329, %v152
    %v372 = vmul.f32 %v332, %v152
    %v373 = vmul.f32 %v335, %v152
    %v374 = vmul.f32 %v338, %v152
    %v375 = vmul.f32 %v341, %v152
    %v376 = vmul.f32 %v344, %v152
    %v377 = vadd.f32 %v345, 1e-05
    %v378 = vadd.f32 %v346, 1e-05
    %v379 = vadd.f32 %v347, 1e-05
    %v380 = vadd.f32 %v348, 1e-05
    %v381 = vadd.f32 %v349, 1e-05
    %v382 = vadd.f32 %v350, 1e-05
    %v383 = vadd.f32 %v351, 1e-05
    %v384 = vadd.f32 %v352, 1e-05
    %v385 = vadd.f32 %v353, 1e-05
    %v386 = vadd.f32 %v354, 1e-05
    %v387 = vadd.f32 %v355, 1e-05
    %v388 = vadd.f32 %v356, 1e-05
    %v389 = vadd.f32 %v357, 1e-05
    %v390 = vadd.f32 %v358, 1e-05
    %v391 = vadd.f32 %v359, 1e-05
    %v392 = vadd.f32 %v360, 1e-05
    %v393 = vadd.f32 %v361, 1e-05
    %v394 = vadd.f32 %v362, 1e-05
    %v395 = vadd.f32 %v363, 1e-05
    %v396 = vadd.f32 %v364, 1e-05
    %v397 = vadd.f32 %v365, 1e-05
    %v398 = vadd.f32 %v366, 1e-05
    %v399 = vadd.f32 %v367, 1e-05
    %v400 = vadd.f32 %v368, 1e-05
    %v401 = vadd.f32 %v369, 1e-05
    %v402 = vadd.f32 %v370, 1e-05
    %v403 = vadd.f32 %v371, 1e-05
    %v404 = vadd.f32 %v372, 1e-05
    %v405 = vadd.f32 %v373, 1e-05
    %v406 = vadd.f32 %v374, 1e-05
    %v407 = vadd.f32 %v375, 1e-05
    %v408 = vadd.f32 %v376, 1e-05
    %v409 = vrsqrt.pop %v377
    %v410 = vrsqrt.pop %v378
    %v411 = vrsqrt.pop %v379
    %v412 = vrsqrt.pop %v380
    %v413 = vrsqrt.pop %v381
    %v414 = vrsqrt.pop %v382
    %v415 = vrsqrt.pop %v383
    %v416 = vrsqrt.pop %v384
    %v417 = vrsqrt.pop %v385
    %v418 = vrsqrt.pop %v386
    %v419 = vrsqrt.pop %v387
    %v420 = vrsqrt.pop %v388
    %v421 = vrsqrt.pop %v389
    %v422 = vrsqrt.pop %v390
    %v423 = vrsqrt.pop %v391
    %v424 = vrsqrt.pop %v392
    %v425 = vrsqrt.pop %v393
    %v426 = vrsqrt.pop %v394
    %v427 = vrsqrt.pop %v395
    %v428 = vrsqrt.pop %v396
    %v429 = vrsqrt.pop %v397
    %v430 = vrsqrt.pop %v398
    %v431 = vrsqrt.pop %v399
    %v432 = vrsqrt.pop %v400
    %v433 = vrsqrt.pop %v401
    %v434 = vrsqrt.pop %v402
    %v435 = vrsqrt.pop %v403
    %v436 = vrsqrt.pop %v404
    %v437 = vrsqrt.pop %v405
    %v438 = vrsqrt.pop %v406
    %v439 = vrsqrt.pop %v407
    %v440 = vrsqrt.pop %v408
    %v441 = vmul.f32 %v185, %v409
    %v442 = vmul.f32 %v186, %v410
    %v443 = vmul.f32 %v187, %v411
    %v444 = vmul.f32 %v188, %v412
    %v445 = vmul.f32 %v189, %v413
    %v446 = vmul.f32 %v190, %v414
    %v447 = vmul.f32 %v191, %v415
    %v448 = vmul.f32 %v192, %v416
    %v449 = vmul.f32 %v193, %v417
    %v450 = vmul.f32 %v194, %v418
    %v451 = vmul.f32 %v195, %v419
    %v452 = vmul.f32 %v196, %v420
    %v453 = vmul.f32 %v197, %v421
    %v454 = vmul.f32 %v198, %v422
    %v455 = vmul.f32 %v199, %v423
    %v456 = vmul.f32 %v200, %v424
    %v457 = vmul.f32 %v201, %v425
    %v458 = vmul.f32 %v202, %v426
    %v459 = vmul.f32 %v203, %v427
    %v460 = vmul.f32 %v204, %v428
    %v461 = vmul.f32 %v205, %v429
    %v462 = vmul.f32 %v206, %v430
    %v463 = vmul.f32 %v207, %v431
    %v464 = vmul.f32 %v208, %v432
    %v465 = vmul.f32 %v209, %v433
    %v466 = vmul.f32 %v210, %v434
    %v467 = vmul.f32 %v211, %v435
    %v468 = vmul.f32 %v212, %v436
    %v469 = vmul.f32 %v213, %v437
    %v470 = vmul.f32 %v214, %v438
    %v471 = vmul.f32 %v215, %v439
    %v472 = vmul.f32 %v216, %v440
    %v474 = vlaneseq
    %v475 = vshrl.u32 %v474, 7
    %v476 = vsub.s32 0, %v475
    %v477 = vrot.slane %v53, %v476
    %v479 = vmul.f32 %v441, %v477
    %v480 = vmul.f32 %v442, %v477
    %v481 = vmul.f32 %v443, %v477
    %v482 = vmul.f32 %v444, %v477
    %v483 = vmul.f32 %v445, %v477
    %v484 = vmul.f32 %v446, %v477
    %v485 = vmul.f32 %v447, %v477
    %v486 = vmul.f32 %v448, %v477
    %v487 = vmul.f32 %v449, %v477
    %v488 = vmul.f32 %v450, %v477
    %v489 = vmul.f32 %v451, %v477
    %v490 = vmul.f32 %v452, %v477
    %v491 = vmul.f32 %v453, %v477
    %v492 = vmul.f32 %v454, %v477
    %v493 = vmul.f32 %v455, %v477
    %v494 = vmul.f32 %v456, %v477
    %v495 = vmul.f32 %v457, %v477
    %v496 = vmul.f32 %v458, %v477
    %v497 = vmul.f32 %v459, %v477
    %v498 = vmul.f32 %v460, %v477
    %v499 = vmul.f32 %v461, %v477
    %v500 = vmul.f32 %v462, %v477
    %v501 = vmul.f32 %v463, %v477
    %v502 = vmul.f32 %v464, %v477
    %v503 = vmul.f32 %v465, %v477
    %v504 = vmul.f32 %v466, %v477
    %v505 = vmul.f32 %v467, %v477
    %v506 = vmul.f32 %v468, %v477
    %v507 = vmul.f32 %v469, %v477
    %v508 = vmul.f32 %v470, %v477
    %v509 = vmul.f32 %v471, %v477
    %v510 = vmul.f32 %v472, %v477
    %v512 = vlaneseq
    %v513 = vshrl.u32 %v512, 7
    %v514 = vsub.s32 0, %v513
    %v515 = vrot.slane %v54, %v514
    %v517 = vadd.f32 %v479, %v515
    %v518 = vadd.f32 %v480, %v515
    %v519 = vadd.f32 %v481, %v515
    %v520 = vadd.f32 %v482, %v515
    %v521 = vadd.f32 %v483, %v515
    %v522 = vadd.f32 %v484, %v515
    %v523 = vadd.f32 %v485, %v515
    %v524 = vadd.f32 %v486, %v515
    %v525 = vadd.f32 %v487, %v515
    %v526 = vadd.f32 %v488, %v515
    %v527 = vadd.f32 %v489, %v515
    %v528 = vadd.f32 %v490, %v515
    %v529 = vadd.f32 %v491, %v515
    %v530 = vadd.f32 %v492, %v515
    %v531 = vadd.f32 %v493, %v515
    %v532 = vadd.f32 %v494, %v515
    %v533 = vadd.f32 %v495, %v515
    %v534 = vadd.f32 %v496, %v515
    %v535 = vadd.f32 %v497, %v515
    %v536 = vadd.f32 %v498, %v515
    %v537 = vadd.f32 %v499, %v515
    %v538 = vadd.f32 %v500, %v515
    %v539 = vadd.f32 %v501, %v515
    %v540 = vadd.f32 %v502, %v515
    %v541 = vadd.f32 %v503, %v515
    %v542 = vadd.f32 %v504, %v515
    %v543 = vadd.f32 %v505, %v515
    %v544 = vadd.f32 %v506, %v515
    %v545 = vadd.f32 %v507, %v515
    %v546 = vadd.f32 %v508, %v515
    %v547 = vadd.f32 %v509, %v515
    %v548 = vadd.f32 %v510, %v515
    %v549 = vpack.c.bf16 %v518, %v517
    %v550 = vpack.c.bf16 %v520, %v519
    %v551 = vpack.c.bf16 %v522, %v521
    %v552 = vpack.c.bf16 %v524, %v523
    %v553 = vpack.c.bf16 %v526, %v525
    %v554 = vpack.c.bf16 %v528, %v527
    %v555 = vpack.c.bf16 %v530, %v529
    %v556 = vpack.c.bf16 %v532, %v531
    %v557 = vpack.c.bf16 %v534, %v533
    %v558 = vpack.c.bf16 %v536, %v535
    %v559 = vpack.c.bf16 %v538, %v537
    %v560 = vpack.c.bf16 %v540, %v539
    %v561 = vpack.c.bf16 %v542, %v541
    %v562 = vpack.c.bf16 %v544, %v543
    %v563 = vpack.c.bf16 %v546, %v545
    %v564 = vpack.c.bf16 %v548, %v547
    %v565 = vld [vmem:[%s3] sm:$0xff]
    %v566 = vld [vmem:[%s3 + $0x8] sm:$0xf]
    %v567 = vld [vmem:[%s3 + $0xc] sm:$0xff]
    %v568 = vld [vmem:[%s3 + $0x14] sm:$0xf]
    %v569 = vld [vmem:[%s3 + $0x18] sm:$0xff]
    %v570 = vld [vmem:[%s3 + $0x20] sm:$0xf]
    %v571 = vld [vmem:[%s3 + $0x24] sm:$0xff]
    %v572 = vld [vmem:[%s3 + $0x2c] sm:$0xf]
    %v573 = vld [vmem:[%s4] sm:$0x7]
    %v575 = vlaneseq
    %v576 = vshrl.u32 %v575, 7
    %v577 = vsub.s32 0, %v576
    %v578 = vrot.slane %v573, %v577
    %v579 = vlaneseq
    %v580 = vshrl.u32 %v579, 7
    %v581 = vsub.s32 1, %v580
    %v582 = vrot.slane %v573, %v581
    %v583 = vlaneseq
    %v584 = vshrl.u32 %v583, 7
    %v585 = vsub.s32 2, %v584
    %v586 = vrot.slane %v573, %v585
    %v598 = vunpack.c.l.b16 %v565
    %v599 = vunpack.c.h.b16 %v565
    %v600 = vunpack.c.l.b16 %v566
    %v601 = vunpack.c.l.b16 %v567
    %v602 = vunpack.c.h.b16 %v567
    %v603 = vunpack.c.l.b16 %v568
    %v604 = vunpack.c.l.b16 %v569
    %v605 = vunpack.c.h.b16 %v569
    %v606 = vunpack.c.l.b16 %v570
    %v607 = vunpack.c.l.b16 %v571
    %v608 = vunpack.c.h.b16 %v571
    %v609 = vunpack.c.l.b16 %v572
    %v610 = vpack.c.b16 %v601, %v598
    %v611 = vpack.c.b16 %v602, %v599
    %v612 = vpack.c.b16 %v603, %v600
    %v613 = vpack.c.b16 %v607, %v604
    %v614 = vpack.c.b16 %v608, %v605
    %v615 = vpack.c.b16 %v609, %v606
    %v623 = vsel %vm55, %v549, 0
    %v626 = vsel %vm55, %v550, 0
    %v629 = vsel %vm55, %v551, 0
    %v632 = vsel %vm55, %v552, 0
    %v635 = vsel %vm55, %v553, 0
    %v638 = vsel %vm55, %v554, 0
    %v641 = vsel %vm55, %v555, 0
    %v644 = vsel %vm55, %v556, 0
    %v647 = vsel %vm55, %v557, 0
    %v650 = vsel %vm55, %v558, 0
    %v653 = vsel %vm55, %v559, 0
    %v656 = vsel %vm55, %v560, 0
    %v659 = vsel %vm55, %v561, 0
    %v662 = vsel %vm55, %v562, 0
    %v665 = vsel %vm55, %v563, 0
    %v668 = vsel %vm55, %v564, 0
    %670 = vmatprep.subr.bf16.mxu0 %v611
    %671 = vmatpush1.bf16.msra.mxu0 %v610
    %672 = vmatprep.subr.bf16.mxu0 %v614
    %673 = vmatpush1.bf16.msra.mxu0 %v613
    %674 = vmatprep.subr.bf16.mxu0 0
    %675 = vmatpush1.bf16.msra.mxu0 0
    %676 = vmatprep.subr.bf16.mxu0 0
    %677 = vmatpush1.bf16.msra.mxu0 0
    %678 = vmatprep.subr.bf16.mxu0 0
    %679 = vmatpush1.bf16.msra.mxu0 0
    %680 = vmatprep.subr.bf16.mxu0 0
    %681 = vmatpush1.bf16.msra.mxu0 0
    %682 = vmatprep.subr.bf16.mxu0 0
    %683 = vmatpush1.bf16.msra.mxu0 0
    %684 = vmatprep.subr.bf16.mxu0 0
    %685 = vmatpush1.bf16.msra.mxu0 0
    %686 = vmatprep.subr.bf16.mxu0 0
    %687 = vmatpush1.bf16.msra.mxu0 0
    %688 = vmatprep.subr.bf16.mxu0 0
    %689 = vmatpush1.bf16.msra.mxu0 0
    %690 = vmatprep.subr.bf16.mxu0 0
    %691 = vmatpush1.bf16.msra.mxu0 0
    %692 = vmatprep.subr.bf16.mxu0 0
    %693 = vmatpush1.bf16.msra.mxu0 0
    %694 = vmatprep.subr.bf16.mxu0 0
    %695 = vmatpush1.bf16.msra.mxu0 0
    %696 = vmatprep.subr.bf16.mxu0 0
    %697 = vmatpush1.bf16.msra.mxu0 0
    %698 = vmatprep.subr.bf16.mxu0 0
    %699 = vmatpush1.bf16.msra.mxu0 0
    %700 = vmatprep.subr.bf16.mxu0 0
    %701 = vmatpush1.bf16.msra.mxu0 0
    %702 = vmatprep.mubr.bf16.mxu0 0
    %703 = vmatmul.mubr.bf16.gmra.mrb[0].mxu0 %v623
    %v704 = vpop.f32.mrb[0].mxu0
    %v705 = vadd.f32 %v578, %v704
    %v706 = vpop.f32.mrb[0].mxu0
    %v707 = vadd.f32 %v582, %v706
    %v708 = vpop.f32.mrb[0].mxu0
    %v709 = vadd.f32 %v578, %v708
    %v710 = vpop.f32.mrb[0].mxu0
    %v711 = vadd.f32 %v582, %v710
    %712 = vmatprep.mubr.bf16.mxu0 0
    %713 = vmatmul.mubr.bf16.gmra.mrb[0].mxu0 %v626
    %v714 = vpop.f32.mrb[0].mxu0
    %v715 = vadd.f32 %v578, %v714
    %v716 = vpop.f32.mrb[0].mxu0
    %v717 = vadd.f32 %v582, %v716
    %v718 = vpop.f32.mrb[0].mxu0
    %v719 = vadd.f32 %v578, %v718
    %v720 = vpop.f32.mrb[0].mxu0
    %v721 = vadd.f32 %v582, %v720
    %722 = vmatprep.mubr.bf16.mxu0 0
    %723 = vmatmul.mubr.bf16.gmra.mrb[0].mxu0 %v629
    %v724 = vpop.f32.mrb[0].mxu0
    %v725 = vadd.f32 %v578, %v724
    %v726 = vpop.f32.mrb[0].mxu0
    %v727 = vadd.f32 %v582, %v726
    %v728 = vpop.f32.mrb[0].mxu0
    %v729 = vadd.f32 %v578, %v728
    %v730 = vpop.f32.mrb[0].mxu0
    %v731 = vadd.f32 %v582, %v730
    %732 = vmatprep.mubr.bf16.mxu0 0
    %733 = vmatmul.mubr.bf16.gmra.mrb[0].mxu0 %v632
    %v734 = vpop.f32.mrb[0].mxu0
    %v735 = vadd.f32 %v578, %v734
    %v736 = vpop.f32.mrb[0].mxu0
    %v737 = vadd.f32 %v582, %v736
    %v738 = vpop.f32.mrb[0].mxu0
    %v739 = vadd.f32 %v578, %v738
    %v740 = vpop.f32.mrb[0].mxu0
    %v741 = vadd.f32 %v582, %v740
    %742 = vmatprep.mubr.bf16.mxu0 0
    %743 = vmatmul.mubr.bf16.gmra.mrb[0].mxu0 %v635
    %v744 = vpop.f32.mrb[0].mxu0
    %v745 = vadd.f32 %v578, %v744
    %v746 = vpop.f32.mrb[0].mxu0
    %v747 = vadd.f32 %v582, %v746
    %v748 = vpop.f32.mrb[0].mxu0
    %v749 = vadd.f32 %v578, %v748
    %v750 = vpop.f32.mrb[0].mxu0
    %v751 = vadd.f32 %v582, %v750
    %752 = vmatprep.mubr.bf16.mxu0 0
    %753 = vmatmul.mubr.bf16.gmra.mrb[0].mxu0 %v638
    %v754 = vpop.f32.mrb[0].mxu0
    %v755 = vadd.f32 %v578, %v754
    %v756 = vpop.f32.mrb[0].mxu0
    %v757 = vadd.f32 %v582, %v756
    %v758 = vpop.f32.mrb[0].mxu0
    %v759 = vadd.f32 %v578, %v758
    %v760 = vpop.f32.mrb[0].mxu0
    %v761 = vadd.f32 %v582, %v760
    %762 = vmatprep.mubr.bf16.mxu0 0
    %763 = vmatmul.mubr.bf16.gmra.mrb[0].mxu0 %v641
    %v764 = vpop.f32.mrb[0].mxu0
    %v765 = vadd.f32 %v578, %v764
    %v766 = vpop.f32.mrb[0].mxu0
    %v767 = vadd.f32 %v582, %v766
    %v768 = vpop.f32.mrb[0].mxu0
    %v769 = vadd.f32 %v578, %v768
    %v770 = vpop.f32.mrb[0].mxu0
    %v771 = vadd.f32 %v582, %v770
    %772 = vmatprep.mubr.bf16.mxu0 0
    %773 = vmatmul.mubr.bf16.gmra.mrb[0].mxu0 %v644
    %v774 = vpop.f32.mrb[0].mxu0
    %v775 = vadd.f32 %v578, %v774
    %v776 = vpop.f32.mrb[0].mxu0
    %v777 = vadd.f32 %v582, %v776
    %v778 = vpop.f32.mrb[0].mxu0
    %v779 = vadd.f32 %v578, %v778
    %v780 = vpop.f32.mrb[0].mxu0
    %v781 = vadd.f32 %v582, %v780
    %782 = vmatprep.mubr.bf16.mxu0 0
    %783 = vmatmul.mubr.bf16.gmra.mrb[0].mxu0 %v647
    %v784 = vpop.f32.mrb[0].mxu0
    %v785 = vadd.f32 %v578, %v784
    %v786 = vpop.f32.mrb[0].mxu0
    %v787 = vadd.f32 %v582, %v786
    %v788 = vpop.f32.mrb[0].mxu0
    %v789 = vadd.f32 %v578, %v788
    %v790 = vpop.f32.mrb[0].mxu0
    %v791 = vadd.f32 %v582, %v790
    %792 = vmatprep.mubr.bf16.mxu0 0
    %793 = vmatmul.mubr.bf16.gmra.mrb[0].mxu0 %v650
    %v794 = vpop.f32.mrb[0].mxu0
    %v795 = vadd.f32 %v578, %v794
    %v796 = vpop.f32.mrb[0].mxu0
    %v797 = vadd.f32 %v582, %v796
    %v798 = vpop.f32.mrb[0].mxu0
    %v799 = vadd.f32 %v578, %v798
    %v800 = vpop.f32.mrb[0].mxu0
    %v801 = vadd.f32 %v582, %v800
    %802 = vmatprep.mubr.bf16.mxu0 0
    %803 = vmatmul.mubr.bf16.gmra.mrb[0].mxu0 %v653
    %v804 = vpop.f32.mrb[0].mxu0
    %v805 = vadd.f32 %v578, %v804
    %v806 = vpop.f32.mrb[0].mxu0
    %v807 = vadd.f32 %v582, %v806
    %v808 = vpop.f32.mrb[0].mxu0
    %v809 = vadd.f32 %v578, %v808
    %v810 = vpop.f32.mrb[0].mxu0
    %v811 = vadd.f32 %v582, %v810
    %812 = vmatprep.mubr.bf16.mxu0 0
    %813 = vmatmul.mubr.bf16.gmra.mrb[0].mxu0 %v656
    %v814 = vpop.f32.mrb[0].mxu0
    %v815 = vadd.f32 %v578, %v814
    %v816 = vpop.f32.mrb[0].mxu0
    %v817 = vadd.f32 %v582, %v816
    %v818 = vpop.f32.mrb[0].mxu0
    %v819 = vadd.f32 %v578, %v818
    %v820 = vpop.f32.mrb[0].mxu0
    %v821 = vadd.f32 %v582, %v820
    %822 = vmatprep.mubr.bf16.mxu0 0
    %823 = vmatmul.mubr.bf16.gmra.mrb[0].mxu0 %v659
    %v824 = vpop.f32.mrb[0].mxu0
    %v825 = vadd.f32 %v578, %v824
    %v826 = vpop.f32.mrb[0].mxu0
    %v827 = vadd.f32 %v582, %v826
    %v828 = vpop.f32.mrb[0].mxu0
    %v829 = vadd.f32 %v578, %v828
    %v830 = vpop.f32.mrb[0].mxu0
    %v831 = vadd.f32 %v582, %v830
    %832 = vmatprep.mubr.bf16.mxu0 0
    %833 = vmatmul.mubr.bf16.gmra.mrb[0].mxu0 %v662
    %v834 = vpop.f32.mrb[0].mxu0
    %v835 = vadd.f32 %v578, %v834
    %v836 = vpop.f32.mrb[0].mxu0
    %v837 = vadd.f32 %v582, %v836
    %v838 = vpop.f32.mrb[0].mxu0
    %v839 = vadd.f32 %v578, %v838
    %v840 = vpop.f32.mrb[0].mxu0
    %v841 = vadd.f32 %v582, %v840
    %842 = vmatprep.mubr.bf16.mxu0 0
    %843 = vmatmul.mubr.bf16.gmra.mrb[0].mxu0 %v665
    %v844 = vpop.f32.mrb[0].mxu0
    %v845 = vadd.f32 %v578, %v844
    %v846 = vpop.f32.mrb[0].mxu0
    %v847 = vadd.f32 %v582, %v846
    %v848 = vpop.f32.mrb[0].mxu0
    %v849 = vadd.f32 %v578, %v848
    %v850 = vpop.f32.mrb[0].mxu0
    %v851 = vadd.f32 %v582, %v850
    %852 = vmatprep.mubr.bf16.mxu0 0
    %853 = vmatmul.mubr.bf16.gmra.mrb[0].mxu0 %v668
    %v854 = vpop.f32.mrb[0].mxu0
    %v855 = vadd.f32 %v578, %v854
    %v856 = vpop.f32.mrb[0].mxu0
    %v857 = vadd.f32 %v582, %v856
    %v858 = vpop.f32.mrb[0].mxu0
    %v859 = vadd.f32 %v578, %v858
    %v860 = vpop.f32.mrb[0].mxu0
    %v861 = vadd.f32 %v582, %v860
    %862 = vdwg.mxu0
    %863 = vmatprep.subr.bf16.mxu0 0
    %864 = vmatpush1.bf16.msra.mxu0 %v612
    %865 = vmatprep.subr.bf16.mxu0 0
    %866 = vmatpush1.bf16.msra.mxu0 %v615
    %867 = vmatprep.subr.bf16.mxu0 0
    %868 = vmatpush1.bf16.msra.mxu0 0
    %869 = vmatprep.subr.bf16.mxu0 0
    %870 = vmatpush1.bf16.msra.mxu0 0
    %871 = vmatprep.subr.bf16.mxu0 0
    %872 = vmatpush1.bf16.msra.mxu0 0
    %873 = vmatprep.subr.bf16.mxu0 0
    %874 = vmatpush1.bf16.msra.mxu0 0
    %875 = vmatprep.subr.bf16.mxu0 0
    %876 = vmatpush1.bf16.msra.mxu0 0
    %877 = vmatprep.subr.bf16.mxu0 0
    %878 = vmatpush1.bf16.msra.mxu0 0
    %879 = vmatprep.subr.bf16.mxu0 0
    %880 = vmatpush1.bf16.msra.mxu0 0
    %881 = vmatprep.subr.bf16.mxu0 0
    %882 = vmatpush1.bf16.msra.mxu0 0
    %883 = vmatprep.subr.bf16.mxu0 0
    %884 = vmatpush1.bf16.msra.mxu0 0
    %885 = vmatprep.subr.bf16.mxu0 0
    %886 = vmatpush1.bf16.msra.mxu0 0
    %887 = vmatprep.subr.bf16.mxu0 0
    %888 = vmatpush1.bf16.msra.mxu0 0
    %889 = vmatprep.subr.bf16.mxu0 0
    %890 = vmatpush1.bf16.msra.mxu0 0
    %891 = vmatprep.subr.bf16.mxu0 0
    %892 = vmatpush1.bf16.msra.mxu0 0
    %893 = vmatprep.subr.bf16.mxu0 0
    %894 = vmatpush1.bf16.msra.mxu0 0
    %895 = vmatprep.mubr.bf16.mxu0 0
    %896 = vmatmul.mubr.bf16.gmra.mrb[0].mxu0 %v623
    %v897 = vpop.f32.mrb[0].mxu0
    %v898 = vadd.f32 %v586, %v897
    %v899 = vpop.f32.mrb[0].mxu0
    %v900 = vpop.f32.mrb[0].mxu0
    %v901 = vadd.f32 %v586, %v900
    %v902 = vpop.f32.mrb[0].mxu0
    %903 = vmatprep.mubr.bf16.mxu0 0
    %904 = vmatmul.mubr.bf16.gmra.mrb[0].mxu0 %v626
    %v905 = vpop.f32.mrb[0].mxu0
    %v906 = vadd.f32 %v586, %v905
    %v907 = vpop.f32.mrb[0].mxu0
    %v908 = vpop.f32.mrb[0].mxu0
    %v909 = vadd.f32 %v586, %v908
    %v910 = vpop.f32.mrb[0].mxu0
    %911 = vmatprep.mubr.bf16.mxu0 0
    %912 = vmatmul.mubr.bf16.gmra.mrb[0].mxu0 %v629
    %v913 = vpop.f32.mrb[0].mxu0
    %v914 = vadd.f32 %v586, %v913
    %v915 = vpop.f32.mrb[0].mxu0
    %v916 = vpop.f32.mrb[0].mxu0
    %v917 = vadd.f32 %v586, %v916
    %v918 = vpop.f32.mrb[0].mxu0
    %919 = vmatprep.mubr.bf16.mxu0 0
    %920 = vmatmul.mubr.bf16.gmra.mrb[0].mxu0 %v632
    %v921 = vpop.f32.mrb[0].mxu0
    %v922 = vadd.f32 %v586, %v921
    %v923 = vpop.f32.mrb[0].mxu0
    %v924 = vpop.f32.mrb[0].mxu0
    %v925 = vadd.f32 %v586, %v924
    %v926 = vpop.f32.mrb[0].mxu0
    %927 = vmatprep.mubr.bf16.mxu0 0
    %928 = vmatmul.mubr.bf16.gmra.mrb[0].mxu0 %v635
    %v929 = vpop.f32.mrb[0].mxu0
    %v930 = vadd.f32 %v586, %v929
    %v931 = vpop.f32.mrb[0].mxu0
    %v932 = vpop.f32.mrb[0].mxu0
    %v933 = vadd.f32 %v586, %v932
    %v934 = vpop.f32.mrb[0].mxu0
    %935 = vmatprep.mubr.bf16.mxu0 0
    %936 = vmatmul.mubr.bf16.gmra.mrb[0].mxu0 %v638
    %v937 = vpop.f32.mrb[0].mxu0
    %v938 = vadd.f32 %v586, %v937
    %v939 = vpop.f32.mrb[0].mxu0
    %v940 = vpop.f32.mrb[0].mxu0
    %v941 = vadd.f32 %v586, %v940
    %v942 = vpop.f32.mrb[0].mxu0
    %943 = vmatprep.mubr.bf16.mxu0 0
    %944 = vmatmul.mubr.bf16.gmra.mrb[0].mxu0 %v641
    %v945 = vpop.f32.mrb[0].mxu0
    %v946 = vadd.f32 %v586, %v945
    %v947 = vpop.f32.mrb[0].mxu0
    %v948 = vpop.f32.mrb[0].mxu0
    %v949 = vadd.f32 %v586, %v948
    %v950 = vpop.f32.mrb[0].mxu0
    %951 = vmatprep.mubr.bf16.mxu0 0
    %952 = vmatmul.mubr.bf16.gmra.mrb[0].mxu0 %v644
    %v953 = vpop.f32.mrb[0].mxu0
    %v954 = vadd.f32 %v586, %v953
    %v955 = vpop.f32.mrb[0].mxu0
    %v956 = vpop.f32.mrb[0].mxu0
    %v957 = vadd.f32 %v586, %v956
    %v958 = vpop.f32.mrb[0].mxu0
    %959 = vmatprep.mubr.bf16.mxu0 0
    %960 = vmatmul.mubr.bf16.gmra.mrb[0].mxu0 %v647
    %v961 = vpop.f32.mrb[0].mxu0
    %v962 = vadd.f32 %v586, %v961
    %v963 = vpop.f32.mrb[0].mxu0
    %v964 = vpop.f32.mrb[0].mxu0
    %v965 = vadd.f32 %v586, %v964
    %v966 = vpop.f32.mrb[0].mxu0
    %967 = vmatprep.mubr.bf16.mxu0 0
    %968 = vmatmul.mubr.bf16.gmra.mrb[0].mxu0 %v650
    %v969 = vpop.f32.mrb[0].mxu0
    %v970 = vadd.f32 %v586, %v969
    %v971 = vpop.f32.mrb[0].mxu0
    %v972 = vpop.f32.mrb[0].mxu0
    %v973 = vadd.f32 %v586, %v972
    %v974 = vpop.f32.mrb[0].mxu0
    %975 = vmatprep.mubr.bf16.mxu0 0
    %976 = vmatmul.mubr.bf16.gmra.mrb[0].mxu0 %v653
    %v977 = vpop.f32.mrb[0].mxu0
    %v978 = vadd.f32 %v586, %v977
    %v979 = vpop.f32.mrb[0].mxu0
    %v980 = vpop.f32.mrb[0].mxu0
    %v981 = vadd.f32 %v586, %v980
    %v982 = vpop.f32.mrb[0].mxu0
    %983 = vmatprep.mubr.bf16.mxu0 0
    %984 = vmatmul.mubr.bf16.gmra.mrb[0].mxu0 %v656
    %v985 = vpop.f32.mrb[0].mxu0
    %v986 = vadd.f32 %v586, %v985
    %v987 = vpop.f32.mrb[0].mxu0
    %v988 = vpop.f32.mrb[0].mxu0
    %v989 = vadd.f32 %v586, %v988
    %v990 = vpop.f32.mrb[0].mxu0
    %991 = vmatprep.mubr.bf16.mxu0 0
    %992 = vmatmul.mubr.bf16.gmra.mrb[0].mxu0 %v659
    %v993 = vpop.f32.mrb[0].mxu0
    %v994 = vadd.f32 %v586, %v993
    %v995 = vpop.f32.mrb[0].mxu0
    %v996 = vpop.f32.mrb[0].mxu0
    %v997 = vadd.f32 %v586, %v996
    %v998 = vpop.f32.mrb[0].mxu0
    %999 = vmatprep.mubr.bf16.mxu0 0
    %1000 = vmatmul.mubr.bf16.gmra.mrb[0].mxu0 %v662
    %v1001 = vpop.f32.mrb[0].mxu0
    %v1002 = vadd.f32 %v586, %v1001
    %v1003 = vpop.f32.mrb[0].mxu0
    %v1004 = vpop.f32.mrb[0].mxu0
    %v1005 = vadd.f32 %v586, %v1004
    %v1006 = vpop.f32.mrb[0].mxu0
    %1007 = vmatprep.mubr.bf16.mxu0 0
    %1008 = vmatmul.mubr.bf16.gmra.mrb[0].mxu0 %v665
    %v1009 = vpop.f32.mrb[0].mxu0
    %v1010 = vadd.f32 %v586, %v1009
    %v1011 = vpop.f32.mrb[0].mxu0
    %v1012 = vpop.f32.mrb[0].mxu0
    %v1013 = vadd.f32 %v586, %v1012
    %v1014 = vpop.f32.mrb[0].mxu0
    %1015 = vmatprep.mubr.bf16.mxu0 0
    %1016 = vmatmul.mubr.bf16.gmra.mrb[0].mxu0 %v668
    %v1017 = vpop.f32.mrb[0].mxu0
    %v1018 = vadd.f32 %v586, %v1017
    %v1019 = vpop.f32.mrb[0].mxu0
    %v1020 = vpop.f32.mrb[0].mxu0
    %v1021 = vadd.f32 %v586, %v1020
    %v1022 = vpop.f32.mrb[0].mxu0
    %1023 = vdwg.mxu0
    %1024 = vst [vmem:[#allocation2] sm:$0xff] %v705
    %1025 = vst [vmem:[#allocation2 + $0x8] sm:$0xff] %v707
    %1026 = vst [vmem:[#allocation2 + $0x10] sm:$0xff] %v898
    %1027 = vst [vmem:[#allocation2 + $0x18] sm:$0xff] %v709
    %1028 = vst [vmem:[#allocation2 + $0x20] sm:$0xff] %v711
    %1029 = vst [vmem:[#allocation2 + $0x28] sm:$0xff] %v901
    %1030 = vst [vmem:[#allocation2 + $0x30] sm:$0xff] %v715
    %1031 = vst [vmem:[#allocation2 + $0x38] sm:$0xff] %v717
    %1032 = vst [vmem:[#allocation2 + $0x40] sm:$0xff] %v906
    %1033 = vst [vmem:[#allocation2 + $0x48] sm:$0xff] %v719
    %1034 = vst [vmem:[#allocation2 + $0x50] sm:$0xff] %v721
    %1035 = vst [vmem:[#allocation2 + $0x58] sm:$0xff] %v909
    %1036 = vst [vmem:[#allocation2 + $0x60] sm:$0xff] %v725
    %1037 = vst [vmem:[#allocation2 + $0x68] sm:$0xff] %v727
    %1038 = vst [vmem:[#allocation2 + $0x70] sm:$0xff] %v914
    %1039 = vst [vmem:[#allocation2 + $0x78] sm:$0xff] %v729
    %1040 = vst [vmem:[#allocation2 + $0x80] sm:$0xff] %v731
    %1041 = vst [vmem:[#allocation2 + $0x88] sm:$0xff] %v917
    %1042 = vst [vmem:[#allocation2 + $0x90] sm:$0xff] %v735
    %1043 = vst [vmem:[#allocation2 + $0x98] sm:$0xff] %v737
    %1044 = vst [vmem:[#allocation2 + $0xa0] sm:$0xff] %v922
    %1045 = vst [vmem:[#allocation2 + $0xa8] sm:$0xff] %v739
    %1046 = vst [vmem:[#allocation2 + $0xb0] sm:$0xff] %v741
    %1047 = vst [vmem:[#allocation2 + $0xb8] sm:$0xff] %v925
    %1048 = vst [vmem:[#allocation2 + $0xc0] sm:$0xff] %v745
    %1049 = vst [vmem:[#allocation2 + $0xc8] sm:$0xff] %v747
    %1050 = vst [vmem:[#allocation2 + $0xd0] sm:$0xff] %v930
    %1051 = vst [vmem:[#allocation2 + $0xd8] sm:$0xff] %v749
    %1052 = vst [vmem:[#allocation2 + $0xe0] sm:$0xff] %v751
    %1053 = vst [vmem:[#allocation2 + $0xe8] sm:$0xff] %v933
    %1054 = vst [vmem:[#allocation2 + $0xf0] sm:$0xff] %v755
    %1055 = vst [vmem:[#allocation2 + $0xf8] sm:$0xff] %v757
    %1056 = vst [vmem:[#allocation2 + $0x100] sm:$0xff] %v938
    %1057 = vst [vmem:[#allocation2 + $0x108] sm:$0xff] %v759
    %1058 = vst [vmem:[#allocation2 + $0x110] sm:$0xff] %v761
    %1059 = vst [vmem:[#allocation2 + $0x118] sm:$0xff] %v941
    %1060 = vst [vmem:[#allocation2 + $0x120] sm:$0xff] %v765
    %1061 = vst [vmem:[#allocation2 + $0x128] sm:$0xff] %v767
    %1062 = vst [vmem:[#allocation2 + $0x130] sm:$0xff] %v946
    %1063 = vst [vmem:[#allocation2 + $0x138] sm:$0xff] %v769
    %1064 = vst [vmem:[#allocation2 + $0x140] sm:$0xff] %v771
    %1065 = vst [vmem:[#allocation2 + $0x148] sm:$0xff] %v949
    %1066 = vst [vmem:[#allocation2 + $0x150] sm:$0xff] %v775
    %1067 = vst [vmem:[#allocation2 + $0x158] sm:$0xff] %v777
    %1068 = vst [vmem:[#allocation2 + $0x160] sm:$0xff] %v954
    %1069 = vst [vmem:[#allocation2 + $0x168] sm:$0xff] %v779
    %1070 = vst [vmem:[#allocation2 + $0x170] sm:$0xff] %v781
    %1071 = vst [vmem:[#allocation2 + $0x178] sm:$0xff] %v957
    %1072 = vst [vmem:[#allocation2 + $0x180] sm:$0xff] %v785
    %1073 = vst [vmem:[#allocation2 + $0x188] sm:$0xff] %v787
    %1074 = vst [vmem:[#allocation2 + $0x190] sm:$0xff] %v962
    %1075 = vst [vmem:[#allocation2 + $0x198] sm:$0xff] %v789
    %1076 = vst [vmem:[#allocation2 + $0x1a0] sm:$0xff] %v791
    %1077 = vst [vmem:[#allocation2 + $0x1a8] sm:$0xff] %v965
    %1078 = vst [vmem:[#allocation2 + $0x1b0] sm:$0xff] %v795
    %1079 = vst [vmem:[#allocation2 + $0x1b8] sm:$0xff] %v797
    %1080 = vst [vmem:[#allocation2 + $0x1c0] sm:$0xff] %v970
    %1081 = vst [vmem:[#allocation2 + $0x1c8] sm:$0xff] %v799
    %1082 = vst [vmem:[#allocation2 + $0x1d0] sm:$0xff] %v801
    %1083 = vst [vmem:[#allocation2 + $0x1d8] sm:$0xff] %v973
    %1084 = vst [vmem:[#allocation2 + $0x1e0] sm:$0xff] %v805
    %1085 = vst [vmem:[#allocation2 + $0x1e8] sm:$0xff] %v807
    %1086 = vst [vmem:[#allocation2 + $0x1f0] sm:$0xff] %v978
    %1087 = vst [vmem:[#allocation2 + $0x1f8] sm:$0xff] %v809
    %1088 = vst [vmem:[#allocation2 + $0x200] sm:$0xff] %v811
    %1089 = vst [vmem:[#allocation2 + $0x208] sm:$0xff] %v981
    %1090 = vst [vmem:[#allocation2 + $0x210] sm:$0xff] %v815
    %1091 = vst [vmem:[#allocation2 + $0x218] sm:$0xff] %v817
    %1092 = vst [vmem:[#allocation2 + $0x220] sm:$0xff] %v986
    %1093 = vst [vmem:[#allocation2 + $0x228] sm:$0xff] %v819
    %1094 = vst [vmem:[#allocation2 + $0x230] sm:$0xff] %v821
    %1095 = vst [vmem:[#allocation2 + $0x238] sm:$0xff] %v989
    %1096 = vst [vmem:[#allocation2 + $0x240] sm:$0xff] %v825
    %1097 = vst [vmem:[#allocation2 + $0x248] sm:$0xff] %v827
    %1098 = vst [vmem:[#allocation2 + $0x250] sm:$0xff] %v994
    %1099 = vst [vmem:[#allocation2 + $0x258] sm:$0xff] %v829
    %1100 = vst [vmem:[#allocation2 + $0x260] sm:$0xff] %v831
    %1101 = vst [vmem:[#allocation2 + $0x268] sm:$0xff] %v997
    %1102 = vst [vmem:[#allocation2 + $0x270] sm:$0xff] %v835
    %1103 = vst [vmem:[#allocation2 + $0x278] sm:$0xff] %v837
    %1104 = vst [vmem:[#allocation2 + $0x280] sm:$0xff] %v1002
    %1105 = vst [vmem:[#allocation2 + $0x288] sm:$0xff] %v839
    %1106 = vst [vmem:[#allocation2 + $0x290] sm:$0xff] %v841
    %1107 = vst [vmem:[#allocation2 + $0x298] sm:$0xff] %v1005
    %1108 = vst [vmem:[#allocation2 + $0x2a0] sm:$0xff] %v845
    %1109 = vst [vmem:[#allocation2 + $0x2a8] sm:$0xff] %v847
    %1110 = vst [vmem:[#allocation2 + $0x2b0] sm:$0xff] %v1010
    %1111 = vst [vmem:[#allocation2 + $0x2b8] sm:$0xff] %v849
    %1112 = vst [vmem:[#allocation2 + $0x2c0] sm:$0xff] %v851
    %1113 = vst [vmem:[#allocation2 + $0x2c8] sm:$0xff] %v1013
    %1114 = vst [vmem:[#allocation2 + $0x2d0] sm:$0xff] %v855
    %1115 = vst [vmem:[#allocation2 + $0x2d8] sm:$0xff] %v857
    %1116 = vst [vmem:[#allocation2 + $0x2e0] sm:$0xff] %v1018
    %1117 = vst [vmem:[#allocation2 + $0x2e8] sm:$0xff] %v859
    %1118 = vst [vmem:[#allocation2 + $0x2f0] sm:$0xff] %v861
    %1119 = vst [vmem:[#allocation2 + $0x2f8] sm:$0xff] %v1021
    // Predicated region
    $region22: #{mim_head_forward.5} parent=1 // pred_check
      _
    $region23: #{mim_head_forward.5} parent=1 // pred_check_branch
      %1121 = sbr.rel (0) target = $region25
    $region24: #{mim_head_forward.5} parent=1 // pred_region
      // Predicated region
      $region26: #{mim_head_forward.5} parent=24 // pred_check
        _
      $region27: #{mim_head_forward.5} parent=24 // pred_check_branch
        %1123 = sbr.rel (0) target = $region29
      $region28: #{mim_head_forward.5} parent=24 // pred_region
        // Predicated region
        $region30: #{mim_head_forward.5} parent=28 // pred_check
          _
        $region31: #{mim_head_forward.5} parent=28 // pred_check_branch
          %1125 = sbr.rel (0) target = $region33
        $region32: #{mim_head_forward.5} parent=28 // pred_region
          loop: start=0, step=1, limit=1
          $region34: #{mim_head_forward.5} parent=32 // loop_pre_header
            _
          $region35: #{mim_head_forward.5} parent=32 // loop_header
            %s1127 = sphi 0, %s1131
            %p1128 = scmp.ge.s32.totalorder %s1127, 1
            %s1132 = sphi [#allocation2], [#allocation2]
            %s1133 = sphi %s5, %s5
          $region36: #{mim_head_forward.5} parent=32 // loop_header_branch
            %1130 = sbr.rel (%p1128) target = $region40
          $region37: #{mim_head_forward.5} parent=32 // loop_body
            %v1134 = vld [vmem:[%s1132] sm:$0xff]
            %1135 = vst [vmem:[%s1133] sm:$0xff] %v1134
            %v1136 = vld [vmem:[%s1132 + $0x8] sm:$0xff]
            %1137 = vst [vmem:[%s1133 + $0x8] sm:$0xff] %v1136
            %v1138 = vld [vmem:[%s1132 + $0x10] sm:$0xff]
            %1139 = vst [vmem:[%s1133 + $0x10] sm:$0xff] %v1138
            %v1140 = vld [vmem:[%s1132 + $0x18] sm:$0xff]
            %1141 = vst [vmem:[%s1133 + $0x18] sm:$0xff] %v1140
            %v1142 = vld [vmem:[%s1132 + $0x20] sm:$0xff]
            %1143 = vst [vmem:[%s1133 + $0x20] sm:$0xff] %v1142
            %v1144 = vld [vmem:[%s1132 + $0x28] sm:$0xff]
            %1145 = vst [vmem:[%s1133 + $0x28] sm:$0xff] %v1144
            %v1146 = vld [vmem:[%s1132 + $0x30] sm:$0xff]
            %1147 = vst [vmem:[%s1133 + $0x30] sm:$0xff] %v1146
            %v1148 = vld [vmem:[%s1132 + $0x38] sm:$0xff]
            %1149 = vst [vmem:[%s1133 + $0x38] sm:$0xff] %v1148
            %v1150 = vld [vmem:[%s1132 + $0x40] sm:$0xff]
            %1151 = vst [vmem:[%s1133 + $0x40] sm:$0xff] %v1150
          $region38: #{mim_head_forward.5} parent=32 // loop_footer
            %s1131 = sadd.s32 1, %s1127
          $region39: #{mim_head_forward.5} parent=32 // loop_footer_branch
            %1126 = sbr.rel target = $region35
          $region40: #{mim_head_forward.5} parent=32 // loop_exit
            _
        $region33: #{mim_head_forward.5} parent=28 // pred_fallthru
          _
        // Predicated region
        $region41: #{mim_head_forward.5} parent=28 // pred_check
          _
        $region42: #{mim_head_forward.5} parent=28 // pred_check_branch
          %1153 = sbr.rel target = $region44
        $region43: #{mim_head_forward.5} parent=28 // pred_region
          _
        $region44: #{mim_head_forward.5} parent=28 // pred_fallthru
          _
      $region29: #{mim_head_forward.5} parent=24 // pred_fallthru
        _
      %1154 = vnop
    $region25: #{mim_head_forward.5} parent=1 // pred_fallthru
      _
    // Predicated region
    $region45: #{mim_head_forward.5} parent=1 // pred_check
      _
    $region46: #{mim_head_forward.5} parent=1 // pred_check_branch
      %1156 = sbr.rel (0) target = $region48
    $region47: #{mim_head_forward.5} parent=1 // pred_region
      _
    $region48: #{mim_head_forward.5} parent=1 // pred_fallthru
      _

// kernel: mim_head_forward.4
$region0: #{mim_head_forward.4}
  #allocation0 [shape = 'u32[]', space=smem, size = 0x4, offset = 0x4, fixed_abs, tag = 'smem constant byte address 0x4 - core index']
  #allocation1 [shape = 'u32[144,128]{1,0:T(1,128)}', space=vmem, size = 0x12000, scoped, tag = 'internal scratch']
  #allocation2 [shape = 'f32[18,32]{1,0:T(8,128)}', space=vmem, size = 0x3000, scoped, tag = 'scratch operand']
  %s0 = inlined_call_operand.vmem [shape: f32[2,9,32], index: 0, kind: input, shape index: {}]
  %s1 = inlined_call_operand.vmem [shape: f32[1,9,32], index: 1, kind: input, shape index: {}]
  %s2 = inlined_call_operand.vmem [shape: f32[2,1,32], index: 2, kind: input, shape index: {}]
  %s3 = inlined_call_operand.vmem [shape: f32[2,1,32], index: 3, kind: input, shape index: {}]
  %s4 = inlined_call_operand.vmem [shape: bf16[2,32,96], index: 4, kind: input, shape index: {}]
  %s5 = inlined_call_operand.vmem [shape: f32[2,1,96], index: 5, kind: input, shape index: {}]
  %s6 = inlined_call_operand.vmem [shape: bf16[2,32,32], index: 6, kind: input, shape index: {}]
  %s7 = inlined_call_operand.vmem [shape: f32[2,1,32], index: 7, kind: input, shape index: {}]
  %s8 = inlined_call_operand.vmem [shape: f32[2,1,32], index: 8, kind: input, shape index: {}]
  %s9 = inlined_call_operand.vmem [shape: f32[2,1,32], index: 9, kind: input, shape index: {}]
  %s10 = inlined_call_operand.vmem [shape: bf16[2,32,128], index: 10, kind: input, shape index: {}]
  %s11 = inlined_call_operand.vmem [shape: f32[2,1,128], index: 11, kind: input, shape index: {}]
  %s12 = inlined_call_operand.vmem [shape: bf16[2,128,32], index: 12, kind: input, shape index: {}]
  %s13 = inlined_call_operand.vmem [shape: f32[2,1,32], index: 13, kind: input, shape index: {}]
  %s14 = inlined_call_operand.vmem [shape: f32[2,9,32], index: 14, kind: output, shape index: {}]
  %s15 = sld [smem:[#allocation0]]
  $region97: #{mim_head_forward.4} parent=0
    _
  %s17 = ssub.s32 1, %s15
  %s18 = scalar_select 0, %s17, %s15
  loop: start=0, step=1, limit=4
  $region2: #{mim_head_forward.4} parent=0 // loop_pre_header
    _
  $region3: #{mim_head_forward.4} parent=0 // loop_header
    %s20 = sphi 0, %s24
    %p21 = scmp.ge.s32.totalorder %s20, 4
    %s27 = sphi 0, %s39
    %s28 = sphi 0, %s35
    %s29 = sphi 0, %s27
    %s30 = sphi 0, %s28
    %s31 = sphi 0, %s29
    %s32 = sphi 0, %s30
    %s42 = sphi 0, %s44
    %s45 = sphi 0, %s42
    %s46 = sphi 0, %s45
    %s62 = sphi 0, %s46
    %s66 = sphi 0, %s66
    %s68 = sphi 0, %s66
    %s69 = sphi 0, %s68
    %s83 = sphi 0, %s69
    %s89 = sphi 0, %s91
    %s92 = sphi 0, %s89
    %s93 = sphi 0, %s92
    %s109 = sphi 0, %s93
    %s115 = sphi 0, %s117
    %s118 = sphi 0, %s115
    %s119 = sphi 0, %s118
    %s135 = sphi 0, %s119
    %s141 = sphi 0, %s143
    %s144 = sphi 0, %s141
    %s145 = sphi 0, %s144
    %s161 = sphi 0, %s145
    %s167 = sphi 0, %s169
    %s170 = sphi 0, %s167
    %s171 = sphi 0, %s170
    %s187 = sphi 0, %s171
    %s193 = sphi 0, %s195
    %s196 = sphi 0, %s193
    %s197 = sphi 0, %s196
    %s213 = sphi 0, %s197
    %s219 = sphi 0, %s221
    %s222 = sphi 0, %s219
    %s223 = sphi 0, %s222
    %s239 = sphi 0, %s223
    %s245 = sphi 0, %s247
    %s248 = sphi 0, %s245
    %s249 = sphi 0, %s248
    %s265 = sphi 0, %s249
    %s271 = sphi 0, %s273
    %s274 = sphi 0, %s271
    %s275 = sphi 0, %s274
    %s291 = sphi 0, %s275
    %s297 = sphi 0, %s299
    %s300 = sphi 0, %s297
    %s301 = sphi 0, %s300
    %s317 = sphi 0, %s301
    %s323 = sphi 0, %s325
    %s326 = sphi 0, %s323
    %s327 = sphi 0, %s326
    %s343 = sphi 0, %s327
    %s349 = sphi 0, %s351
    %s352 = sphi 0, %s349
    %s353 = sphi 0, %s352
    %s369 = sphi 0, %s353
    %s375 = sphi 0, %s377
    %s378 = sphi 0, %s375
    %s379 = sphi 0, %s378
    %s395 = sphi 0, %s379
    %s401 = sphi 0, %s403
    %s404 = sphi 0, %s401
    %s405 = sphi 0, %s404
    %s421 = sphi 0, %s405
  $region4: #{mim_head_forward.4} parent=0 // loop_header_branch
    %23 = sbr.rel (%p21) target = $region8
  $region5: #{mim_head_forward.4} parent=0 // loop_body
    %s25 = ssub.s32 %s20, 1
    %s26 = ssub.s32 %s20, 2
    %s33 = sadd.s32 1, %s28
    %p34 = scmp.ge.s32.totalorder %s33, 2
    %s35 = scalar_select %p34, 0, %s33
    %s36 = sadd.s32 1, %s27
    %s37 = scalar_select %p34, %s36, %s27
    %p38 = scmp.ge.s32.totalorder %s37, 1
    %s39 = scalar_select %p38, 0, %s37
    %s40 = ssub.s32 %s27, %s39
    %p41 = scmp.eq.s32.totalorder %s40, 0
    %s43 = sadd.s32 %s42, 1
    %s44 = scalar_select %p41, %s42, %s43
    %p47 = pneg %p41
    %p48 = scmp.eq.s32.totalorder %s20, 1
    %p49 = por %p47, %p48
    %p50 = scmp.ne.s32.totalorder %s42, %s45
    %p51 = scmp.eq.s32.totalorder %s20, 0
    %p52 = por %p50, %p51
    %p53 = scmp.ne.s32.totalorder %s42, %s45
    %p54 = scmp.eq.s32.totalorder %s25, 1
    %p55 = por %p53, %p54
    %p56 = scmp.ne.s32.totalorder %s45, %s46
    %p57 = scmp.eq.s32.totalorder %s25, 0
    %p58 = por %p56, %p57
    %p59 = scmp.ne.s32.totalorder %s45, %s46
    %p60 = scmp.eq.s32.totalorder %s26, 1
    %p61 = por %p59, %p60
    %p63 = scmp.ne.s32.totalorder %s46, %s62
    %p64 = scmp.eq.s32.totalorder %s26, 0
    %p65 = por %p63, %p64
    %s67 = sadd.s32 %s66, 1
    %p70 = scmp.eq.s32.totalorder %s20, 1
    %p71 = scmp.ne.s32.totalorder %s66, %s68
    %p72 = scmp.eq.s32.totalorder %s20, 0
    %p73 = por %p71, %p72
    %p74 = scmp.ne.s32.totalorder %s66, %s68
    %p75 = scmp.eq.s32.totalorder %s25, 1
    %p76 = por %p74, %p75
    %p77 = scmp.ne.s32.totalorder %s68, %s69
    %p78 = scmp.eq.s32.totalorder %s25, 0
    %p79 = por %p77, %p78
    %p80 = scmp.ne.s32.totalorder %s68, %s69
    %p81 = scmp.eq.s32.totalorder %s26, 1
    %p82 = por %p80, %p81
    %p84 = scmp.ne.s32.totalorder %s69, %s83
    %p85 = scmp.eq.s32.totalorder %s26, 0
    %p86 = por %p84, %p85
    %s87 = ssub.s32 %s28, %s35
    %p88 = scmp.eq.s32.totalorder %s87, 0
    %s90 = sadd.s32 %s89, 1
    %s91 = scalar_select %p88, %s89, %s90
    %p94 = pneg %p88
    %p95 = scmp.eq.s32.totalorder %s20, 1
    %p96 = por %p94, %p95
    %p97 = scmp.ne.s32.totalorder %s89, %s92
    %p98 = scmp.eq.s32.totalorder %s20, 0
    %p99 = por %p97, %p98
    %p100 = scmp.ne.s32.totalorder %s89, %s92
    %p101 = scmp.eq.s32.totalorder %s25, 1
    %p102 = por %p100, %p101
    %p103 = scmp.ne.s32.totalorder %s92, %s93
    %p104 = scmp.eq.s32.totalorder %s25, 0
    %p105 = por %p103, %p104
    %p106 = scmp.ne.s32.totalorder %s92, %s93
    %p107 = scmp.eq.s32.totalorder %s26, 1
    %p108 = por %p106, %p107
    %p110 = scmp.ne.s32.totalorder %s93, %s109
    %p111 = scmp.eq.s32.totalorder %s26, 0
    %p112 = por %p110, %p111
    %s113 = ssub.s32 %s28, %s35
    %p114 = scmp.eq.s32.totalorder %s113, 0
    %s116 = sadd.s32 %s115, 1
    %s117 = scalar_select %p114, %s115, %s116
    %p120 = pneg %p114
    %p121 = scmp.eq.s32.totalorder %s20, 1
    %p122 = por %p120, %p121
    %p123 = scmp.ne.s32.totalorder %s115, %s118
    %p124 = scmp.eq.s32.totalorder %s20, 0
    %p125 = por %p123, %p124
    %p126 = scmp.ne.s32.totalorder %s115, %s118
    %p127 = scmp.eq.s32.totalorder %s25, 1
    %p128 = por %p126, %p127
    %p129 = scmp.ne.s32.totalorder %s118, %s119
    %p130 = scmp.eq.s32.totalorder %s25, 0
    %p131 = por %p129, %p130
    %p132 = scmp.ne.s32.totalorder %s118, %s119
    %p133 = scmp.eq.s32.totalorder %s26, 1
    %p134 = por %p132, %p133
    %p136 = scmp.ne.s32.totalorder %s119, %s135
    %p137 = scmp.eq.s32.totalorder %s26, 0
    %p138 = por %p136, %p137
    %s139 = ssub.s32 %s28, %s35
    %p140 = scmp.eq.s32.totalorder %s139, 0
    %s142 = sadd.s32 %s141, 1
    %s143 = scalar_select %p140, %s141, %s142
    %p146 = pneg %p140
    %p147 = scmp.eq.s32.totalorder %s20, 1
    %p148 = por %p146, %p147
    %p149 = scmp.ne.s32.totalorder %s141, %s144
    %p150 = scmp.eq.s32.totalorder %s20, 0
    %p151 = por %p149, %p150
    %p152 = scmp.ne.s32.totalorder %s141, %s144
    %p153 = scmp.eq.s32.totalorder %s25, 1
    %p154 = por %p152, %p153
    %p155 = scmp.ne.s32.totalorder %s144, %s145
    %p156 = scmp.eq.s32.totalorder %s25, 0
    %p157 = por %p155, %p156
    %p158 = scmp.ne.s32.totalorder %s144, %s145
    %p159 = scmp.eq.s32.totalorder %s26, 1
    %p160 = por %p158, %p159
    %p162 = scmp.ne.s32.totalorder %s145, %s161
    %p163 = scmp.eq.s32.totalorder %s26, 0
    %p164 = por %p162, %p163
    %s165 = ssub.s32 %s28, %s35
    %p166 = scmp.eq.s32.totalorder %s165, 0
    %s168 = sadd.s32 %s167, 1
    %s169 = scalar_select %p166, %s167, %s168
    %p172 = pneg %p166
    %p173 = scmp.eq.s32.totalorder %s20, 1
    %p174 = por %p172, %p173
    %p175 = scmp.ne.s32.totalorder %s167, %s170
    %p176 = scmp.eq.s32.totalorder %s20, 0
    %p177 = por %p175, %p176
    %p178 = scmp.ne.s32.totalorder %s167, %s170
    %p179 = scmp.eq.s32.totalorder %s25, 1
    %p180 = por %p178, %p179
    %p181 = scmp.ne.s32.totalorder %s170, %s171
    %p182 = scmp.eq.s32.totalorder %s25, 0
    %p183 = por %p181, %p182
    %p184 = scmp.ne.s32.totalorder %s170, %s171
    %p185 = scmp.eq.s32.totalorder %s26, 1
    %p186 = por %p184, %p185
    %p188 = scmp.ne.s32.totalorder %s171, %s187
    %p189 = scmp.eq.s32.totalorder %s26, 0
    %p190 = por %p188, %p189
    %s191 = ssub.s32 %s28, %s35
    %p192 = scmp.eq.s32.totalorder %s191, 0
    %s194 = sadd.s32 %s193, 1
    %s195 = scalar_select %p192, %s193, %s194
    %p198 = pneg %p192
    %p199 = scmp.eq.s32.totalorder %s20, 1
    %p200 = por %p198, %p199
    %p201 = scmp.ne.s32.totalorder %s193, %s196
    %p202 = scmp.eq.s32.totalorder %s20, 0
    %p203 = por %p201, %p202
    %p204 = scmp.ne.s32.totalorder %s193, %s196
    %p205 = scmp.eq.s32.totalorder %s25, 1
    %p206 = por %p204, %p205
    %p207 = scmp.ne.s32.totalorder %s196, %s197
    %p208 = scmp.eq.s32.totalorder %s25, 0
    %p209 = por %p207, %p208
    %p210 = scmp.ne.s32.totalorder %s196, %s197
    %p211 = scmp.eq.s32.totalorder %s26, 1
    %p212 = por %p210, %p211
    %p214 = scmp.ne.s32.totalorder %s197, %s213
    %p215 = scmp.eq.s32.totalorder %s26, 0
    %p216 = por %p214, %p215
    %s217 = ssub.s32 %s28, %s35
    %p218 = scmp.eq.s32.totalorder %s217, 0
    %s220 = sadd.s32 %s219, 1
    %s221 = scalar_select %p218, %s219, %s220
    %p224 = pneg %p218
    %p225 = scmp.eq.s32.totalorder %s20, 1
    %p226 = por %p224, %p225
    %p227 = scmp.ne.s32.totalorder %s219, %s222
    %p228 = scmp.eq.s32.totalorder %s20, 0
    %p229 = por %p227, %p228
    %p230 = scmp.ne.s32.totalorder %s219, %s222
    %p231 = scmp.eq.s32.totalorder %s25, 1
    %p232 = por %p230, %p231
    %p233 = scmp.ne.s32.totalorder %s222, %s223
    %p234 = scmp.eq.s32.totalorder %s25, 0
    %p235 = por %p233, %p234
    %p236 = scmp.ne.s32.totalorder %s222, %s223
    %p237 = scmp.eq.s32.totalorder %s26, 1
    %p238 = por %p236, %p237
    %p240 = scmp.ne.s32.totalorder %s223, %s239
    %p241 = scmp.eq.s32.totalorder %s26, 0
    %p242 = por %p240, %p241
    %s243 = ssub.s32 %s28, %s35
    %p244 = scmp.eq.s32.totalorder %s243, 0
    %s246 = sadd.s32 %s245, 1
    %s247 = scalar_select %p244, %s245, %s246
    %p250 = pneg %p244
    %p251 = scmp.eq.s32.totalorder %s20, 1
    %p252 = por %p250, %p251
    %p253 = scmp.ne.s32.totalorder %s245, %s248
    %p254 = scmp.eq.s32.totalorder %s20, 0
    %p255 = por %p253, %p254
    %p256 = scmp.ne.s32.totalorder %s245, %s248
    %p257 = scmp.eq.s32.totalorder %s25, 1
    %p258 = por %p256, %p257
    %p259 = scmp.ne.s32.totalorder %s248, %s249
    %p260 = scmp.eq.s32.totalorder %s25, 0
    %p261 = por %p259, %p260
    %p262 = scmp.ne.s32.totalorder %s248, %s249
    %p263 = scmp.eq.s32.totalorder %s26, 1
    %p264 = por %p262, %p263
    %p266 = scmp.ne.s32.totalorder %s249, %s265
    %p267 = scmp.eq.s32.totalorder %s26, 0
    %p268 = por %p266, %p267
    %s269 = ssub.s32 %s28, %s35
    %p270 = scmp.eq.s32.totalorder %s269, 0
    %s272 = sadd.s32 %s271, 1
    %s273 = scalar_select %p270, %s271, %s272
    %p276 = pneg %p270
    %p277 = scmp.eq.s32.totalorder %s20, 1
    %p278 = por %p276, %p277
    %p279 = scmp.ne.s32.totalorder %s271, %s274
    %p280 = scmp.eq.s32.totalorder %s20, 0
    %p281 = por %p279, %p280
    %p282 = scmp.ne.s32.totalorder %s271, %s274
    %p283 = scmp.eq.s32.totalorder %s25, 1
    %p284 = por %p282, %p283
    %p285 = scmp.ne.s32.totalorder %s274, %s275
    %p286 = scmp.eq.s32.totalorder %s25, 0
    %p287 = por %p285, %p286
    %p288 = scmp.ne.s32.totalorder %s274, %s275
    %p289 = scmp.eq.s32.totalorder %s26, 1
    %p290 = por %p288, %p289
    %p292 = scmp.ne.s32.totalorder %s275, %s291
    %p293 = scmp.eq.s32.totalorder %s26, 0
    %p294 = por %p292, %p293
    %s295 = ssub.s32 %s28, %s35
    %p296 = scmp.eq.s32.totalorder %s295, 0
    %s298 = sadd.s32 %s297, 1
    %s299 = scalar_select %p296, %s297, %s298
    %p302 = pneg %p296
    %p303 = scmp.eq.s32.totalorder %s20, 1
    %p304 = por %p302, %p303
    %p305 = scmp.ne.s32.totalorder %s297, %s300
    %p306 = scmp.eq.s32.totalorder %s20, 0
    %p307 = por %p305, %p306
    %p308 = scmp.ne.s32.totalorder %s297, %s300
    %p309 = scmp.eq.s32.totalorder %s25, 1
    %p310 = por %p308, %p309
    %p311 = scmp.ne.s32.totalorder %s300, %s301
    %p312 = scmp.eq.s32.totalorder %s25, 0
    %p313 = por %p311, %p312
    %p314 = scmp.ne.s32.totalorder %s300, %s301
    %p315 = scmp.eq.s32.totalorder %s26, 1
    %p316 = por %p314, %p315
    %p318 = scmp.ne.s32.totalorder %s301, %s317
    %p319 = scmp.eq.s32.totalorder %s26, 0
    %p320 = por %p318, %p319
    %s321 = ssub.s32 %s28, %s35
    %p322 = scmp.eq.s32.totalorder %s321, 0
    %s324 = sadd.s32 %s323, 1
    %s325 = scalar_select %p322, %s323, %s324
    %p328 = pneg %p322
    %p329 = scmp.eq.s32.totalorder %s20, 1
    %p330 = por %p328, %p329
    %p331 = scmp.ne.s32.totalorder %s323, %s326
    %p332 = scmp.eq.s32.totalorder %s20, 0
    %p333 = por %p331, %p332
    %p334 = scmp.ne.s32.totalorder %s323, %s326
    %p335 = scmp.eq.s32.totalorder %s25, 1
    %p336 = por %p334, %p335
    %p337 = scmp.ne.s32.totalorder %s326, %s327
    %p338 = scmp.eq.s32.totalorder %s25, 0
    %p339 = por %p337, %p338
    %p340 = scmp.ne.s32.totalorder %s326, %s327
    %p341 = scmp.eq.s32.totalorder %s26, 1
    %p342 = por %p340, %p341
    %p344 = scmp.ne.s32.totalorder %s327, %s343
    %p345 = scmp.eq.s32.totalorder %s26, 0
    %p346 = por %p344, %p345
    %s347 = ssub.s32 %s28, %s35
    %p348 = scmp.eq.s32.totalorder %s347, 0
    %s350 = sadd.s32 %s349, 1
    %s351 = scalar_select %p348, %s349, %s350
    %p354 = pneg %p348
    %p355 = scmp.eq.s32.totalorder %s20, 1
    %p356 = por %p354, %p355
    %p357 = scmp.ne.s32.totalorder %s349, %s352
    %p358 = scmp.eq.s32.totalorder %s20, 0
    %p359 = por %p357, %p358
    %p360 = scmp.ne.s32.totalorder %s349, %s352
    %p361 = scmp.eq.s32.totalorder %s25, 1
    %p362 = por %p360, %p361
    %p363 = scmp.ne.s32.totalorder %s352, %s353
    %p364 = scmp.eq.s32.totalorder %s25, 0
    %p365 = por %p363, %p364
    %p366 = scmp.ne.s32.totalorder %s352, %s353
    %p367 = scmp.eq.s32.totalorder %s26, 1
    %p368 = por %p366, %p367
    %p370 = scmp.ne.s32.totalorder %s353, %s369
    %p371 = scmp.eq.s32.totalorder %s26, 0
    %p372 = por %p370, %p371
    %s373 = ssub.s32 %s28, %s35
    %p374 = scmp.eq.s32.totalorder %s373, 0
    %s376 = sadd.s32 %s375, 1
    %s377 = scalar_select %p374, %s375, %s376
    %p380 = pneg %p374
    %p381 = scmp.eq.s32.totalorder %s20, 1
    %p382 = por %p380, %p381
    %p383 = scmp.ne.s32.totalorder %s375, %s378
    %p384 = scmp.eq.s32.totalorder %s20, 0
    %p385 = por %p383, %p384
    %p386 = scmp.ne.s32.totalorder %s375, %s378
    %p387 = scmp.eq.s32.totalorder %s25, 1
    %p388 = por %p386, %p387
    %p389 = scmp.ne.s32.totalorder %s378, %s379
    %p390 = scmp.eq.s32.totalorder %s25, 0
    %p391 = por %p389, %p390
    %p392 = scmp.ne.s32.totalorder %s378, %s379
    %p393 = scmp.eq.s32.totalorder %s26, 1
    %p394 = por %p392, %p393
    %p396 = scmp.ne.s32.totalorder %s379, %s395
    %p397 = scmp.eq.s32.totalorder %s26, 0
    %p398 = por %p396, %p397
    %s399 = ssub.s32 %s27, %s39
    %p400 = scmp.eq.s32.totalorder %s399, 0
    %s402 = sadd.s32 %s401, 1
    %s403 = scalar_select %p400, %s401, %s402
    %p406 = pneg %p400
    %p407 = scmp.eq.s32.totalorder %s20, 1
    %p408 = por %p406, %p407
    %p409 = scmp.ne.s32.totalorder %s401, %s404
    %p410 = scmp.eq.s32.totalorder %s20, 0
    %p411 = por %p409, %p410
    %p412 = scmp.ne.s32.totalorder %s401, %s404
    %p413 = scmp.eq.s32.totalorder %s25, 1
    %p414 = por %p412, %p413
    %p415 = scmp.ne.s32.totalorder %s404, %s405
    %p416 = scmp.eq.s32.totalorder %s25, 0
    %p417 = por %p415, %p416
    %p418 = scmp.ne.s32.totalorder %s404, %s405
    %p419 = scmp.eq.s32.totalorder %s26, 1
    %p420 = por %p418, %p419
    %p422 = scmp.ne.s32.totalorder %s405, %s421
    %p423 = scmp.eq.s32.totalorder %s26, 0
    %p424 = por %p422, %p423
    %p425 = scmp.le.s32.totalorder 1, %s20
    %p426 = scmp.lt.s32.totalorder %s20, 3
    %p427 = pnand %p425, %p426
    %p428 = pneg %p427
    // Predicated region
    $region9: #{mim_head_forward.4} parent=5 // pred_check
      _
    $region10: #{mim_head_forward.4} parent=5 // pred_check_branch
      %430 = sbr.rel (%p427) target = $region12
    $region11: #{mim_head_forward.4} parent=5 // pred_region
      %s431 = ssub.s32 %s20, 1
      // Predicated region
      $region13: #{mim_head_forward.4} parent=11 // pred_check
        %p432 = pneg %p58
      $region14: #{mim_head_forward.4} parent=11 // pred_check_branch
        %434 = sbr.rel (%p432) target = $region16
      $region15: #{mim_head_forward.4} parent=11 // pred_region
        %s435 = smul.u32 2, %s29
        %p436 = scmp.lt.s32.totalorder %s435, 1
        %s437 = scalar_select %p436, %s435, 1
        %s438 = smul.addr %s437, 2
        %s439 = smul.addr %s438, 8
        %s440 = scalar_lea.vmem %s0, %s439
        %s441 = smul.u32 2, %s29
      $region16: #{mim_head_forward.4} parent=11 // pred_fallthru
        _
      // Predicated region
      $region17: #{mim_head_forward.4} parent=11 // pred_check
        %p442 = pneg %p79
      $region18: #{mim_head_forward.4} parent=11 // pred_check_branch
        %444 = sbr.rel (%p442) target = $region20
      $region19: #{mim_head_forward.4} parent=11 // pred_region
        _
      $region20: #{mim_head_forward.4} parent=11 // pred_fallthru
        _
    $region12: #{mim_head_forward.4} parent=5 // pred_fallthru
      _
    %p445 = scmp.lt.s32.totalorder %s20, 2
    // Predicated region
    $region21: #{mim_head_forward.4} parent=5 // pred_check
      %p446 = pneg %p445
    $region22: #{mim_head_forward.4} parent=5 // pred_check_branch
      %448 = sbr.rel (%p446) target = $region24
    $region23: #{mim_head_forward.4} parent=5 // pred_region
      // Predicated region
      $region25: #{mim_head_forward.4} parent=23 // pred_check
        %p449 = pneg %p99
      $region26: #{mim_head_forward.4} parent=23 // pred_check_branch
        %451 = sbr.rel (%p449) target = $region28
      $region27: #{mim_head_forward.4} parent=23 // pred_region
        %p452 = scmp.lt.s32.totalorder %s28, 1
        %s453 = scalar_select %p452, %s28, 1
        %s454 = scalar_lea.vmem %s2, %s453
      $region28: #{mim_head_forward.4} parent=23 // pred_fallthru
        _
      // Predicated region
      $region29: #{mim_head_forward.4} parent=23 // pred_check
        %p455 = pneg %p125
      $region30: #{mim_head_forward.4} parent=23 // pred_check_branch
        %457 = sbr.rel (%p455) target = $region32
      $region31: #{mim_head_forward.4} parent=23 // pred_region
        %p458 = scmp.lt.s32.totalorder %s28, 1
        %s459 = scalar_select %p458, %s28, 1
        %s460 = scalar_lea.vmem %s3, %s459
      $region32: #{mim_head_forward.4} parent=23 // pred_fallthru
        _
      // Predicated region
      $region33: #{mim_head_forward.4} parent=23 // pred_check
        %p461 = pneg %p151
      $region34: #{mim_head_forward.4} parent=23 // pred_check_branch
        %463 = sbr.rel (%p461) target = $region36
      $region35: #{mim_head_forward.4} parent=23 // pred_region
        %p464 = scmp.lt.s32.totalorder %s28, 1
        %s465 = scalar_select %p464, %s28, 1
        %s466 = smul.addr %s465, 4
        %s467 = smul.addr %s466, 4
        %s468 = scalar_lea.vmem %s4, %s467
      $region36: #{mim_head_forward.4} parent=23 // pred_fallthru
        _
      // Predicated region
      $region37: #{mim_head_forward.4} parent=23 // pred_check
        %p469 = pneg %p177
      $region38: #{mim_head_forward.4} parent=23 // pred_check_branch
        %471 = sbr.rel (%p469) target = $region40
      $region39: #{mim_head_forward.4} parent=23 // pred_region
        %p472 = scmp.lt.s32.totalorder %s28, 1
        %s473 = scalar_select %p472, %s28, 1
        %s474 = scalar_lea.vmem %s5, %s473
      $region40: #{mim_head_forward.4} parent=23 // pred_fallthru
        _
      // Predicated region
      $region41: #{mim_head_forward.4} parent=23 // pred_check
        %p475 = pneg %p203
      $region42: #{mim_head_forward.4} parent=23 // pred_check_branch
        %477 = sbr.rel (%p475) target = $region44
      $region43: #{mim_head_forward.4} parent=23 // pred_region
        %p478 = scmp.lt.s32.totalorder %s28, 1
        %s479 = scalar_select %p478, %s28, 1
        %s480 = smul.addr %s479, 4
        %s481 = smul.addr %s480, 4
        %s482 = scalar_lea.vmem %s6, %s481
      $region44: #{mim_head_forward.4} parent=23 // pred_fallthru
        _
      // Predicated region
      $region45: #{mim_head_forward.4} parent=23 // pred_check
        %p483 = pneg %p229
      $region46: #{mim_head_forward.4} parent=23 // pred_check_branch
        %485 = sbr.rel (%p483) target = $region48
      $region47: #{mim_head_forward.4} parent=23 // pred_region
        %p486 = scmp.lt.s32.totalorder %s28, 1
        %s487 = scalar_select %p486, %s28, 1
        %s488 = scalar_lea.vmem %s7, %s487
      $region48: #{mim_head_forward.4} parent=23 // pred_fallthru
        _
      // Predicated region
      $region49: #{mim_head_forward.4} parent=23 // pred_check
        %p489 = pneg %p255
      $region50: #{mim_head_forward.4} parent=23 // pred_check_branch
        %491 = sbr.rel (%p489) target = $region52
      $region51: #{mim_head_forward.4} parent=23 // pred_region
        %p492 = scmp.lt.s32.totalorder %s28, 1
        %s493 = scalar_select %p492, %s28, 1
        %s494 = scalar_lea.vmem %s8, %s493
      $region52: #{mim_head_forward.4} parent=23 // pred_fallthru
        _
      // Predicated region
      $region53: #{mim_head_forward.4} parent=23 // pred_check
        %p495 = pneg %p281
      $region54: #{mim_head_forward.4} parent=23 // pred_check_branch
        %497 = sbr.rel (%p495) target = $region56
      $region55: #{mim_head_forward.4} parent=23 // pred_region
        %p498 = scmp.lt.s32.totalorder %s28, 1
        %s499 = scalar_select %p498, %s28, 1
        %s500 = scalar_lea.vmem %s9, %s499
      $region56: #{mim_head_forward.4} parent=23 // pred_fallthru
        _
      // Predicated region
      $region57: #{mim_head_forward.4} parent=23 // pred_check
        %p501 = pneg %p307
      $region58: #{mim_head_forward.4} parent=23 // pred_check_branch
        %503 = sbr.rel (%p501) target = $region60
      $region59: #{mim_head_forward.4} parent=23 // pred_region
        %p504 = scmp.lt.s32.totalorder %s28, 1
        %s505 = scalar_select %p504, %s28, 1
        %s506 = smul.addr %s505, 4
        %s507 = smul.addr %s506, 4
        %s508 = scalar_lea.vmem %s10, %s507
      $region60: #{mim_head_forward.4} parent=23 // pred_fallthru
        _
      // Predicated region
      $region61: #{mim_head_forward.4} parent=23 // pred_check
        %p509 = pneg %p333
      $region62: #{mim_head_forward.4} parent=23 // pred_check_branch
        %511 = sbr.rel (%p509) target = $region64
      $region63: #{mim_head_forward.4} parent=23 // pred_region
        %p512 = scmp.lt.s32.totalorder %s28, 1
        %s513 = scalar_select %p512, %s28, 1
        %s514 = scalar_lea.vmem %s11, %s513
      $region64: #{mim_head_forward.4} parent=23 // pred_fallthru
        _
      // Predicated region
      $region65: #{mim_head_forward.4} parent=23 // pred_check
        %p515 = pneg %p359
      $region66: #{mim_head_forward.4} parent=23 // pred_check_branch
        %517 = sbr.rel (%p515) target = $region68
      $region67: #{mim_head_forward.4} parent=23 // pred_region
        %p518 = scmp.lt.s32.totalorder %s28, 1
        %s519 = scalar_select %p518, %s28, 1
        %s520 = smul.addr %s519, 16
        %s521 = smul.addr %s520, 4
        %s522 = scalar_lea.vmem %s12, %s521
      $region68: #{mim_head_forward.4} parent=23 // pred_fallthru
        _
      // Predicated region
      $region69: #{mim_head_forward.4} parent=23 // pred_check
        %p523 = pneg %p385
      $region70: #{mim_head_forward.4} parent=23 // pred_check_branch
        %525 = sbr.rel (%p523) target = $region72
      $region71: #{mim_head_forward.4} parent=23 // pred_region
        %p526 = scmp.lt.s32.totalorder %s28, 1
        %s527 = scalar_select %p526, %s28, 1
        %s528 = scalar_lea.vmem %s13, %s527
      $region72: #{mim_head_forward.4} parent=23 // pred_fallthru
        _
    $region24: #{mim_head_forward.4} parent=5 // pred_fallthru
      _
    %p529 = scmp.le.s32.totalorder 1, %s20
    %p530 = scmp.lt.s32.totalorder %s20, 3
    %p531 = pnand %p529, %p530
    %p532 = pneg %p531
    // Predicated region
    $region73: #{mim_head_forward.4} parent=5 // pred_check
      _
    $region74: #{mim_head_forward.4} parent=5 // pred_check_branch
      %534 = sbr.rel (%p531) target = $region76
    $region75: #{mim_head_forward.4} parent=5 // pred_region
      %s535 = ssub.s32 %s20, 1
      %s536 = smul.u32 2, %s29
      %p537 = scmp.lt.s32.totalorder %s536, 1
      %s538 = scalar_select %p537, %s536, 1
      %s539 = smul.addr %s538, 2
      %s540 = smul.addr %s539, 8
      %s541 = scalar_lea.vmem %s0, %s540
      %p542 = pneg %p58
      %p543 = pneg %p55
      %p544 = pneg %p79
      %p545 = pneg %p76
      %p546 = scmp.lt.s32.totalorder %s30, 1
      %s547 = scalar_select %p546, %s30, 1
      %s548 = scalar_lea.vmem %s2, %s547
      %p549 = pneg %p105
      %p550 = pneg %p102
      %p551 = scmp.lt.s32.totalorder %s30, 1
      %s552 = scalar_select %p551, %s30, 1
      %s553 = scalar_lea.vmem %s3, %s552
      %p554 = pneg %p131
      %p555 = pneg %p128
      %p556 = scmp.lt.s32.totalorder %s30, 1
      %s557 = scalar_select %p556, %s30, 1
      %s558 = smul.addr %s557, 4
      %s559 = smul.addr %s558, 4
      %s560 = scalar_lea.vmem %s4, %s559
      %p561 = pneg %p157
      %p562 = pneg %p154
      %p563 = scmp.lt.s32.totalorder %s30, 1
      %s564 = scalar_select %p563, %s30, 1
      %s565 = scalar_lea.vmem %s5, %s564
      %p566 = pneg %p183
      %p567 = pneg %p180
      %p568 = scmp.lt.s32.totalorder %s30, 1
      %s569 = scalar_select %p568, %s30, 1
      %s570 = smul.addr %s569, 4
      %s571 = smul.addr %s570, 4
      %s572 = scalar_lea.vmem %s6, %s571
      %p573 = pneg %p209
      %p574 = pneg %p206
      %p575 = scmp.lt.s32.totalorder %s30, 1
      %s576 = scalar_select %p575, %s30, 1
      %s577 = scalar_lea.vmem %s7, %s576
      %p578 = pneg %p235
      %p579 = pneg %p232
      %p580 = scmp.lt.s32.totalorder %s30, 1
      %s581 = scalar_select %p580, %s30, 1
      %s582 = scalar_lea.vmem %s8, %s581
      %p583 = pneg %p261
      %p584 = pneg %p258
      %p585 = scmp.lt.s32.totalorder %s30, 1
      %s586 = scalar_select %p585, %s30, 1
      %s587 = scalar_lea.vmem %s9, %s586
      %p588 = pneg %p287
      %p589 = pneg %p284
      %p590 = scmp.lt.s32.totalorder %s30, 1
      %s591 = scalar_select %p590, %s30, 1
      %s592 = smul.addr %s591, 4
      %s593 = smul.addr %s592, 4
      %s594 = scalar_lea.vmem %s10, %s593
      %p595 = pneg %p313
      %p596 = pneg %p310
      %p597 = scmp.lt.s32.totalorder %s30, 1
      %s598 = scalar_select %p597, %s30, 1
      %s599 = scalar_lea.vmem %s11, %s598
      %p600 = pneg %p339
      %p601 = pneg %p336
      %p602 = scmp.lt.s32.totalorder %s30, 1
      %s603 = scalar_select %p602, %s30, 1
      %s604 = smul.addr %s603, 16
      %s605 = smul.addr %s604, 4
      %s606 = scalar_lea.vmem %s12, %s605
      %p607 = pneg %p365
      %p608 = pneg %p362
      %p609 = scmp.lt.s32.totalorder %s30, 1
      %s610 = scalar_select %p609, %s30, 1
      %s611 = scalar_lea.vmem %s13, %s610
      %p612 = pneg %p391
      %p613 = pneg %p388
      %p614 = pneg %p417
      %p615 = pneg %p414
      %s616 = smul.u32 2, %s29
      %p617 = scmp.lt.s32.totalorder %s616, 1
      %s618 = scalar_select %p617, %s616, 1
      %s619 = smul.addr %s618, 2
      %s620 = smul.addr %s619, 8
      %s621 = scalar_lea.vmem %s14, %s620
      %s622 = smul.u32 2, %s29
      %p623 = scmp.lt.s32.totalorder %s622, 1
      %s624 = scalar_select %p623, %s622, 1
      %s625 = smul.addr %s624, 2
      %s626 = smul.addr %s625, 8
      %s627 = scalar_lea.vmem %s0, %s626
      %s628 = smul.u32 2, %s29
      %p629 = scmp.lt.s32.totalorder %s30, 1
      %s630 = scalar_select %p629, %s30, 1
      %s631 = scalar_lea.vmem %s2, %s630
      %p632 = scmp.lt.s32.totalorder %s30, 1
      %s633 = scalar_select %p632, %s30, 1
      %s634 = scalar_lea.vmem %s3, %s633
      %p635 = scmp.lt.s32.totalorder %s30, 1
      %s636 = scalar_select %p635, %s30, 1
      %s637 = smul.addr %s636, 4
      %s638 = smul.addr %s637, 4
      %s639 = scalar_lea.vmem %s4, %s638
      %p640 = scmp.lt.s32.totalorder %s30, 1
      %s641 = scalar_select %p640, %s30, 1
      %s642 = scalar_lea.vmem %s5, %s641
      %p643 = scmp.lt.s32.totalorder %s30, 1
      %s644 = scalar_select %p643, %s30, 1
      %s645 = smul.addr %s644, 4
      %s646 = smul.addr %s645, 4
      %s647 = scalar_lea.vmem %s6, %s646
      %p648 = scmp.lt.s32.totalorder %s30, 1
      %s649 = scalar_select %p648, %s30, 1
      %s650 = scalar_lea.vmem %s7, %s649
      %p651 = scmp.lt.s32.totalorder %s30, 1
      %s652 = scalar_select %p651, %s30, 1
      %s653 = scalar_lea.vmem %s8, %s652
      %p654 = scmp.lt.s32.totalorder %s30, 1
      %s655 = scalar_select %p654, %s30, 1
      %s656 = scalar_lea.vmem %s9, %s655
      %p657 = scmp.lt.s32.totalorder %s30, 1
      %s658 = scalar_select %p657, %s30, 1
      %s659 = smul.addr %s658, 4
      %s660 = smul.addr %s659, 4
      %s661 = scalar_lea.vmem %s10, %s660
      %p662 = scmp.lt.s32.totalorder %s30, 1
      %s663 = scalar_select %p662, %s30, 1
      %s664 = scalar_lea.vmem %s11, %s663
      %p665 = scmp.lt.s32.totalorder %s30, 1
      %s666 = scalar_select %p665, %s30, 1
      %s667 = smul.addr %s666, 16
      %s668 = smul.addr %s667, 4
      %s669 = scalar_lea.vmem %s12, %s668
      %p670 = scmp.lt.s32.totalorder %s30, 1
      %s671 = scalar_select %p670, %s30, 1
      %s672 = scalar_lea.vmem %s13, %s671
      %s673 = smul.u32 2, %s29
      %p674 = scmp.lt.s32.totalorder %s673, 1
      %s675 = scalar_select %p674, %s673, 1
      %s676 = smul.addr %s675, 2
      %s677 = smul.addr %s676, 8
      %s678 = scalar_lea.vmem %s14, %s677
      %s679 = smul.u32 2, %s29
      %p681 = scmp.eq.s32.totalorder %s30, 0
      // Predicated region
      $region77: #{mim_head_forward.4} parent=75 // pred_check
        %p682 = pneg %p681
      $region78: #{mim_head_forward.4} parent=75 // pred_check_branch
        %684 = sbr.rel (%p682) target = $region80
      $region79: #{mim_head_forward.4} parent=75 // pred_region
        %v685 = vld [vmem:[%s627] sm:$0xff]
        %v686 = vld [vmem:[%s627 + $0x8] sm:$0x1]
        %v687 = vld [vmem:[%s627 + $0x10] sm:$0xff]
        %v688 = vld [vmem:[%s627 + $0x18] sm:$0x1]
        %v689 = vld [vmem:[%s1] sm:$0xff]
        %v690 = vld [vmem:[%s1 + $0x8] sm:$0x1]
        %v691 = vadd.f32 %v685, %v689
        %v692 = vadd.f32 %v686, %v690
        %v693 = vadd.f32 %v687, %v689
        %v694 = vadd.f32 %v688, %v690
        %v699 = vcombine.high %v691, %v691
        %v701 = vunpack.c.l.s4 1966171168
        %v702 = vunpack.c.0.s8 %v701
        %v703 = vlaneseq
        %v704 = vshrl.u32 %v703, 7
        %v705 = vsub.s32 %v702, %v704
        %v706 = vrot.slane %v691, %v705
        %v708 = vunpack.c.l.s4 1966171168
        %v709 = vunpack.c.0.s8 %v708
        %v710 = vlaneseq
        %v711 = vshrl.u32 %v710, 7
        %v712 = vsub.s32 %v709, %v711
        %v713 = vrot.slane %v699, %v712
        %v714 = vcombine.high %v706, %v706
        %v715 = vcombine.high %v713, %v713
        %v717 = vunpack.c.l.s4 1966171168
        %v718 = vunpack.c.0.s8 %v717
        %v719 = vlaneseq
        %v720 = vshrl.u32 %v719, 7
        %v721 = vsub.s32 %v718, %v720
        %v722 = vrot.slane %v706, %v721
        %v724 = vunpack.c.l.s4 1966171168
        %v725 = vunpack.c.0.s8 %v724
        %v726 = vlaneseq
        %v727 = vshrl.u32 %v726, 7
        %v728 = vsub.s32 %v725, %v727
        %v729 = vrot.slane %v713, %v728
        %v731 = vunpack.c.l.s4 1966171168
        %v732 = vunpack.c.0.s8 %v731
        %v733 = vlaneseq
        %v734 = vshrl.u32 %v733, 7
        %v735 = vsub.s32 %v732, %v734
        %v736 = vrot.slane %v714, %v735
        %v738 = vunpack.c.l.s4 1966171168
        %v739 = vunpack.c.0.s8 %v738
        %v740 = vlaneseq
        %v741 = vshrl.u32 %v740, 7
        %v742 = vsub.s32 %v739, %v741
        %v743 = vrot.slane %v715, %v742
        %v744 = vcombine.high %v722, %v722
        %v745 = vcombine.high %v729, %v729
        %v746 = vcombine.high %v736, %v736
        %v747 = vcombine.high %v743, %v743
        %v749 = vunpack.c.l.s4 1966171168
        %v750 = vunpack.c.0.s8 %v749
        %v751 = vlaneseq
        %v752 = vshrl.u32 %v751, 7
        %v753 = vsub.s32 %v750, %v752
        %v754 = vrot.slane %v692, %v753
        %v756 = vunpack.c.l.s4 1966171168
        %v757 = vunpack.c.0.s8 %v756
        %v758 = vlaneseq
        %v759 = vshrl.u32 %v758, 7
        %v760 = vsub.s32 %v757, %v759
        %v761 = vrot.slane %v754, %v760
        %v762 = vcombine.high %v693, %v693
        %v764 = vunpack.c.l.s4 1966171168
        %v765 = vunpack.c.0.s8 %v764
        %v766 = vlaneseq
        %v767 = vshrl.u32 %v766, 7
        %v768 = vsub.s32 %v765, %v767
        %v769 = vrot.slane %v693, %v768
        %v771 = vunpack.c.l.s4 1966171168
        %v772 = vunpack.c.0.s8 %v771
        %v773 = vlaneseq
        %v774 = vshrl.u32 %v773, 7
        %v775 = vsub.s32 %v772, %v774
        %v776 = vrot.slane %v762, %v775
        %v777 = vcombine.high %v769, %v769
        %v778 = vcombine.high %v776, %v776
        %v780 = vunpack.c.l.s4 1966171168
        %v781 = vunpack.c.0.s8 %v780
        %v782 = vlaneseq
        %v783 = vshrl.u32 %v782, 7
        %v784 = vsub.s32 %v781, %v783
        %v785 = vrot.slane %v769, %v784
        %v787 = vunpack.c.l.s4 1966171168
        %v788 = vunpack.c.0.s8 %v787
        %v789 = vlaneseq
        %v790 = vshrl.u32 %v789, 7
        %v791 = vsub.s32 %v788, %v790
        %v792 = vrot.slane %v776, %v791
        %v794 = vunpack.c.l.s4 1966171168
        %v795 = vunpack.c.0.s8 %v794
        %v796 = vlaneseq
        %v797 = vshrl.u32 %v796, 7
        %v798 = vsub.s32 %v795, %v797
        %v799 = vrot.slane %v777, %v798
        %v801 = vunpack.c.l.s4 1966171168
        %v802 = vunpack.c.0.s8 %v801
        %v803 = vlaneseq
        %v804 = vshrl.u32 %v803, 7
        %v805 = vsub.s32 %v802, %v804
        %v806 = vrot.slane %v778, %v805
        %v807 = vcombine.high %v785, %v785
        %v808 = vcombine.high %v792, %v792
        %v809 = vcombine.high %v799, %v799
        %v810 = vcombine.high %v806, %v806
        %v812 = vunpack.c.l.s4 1966171168
        %v813 = vunpack.c.0.s8 %v812
        %v814 = vlaneseq
        %v815 = vshrl.u32 %v814, 7
        %v816 = vsub.s32 %v813, %v815
        %v817 = vrot.slane %v694, %v816
        %v819 = vunpack.c.l.s4 1966171168
        %v820 = vunpack.c.0.s8 %v819
        %v821 = vlaneseq
        %v822 = vshrl.u32 %v821, 7
        %v823 = vsub.s32 %v820, %v822
        %v824 = vrot.slane %v817, %v823
        %v825 = vcombine.low %v722, %v736
        %v826 = vcombine.low %v744, %v746
        %v827 = vcombine.low %v729, %v743
        %v828 = vcombine.low %v745, %v747
        %v830 = vunpack.c.l.s4 1966171168
        %v831 = vunpack.c.0.s8 %v830
        %v832 = vlaneseq
        %v833 = vshrl.u32 %v832, 7
        %v834 = vsub.s32 %v831, %v833
        %v835 = vrot.slane %v825, %v834
        %v837 = vunpack.c.l.s4 1966171168
        %v838 = vunpack.c.0.s8 %v837
        %v839 = vlaneseq
        %v840 = vshrl.u32 %v839, 7
        %v841 = vsub.s32 %v838, %v840
        %v842 = vrot.slane %v826, %v841
        %v844 = vunpack.c.l.s4 1966171168
        %v845 = vunpack.c.0.s8 %v844
        %v846 = vlaneseq
        %v847 = vshrl.u32 %v846, 7
        %v848 = vsub.s32 %v845, %v847
        %v849 = vrot.slane %v827, %v848
        %v851 = vunpack.c.l.s4 1966171168
        %v852 = vunpack.c.0.s8 %v851
        %v853 = vlaneseq
        %v854 = vshrl.u32 %v853, 7
        %v855 = vsub.s32 %v852, %v854
        %v856 = vrot.slane %v828, %v855
        %v857 = vcombine.low %v835, %v842
        %v858 = vcombine.low %v849, %v856
        %v860 = vunpack.c.l.s4 1966171168
        %v861 = vunpack.c.0.s8 %v860
        %v862 = vlaneseq
        %v863 = vshrl.u32 %v862, 7
        %v864 = vsub.s32 %v861, %v863
        %v865 = vrot.slane %v857, %v864
        %v867 = vunpack.c.l.s4 1966171168
        %v868 = vunpack.c.0.s8 %v867
        %v869 = vlaneseq
        %v870 = vshrl.u32 %v869, 7
        %v871 = vsub.s32 %v868, %v870
        %v872 = vrot.slane %v858, %v871
        %v873 = vcombine.low %v865, %v872
        %v874 = vcombine.low %v761, %v785
        %v875 = vcombine.low %v799, %v807
        %v876 = vcombine.low %v809, %v792
        %v877 = vcombine.low %v806, %v808
        %v879 = vunpack.c.l.s4 1966171168
        %v880 = vunpack.c.0.s8 %v879
        %v881 = vlaneseq
        %v882 = vshrl.u32 %v881, 7
        %v883 = vsub.s32 %v880, %v882
        %v884 = vrot.slane %v874, %v883
        %v886 = vunpack.c.l.s4 1966171168
        %v887 = vunpack.c.0.s8 %v886
        %v888 = vlaneseq
        %v889 = vshrl.u32 %v888, 7
        %v890 = vsub.s32 %v887, %v889
        %v891 = vrot.slane %v875, %v890
        %v893 = vunpack.c.l.s4 1966171168
        %v894 = vunpack.c.0.s8 %v893
        %v895 = vlaneseq
        %v896 = vshrl.u32 %v895, 7
        %v897 = vsub.s32 %v894, %v896
        %v898 = vrot.slane %v876, %v897
        %v900 = vunpack.c.l.s4 1966171168
        %v901 = vunpack.c.0.s8 %v900
        %v902 = vlaneseq
        %v903 = vshrl.u32 %v902, 7
        %v904 = vsub.s32 %v901, %v903
        %v905 = vrot.slane %v877, %v904
        %v906 = vcombine.low %v884, %v891
        %v907 = vcombine.low %v898, %v905
        %v909 = vunpack.c.l.s4 1966171168
        %v910 = vunpack.c.0.s8 %v909
        %v911 = vlaneseq
        %v912 = vshrl.u32 %v911, 7
        %v913 = vsub.s32 %v910, %v912
        %v914 = vrot.slane %v906, %v913
        %v916 = vunpack.c.l.s4 1966171168
        %v917 = vunpack.c.0.s8 %v916
        %v918 = vlaneseq
        %v919 = vshrl.u32 %v918, 7
        %v920 = vsub.s32 %v917, %v919
        %v921 = vrot.slane %v907, %v920
        %v922 = vcombine.low %v914, %v921
        %v923 = vcombine.low %v810, %v824
        %v925 = vunpack.c.l.s4 1966171168
        %v926 = vunpack.c.0.s8 %v925
        %v927 = vlaneseq
        %v928 = vshrl.u32 %v927, 7
        %v929 = vsub.s32 %v926, %v928
        %v930 = vrot.slane %v923, %v929
        %v932 = vunpack.c.l.s4 1966171168
        %v933 = vunpack.c.0.s8 %v932
        %v934 = vlaneseq
        %v935 = vshrl.u32 %v934, 7
        %v936 = vsub.s32 %v933, %v935
        %v937 = vrot.slane %v930, %v936
        %vm941 = vcmask 261120
        %942 = vst.msk [vmem:[#allocation2] sm:$0xff] %vm941, %v873
        %943 = vst.msk [vmem:[#allocation2 + $0x8] sm:$0xff] %vm941, %v922
        %vm944 = vcmask 254976
        %945 = vst.msk [vmem:[#allocation2 + $0x10] sm:$0x3] %vm944, %v937
      $region80: #{mim_head_forward.4} parent=75 // pred_fallthru
        _
      %v946 = vld [vmem:[#allocation2] sm:$0xff]
      %v947 = vld [vmem:[#allocation2 + $0x8] sm:$0xff]
      %v948 = vld [vmem:[#allocation2 + $0x10] sm:$0x3]
      %v949 = vld [vmem:[%s631] sm:$0x1]
      %v950 = vld [vmem:[%s634] sm:$0x1]
      %vm951 = vcmask 261120
      %v952 = vsel %vm951, %v946, 0.0
      %953 = vadd.xlane.f32.xlu0 %v952
      %v954 = vpop.xlane.xlu0 %953
      %v955 = vsel %vm951, %v947, 0.0
      %956 = vadd.xlane.f32.xlu0 %v955
      %v957 = vpop.xlane.xlu0 %956
      %vm958 = vcmask 254976
      %v959 = vsel %vm958, %v948, 0.0
      %960 = vadd.xlane.f32.xlu0 %v959
      %v961 = vpop.xlane.xlu0 %960
      %v962 = vrcp.pop 32.0
      %v963 = vmul.f32 %v954, %v962
      %v964 = vmul.f32 %v957, %v962
      %v965 = vmul.f32 %v961, %v962
      %v966 = vsub.f32 %v946, %v963
      %v967 = vsub.f32 %v947, %v964
      %v968 = vsub.f32 %v948, %v965
      %v969 = vmul.f32 %v966, %v966
      %v970 = vmul.f32 %v967, %v967
      %v971 = vmul.f32 %v968, %v968
      %v972 = vsel %vm951, %v969, 0.0
      %973 = vadd.xlane.f32.xlu0 %v972
      %v974 = vpop.xlane.xlu0 %973
      %v975 = vsel %vm951, %v970, 0.0
      %976 = vadd.xlane.f32.xlu0 %v975
      %v977 = vpop.xlane.xlu0 %976
      %v978 = vsel %vm958, %v971, 0.0
      %979 = vadd.xlane.f32.xlu0 %v978
      %v980 = vpop.xlane.xlu0 %979
      %v981 = vmul.f32 %v974, %v962
      %v982 = vmul.f32 %v977, %v962
      %v983 = vmul.f32 %v980, %v962
      %v984 = vadd.f32 %v981, 1e-05
      %v985 = vadd.f32 %v982, 1e-05
      %v986 = vadd.f32 %v983, 1e-05
      %v987 = vrsqrt.pop %v984
      %v988 = vrsqrt.pop %v985
      %v989 = vrsqrt.pop %v986
      %v990 = vmul.f32 %v966, %v987
      %v991 = vmul.f32 %v967, %v988
      %v992 = vmul.f32 %v968, %v989
      %v994 = vlaneseq
      %v995 = vshrl.u32 %v994, 7
      %v996 = vsub.s32 0, %v995
      %v997 = vrot.slane %v949, %v996
      %v999 = vmul.f32 %v990, %v997
      %v1000 = vmul.f32 %v991, %v997
      %v1001 = vmul.f32 %v992, %v997
      %v1003 = vlaneseq
      %v1004 = vshrl.u32 %v1003, 7
      %v1005 = vsub.s32 0, %v1004
      %v1006 = vrot.slane %v950, %v1005
      %v1008 = vadd.f32 %v999, %v1006
      %v1009 = vadd.f32 %v1000, %v1006
      %v1010 = vadd.f32 %v1001, %v1006
      %v1011 = vpack.c.bf16 %v1009, %v1008
      %v1012 = vpack.c.bf16 %v1010, %v1010
      %v1013 = vld [vmem:[%s639] sm:$0xf]
      %v1014 = vld [vmem:[%s639 + $0x4] sm:$0xf]
      %v1015 = vld [vmem:[%s639 + $0x8] sm:$0xf]
      %v1016 = vld [vmem:[%s639 + $0xc] sm:$0xf]
      %v1017 = vld [vmem:[%s642] sm:$0x1]
      %v1019 = vlaneseq
      %v1020 = vshrl.u32 %v1019, 7
      %v1021 = vsub.s32 0, %v1020
      %v1022 = vrot.slane %v1017, %v1021
      %v1028 = vunpack.c.l.b16 %v1013
      %v1029 = vunpack.c.l.b16 %v1014
      %v1030 = vunpack.c.l.b16 %v1015
      %v1031 = vunpack.c.l.b16 %v1016
      %v1032 = vpack.c.b16 %v1029, %v1028
      %v1033 = vpack.c.b16 %v1031, %v1030
      %v1037 = vsel %vm951, %v1011, 0
      %v1040 = vsel %vm951, %v1012, 0
      %1042 = vmatprep.subr.bf16.mxu0 0
      %1043 = vmatpush1.bf16.msra.mxu0 %v1032
      %1044 = vmatprep.subr.bf16.mxu0 0
      %1045 = vmatpush1.bf16.msra.mxu0 %v1033
      %1046 = vmatprep.subr.bf16.mxu0 0
      %1047 = vmatpush1.bf16.msra.mxu0 0
      %1048 = vmatprep.subr.bf16.mxu0 0
      %1049 = vmatpush1.bf16.msra.mxu0 0
      %1050 = vmatprep.subr.bf16.mxu0 0
      %1051 = vmatpush1.bf16.msra.mxu0 0
      %1052 = vmatprep.subr.bf16.mxu0 0
      %1053 = vmatpush1.bf16.msra.mxu0 0
      %1054 = vmatprep.subr.bf16.mxu0 0
      %1055 = vmatpush1.bf16.msra.mxu0 0
      %1056 = vmatprep.subr.bf16.mxu0 0
      %1057 = vmatpush1.bf16.msra.mxu0 0
      %1058 = vmatprep.subr.bf16.mxu0 0
      %1059 = vmatpush1.bf16.msra.mxu0 0
      %1060 = vmatprep.subr.bf16.mxu0 0
      %1061 = vmatpush1.bf16.msra.mxu0 0
      %1062 = vmatprep.subr.bf16.mxu0 0
      %1063 = vmatpush1.bf16.msra.mxu0 0
      %1064 = vmatprep.subr.bf16.mxu0 0
      %1065 = vmatpush1.bf16.msra.mxu0 0
      %1066 = vmatprep.subr.bf16.mxu0 0
      %1067 = vmatpush1.bf16.msra.mxu0 0
      %1068 = vmatprep.subr.bf16.mxu0 0
      %1069 = vmatpush1.bf16.msra.mxu0 0
      %1070 = vmatprep.subr.bf16.mxu0 0
      %1071 = vmatpush1.bf16.msra.mxu0 0
      %1072 = vmatprep.subr.bf16.mxu0 0
      %1073 = vmatpush1.bf16.msra.mxu0 0
      %1074 = vmatprep.mubr.bf16.mxu0 0
      %1075 = vmatmul.mubr.bf16.gmra.mrb[0].mxu0 %v1037
      %v1076 = vpop.f32.mrb[0].mxu0
      %v1077 = vadd.f32 %v1022, %v1076
      %v1078 = vpop.f32.mrb[0].mxu0
      %v1079 = vpop.f32.mrb[0].mxu0
      %v1080 = vadd.f32 %v1022, %v1079
      %v1081 = vpop.f32.mrb[0].mxu0
      %1082 = vmatprep.mubr.bf16.mxu0 0
      %1083 = vmatmul.mubr.bf16.gmra.mrb[0].mxu0 %v1040
      %v1084 = vpop.f32.mrb[0].mxu0
      %v1085 = vadd.f32 %v1022, %v1084
      %v1086 = vpop.f32.mrb[0].mxu0
      %v1087 = vpop.f32.mrb[0].mxu0
      %v1088 = vpop.f32.mrb[0].mxu0
      %1089 = vdwg.mxu0
      %v1090 = vpack.c.bf16 %v1080, %v1077
      %v1091 = vpack.c.bf16 %v1085, %v1085
      %v1094 = vcombine.high %v1090, %v1090
      %v1096 = vunpack.c.l.s4 1966171168
      %v1097 = vunpack.c.0.s8 %v1096
      %v1098 = vlaneseq
      %v1099 = vshrl.u32 %v1098, 7
      %v1100 = vsub.s32 %v1097, %v1099
      %v1101 = vrot.slane %v1090, %v1100
      %v1103 = vunpack.c.l.s4 1966171168
      %v1104 = vunpack.c.0.s8 %v1103
      %v1105 = vlaneseq
      %v1106 = vshrl.u32 %v1105, 7
      %v1107 = vsub.s32 %v1104, %v1106
      %v1108 = vrot.slane %v1094, %v1107
      %v1109 = vcombine.high %v1101, %v1101
      %v1110 = vcombine.high %v1108, %v1108
      %v1112 = vunpack.c.l.s4 1966171168
      %v1113 = vunpack.c.0.s8 %v1112
      %v1114 = vlaneseq
      %v1115 = vshrl.u32 %v1114, 7
      %v1116 = vsub.s32 %v1113, %v1115
      %v1117 = vrot.slane %v1101, %v1116
      %v1119 = vunpack.c.l.s4 1966171168
      %v1120 = vunpack.c.0.s8 %v1119
      %v1121 = vlaneseq
      %v1122 = vshrl.u32 %v1121, 7
      %v1123 = vsub.s32 %v1120, %v1122
      %v1124 = vrot.slane %v1108, %v1123
      %v1126 = vunpack.c.l.s4 1966171168
      %v1127 = vunpack.c.0.s8 %v1126
      %v1128 = vlaneseq
      %v1129 = vshrl.u32 %v1128, 7
      %v1130 = vsub.s32 %v1127, %v1129
      %v1131 = vrot.slane %v1109, %v1130
      %v1133 = vunpack.c.l.s4 1966171168
      %v1134 = vunpack.c.0.s8 %v1133
      %v1135 = vlaneseq
      %v1136 = vshrl.u32 %v1135, 7
      %v1137 = vsub.s32 %v1134, %v1136
      %v1138 = vrot.slane %v1110, %v1137
      %v1139 = vcombine.high %v1117, %v1117
      %v1140 = vcombine.high %v1124, %v1124
      %v1141 = vcombine.high %v1131, %v1131
      %v1142 = vcombine.high %v1138, %v1138
      %v1144 = vunpack.c.l.s4 1966171168
      %v1145 = vunpack.c.0.s8 %v1144
      %v1146 = vlaneseq
      %v1147 = vshrl.u32 %v1146, 7
      %v1148 = vsub.s32 %v1145, %v1147
      %v1149 = vrot.slane %v1091, %v1148
      %v1151 = vunpack.c.l.s4 1966171168
      %v1152 = vunpack.c.0.s8 %v1151
      %v1153 = vlaneseq
      %v1154 = vshrl.u32 %v1153, 7
      %v1155 = vsub.s32 %v1152, %v1154
      %v1156 = vrot.slane %v1149, %v1155
      %v1157 = vunpack.i.l.s16 %v1117
      %v1158 = vunpack.i.h.s16 %v1117
      %v1159 = vunpack.i.l.s16 %v1131
      %v1160 = vunpack.i.h.s16 %v1131
      %v1161 = vunpack.i.l.s16 %v1139
      %v1162 = vunpack.i.h.s16 %v1139
      %v1163 = vunpack.i.l.s16 %v1141
      %v1164 = vunpack.i.h.s16 %v1141
      %v1165 = vunpack.i.l.s16 %v1124
      %v1166 = vunpack.i.h.s16 %v1124
      %v1167 = vunpack.i.l.s16 %v1138
      %v1168 = vunpack.i.h.s16 %v1138
      %v1169 = vunpack.i.l.s16 %v1140
      %v1170 = vunpack.i.h.s16 %v1140
      %v1171 = vunpack.i.l.s16 %v1142
      %v1172 = vunpack.i.h.s16 %v1142
      %v1173 = vunpack.i.l.s16 %v1156
      %v1174 = vunpack.i.h.s16 %v1156
      %v1175 = vpack.i.b16 %v1158, %v1157
      %v1176 = vpack.i.b16 %v1160, %v1159
      %v1177 = vpack.i.b16 %v1162, %v1161
      %v1178 = vpack.i.b16 %v1164, %v1163
      %v1180 = vcombine.low %v1175, %v1176
      %v1181 = vcombine.low %v1177, %v1178
      %v1183 = vunpack.c.l.s4 1966171168
      %v1184 = vunpack.c.0.s8 %v1183
      %v1185 = vlaneseq
      %v1186 = vshrl.u32 %v1185, 7
      %v1187 = vsub.s32 %v1184, %v1186
      %v1188 = vrot.slane %v1180, %v1187
      %v1190 = vunpack.c.l.s4 1966171168
      %v1191 = vunpack.c.0.s8 %v1190
      %v1192 = vlaneseq
      %v1193 = vshrl.u32 %v1192, 7
      %v1194 = vsub.s32 %v1191, %v1193
      %v1195 = vrot.slane %v1181, %v1194
      %v1197 = vunpack.c.l.s4 1966171168
      %v1198 = vunpack.c.0.s8 %v1197
      %v1199 = vlaneseq
      %v1200 = vshrl.u32 %v1199, 7
      %v1201 = vsub.s32 %v1198, %v1200
      %v1202 = vrot.slane %v1165, %v1201
      %v1203 = vcombine.low %v1188, %v1195
      %v1205 = vunpack.c.l.s4 1966171168
      %v1206 = vunpack.c.0.s8 %v1205
      %v1207 = vlaneseq
      %v1208 = vshrl.u32 %v1207, 7
      %v1209 = vsub.s32 %v1206, %v1208
      %v1210 = vrot.slane %v1203, %v1209
      %v1212 = vunpack.c.l.s4 1966171168
      %v1213 = vunpack.c.0.s8 %v1212
      %v1214 = vlaneseq
      %v1215 = vshrl.u32 %v1214, 7
      %v1216 = vsub.s32 %v1213, %v1215
      %v1217 = vrot.slane %v1202, %v1216
      %v1218 = vcombine.low %v1210, %v1217
      %1219 = vrot.lane.b32.xlu0 %v1218, 96
      %v1220 = vpop.permute.xlu0 %1219
      %vm1221 = vcmask 64512
      %v1223 = vsel %vm1221, %v1218, 0
      %v1226 = vsel %vm1221, %v1220, 0
      %1228 = vmatprep.subr.bf16.mxu0 0
      %1229 = vmatpush1.bf16.xpose.msra.mxu0 %v1226
      %1230 = vmatprep.subr.bf16.mxu0 0
      %1231 = vmatpush1.bf16.xpose.msra.mxu0 0
      %1232 = vmatprep.subr.bf16.mxu0 0
      %1233 = vmatpush1.bf16.xpose.msra.mxu0 0
      %1234 = vmatprep.subr.bf16.mxu0 0
      %1235 = vmatpush1.bf16.xpose.msra.mxu0 0
      %1236 = vmatprep.subr.bf16.mxu0 0
      %1237 = vmatpush1.bf16.xpose.msra.mxu0 0
      %1238 = vmatprep.subr.bf16.mxu0 0
      %1239 = vmatpush1.bf16.xpose.msra.mxu0 0
      %1240 = vmatprep.subr.bf16.mxu0 0
      %1241 = vmatpush1.bf16.xpose.msra.mxu0 0
      %1242 = vmatprep.subr.bf16.mxu0 0
      %1243 = vmatpush1.bf16.xpose.msra.mxu0 0
      %1244 = vmatprep.subr.bf16.mxu0 0
      %1245 = vmatpush1.bf16.xpose.msra.mxu0 0
      %1246 = vmatprep.subr.bf16.mxu0 0
      %1247 = vmatpush1.bf16.xpose.msra.mxu0 0
      %1248 = vmatprep.subr.bf16.mxu0 0
      %1249 = vmatpush1.bf16.xpose.msra.mxu0 0
      %1250 = vmatprep.subr.bf16.mxu0 0
      %1251 = vmatpush1.bf16.xpose.msra.mxu0 0
      %1252 = vmatprep.subr.bf16.mxu0 0
      %1253 = vmatpush1.bf16.xpose.msra.mxu0 0
      %1254 = vmatprep.subr.bf16.mxu0 0
      %1255 = vmatpush1.bf16.xpose.msra.mxu0 0
      %1256 = vmatprep.subr.bf16.mxu0 0
      %1257 = vmatpush1.bf16.xpose.msra.mxu0 0
      %1258 = vmatprep.subr.bf16.mxu0 0
      %1259 = vmatpush1.bf16.xpose.msra.mxu0 0
      %1260 = vmatprep.mubr.bf16.mxu0 0
      %1261 = vmatmul.mubr.bf16.gmra.mrb[0].mxu0 %v1223
      %v1262 = vpop.f32.mrb[0].mxu0
      %v1263 = vadd.f32 0.0, %v1262
      %v1264 = vpop.f32.mrb[0].mxu0
      %v1265 = vpop.f32.mrb[0].mxu0
      %v1266 = vadd.f32 0.0, %v1265
      %v1267 = vpop.f32.mrb[0].mxu0
      %1268 = vdwg.mxu0
      %v1269 = vpack.i.b16 %v1167, %v1166
      %v1270 = vpack.i.b16 %v1169, %v1168
      %v1271 = vpack.i.b16 %v1171, %v1170
      %v1272 = vpack.i.b16 %v1173, %v1172
      %v1274 = vcombine.low %v1269, %v1270
      %v1275 = vcombine.low %v1271, %v1272
      %v1277 = vunpack.c.l.s4 1966171168
      %v1278 = vunpack.c.0.s8 %v1277
      %v1279 = vlaneseq
      %v1280 = vshrl.u32 %v1279, 7
      %v1281 = vsub.s32 %v1278, %v1280
      %v1282 = vrot.slane %v1274, %v1281
      %v1284 = vunpack.c.l.s4 1966171168
      %v1285 = vunpack.c.0.s8 %v1284
      %v1286 = vlaneseq
      %v1287 = vshrl.u32 %v1286, 7
      %v1288 = vsub.s32 %v1285, %v1287
      %v1289 = vrot.slane %v1275, %v1288
      %v1291 = vunpack.c.l.s4 1966171168
      %v1292 = vunpack.c.0.s8 %v1291
      %v1293 = vlaneseq
      %v1294 = vshrl.u32 %v1293, 7
      %v1295 = vsub.s32 %v1292, %v1294
      %v1296 = vrot.slane %v1174, %v1295
      %v1297 = vcombine.low %v1282, %v1289
      %v1299 = vunpack.c.l.s4 1966171168
      %v1300 = vunpack.c.0.s8 %v1299
      %v1301 = vlaneseq
      %v1302 = vshrl.u32 %v1301, 7
      %v1303 = vsub.s32 %v1300, %v1302
      %v1304 = vrot.slane %v1297, %v1303
      %v1306 = vunpack.c.l.s4 1966171168
      %v1307 = vunpack.c.0.s8 %v1306
      %v1308 = vlaneseq
      %v1309 = vshrl.u32 %v1308, 7
      %v1310 = vsub.s32 %v1307, %v1309
      %v1311 = vrot.slane %v1296, %v1310
      %v1312 = vcombine.low %v1304, %v1311
      %1313 = vrot.lane.b32.xlu0 %v1312, 96
      %v1314 = vpop.permute.xlu0 %1313
      %v1316 = vsel %vm1221, %v1312, 0
      %v1319 = vsel %vm1221, %v1314, 0
      %1321 = vmatprep.subr.bf16.mxu0 0
      %1322 = vmatpush1.bf16.xpose.msra.mxu0 %v1319
      %1323 = vmatprep.subr.bf16.mxu0 0
      %1324 = vmatpush1.bf16.xpose.msra.mxu0 0
      %1325 = vmatprep.subr.bf16.mxu0 0
      %1326 = vmatpush1.bf16.xpose.msra.mxu0 0
      %1327 = vmatprep.subr.bf16.mxu0 0
      %1328 = vmatpush1.bf16.xpose.msra.mxu0 0
      %1329 = vmatprep.subr.bf16.mxu0 0
      %1330 = vmatpush1.bf16.xpose.msra.mxu0 0
      %1331 = vmatprep.subr.bf16.mxu0 0
      %1332 = vmatpush1.bf16.xpose.msra.mxu0 0
      %1333 = vmatprep.subr.bf16.mxu0 0
      %1334 = vmatpush1.bf16.xpose.msra.mxu0 0
      %1335 = vmatprep.subr.bf16.mxu0 0
      %1336 = vmatpush1.bf16.xpose.msra.mxu0 0
      %1337 = vmatprep.subr.bf16.mxu0 0
      %1338 = vmatpush1.bf16.xpose.msra.mxu0 0
      %1339 = vmatprep.subr.bf16.mxu0 0
      %1340 = vmatpush1.bf16.xpose.msra.mxu0 0
      %1341 = vmatprep.subr.bf16.mxu0 0
      %1342 = vmatpush1.bf16.xpose.msra.mxu0 0
      %1343 = vmatprep.subr.bf16.mxu0 0
      %1344 = vmatpush1.bf16.xpose.msra.mxu0 0
      %1345 = vmatprep.subr.bf16.mxu0 0
      %1346 = vmatpush1.bf16.xpose.msra.mxu0 0
      %1347 = vmatprep.subr.bf16.mxu0 0
      %1348 = vmatpush1.bf16.xpose.msra.mxu0 0
      %1349 = vmatprep.subr.bf16.mxu0 0
      %1350 = vmatpush1.bf16.xpose.msra.mxu0 0
      %1351 = vmatprep.subr.bf16.mxu0 0
      %1352 = vmatpush1.bf16.xpose.msra.mxu0 0
      %1353 = vmatprep.mubr.bf16.mxu0 0
      %1354 = vmatmul.mubr.bf16.gmra.mrb[0].mxu0 %v1316
      %v1355 = vpop.f32.mrb[0].mxu0
      %v1356 = vadd.f32 0.0, %v1355
      %v1357 = vpop.f32.mrb[0].mxu0
      %v1358 = vpop.f32.mrb[0].mxu0
      %v1359 = vadd.f32 0.0, %v1358
      %v1360 = vpop.f32.mrb[0].mxu0
      %1361 = vdwg.mxu0
      %v1362 = vmul.f32 %v1263, 0.35355338
      %v1363 = vmul.f32 %v1266, 0.35355338
      %v1364 = vmul.f32 %v1356, 0.35355338
      %v1365 = vmul.f32 %v1359, 0.35355338
      %vm1366 = vcmask 72704
      %v1367 = vsel %vm1366, %v1362, -inf
      %1368 = vmax.xlane.f32.xlu0 %v1367
      %v1369 = vpop.xlane.xlu0 %1368
      %vm1370 = vcmask 65536
      %v1371 = vsel %vm1370, %v1363, -inf
      %1372 = vmax.xlane.f32.xlu0 %v1371
      %v1373 = vpop.xlane.xlu0 %1372
      %v1374 = vsel %vm1366, %v1364, -inf
      %1375 = vmax.xlane.f32.xlu0 %v1374
      %v1376 = vpop.xlane.xlu0 %1375
      %v1377 = vsel %vm1370, %v1365, -inf
      %1378 = vmax.xlane.f32.xlu0 %v1377
      %v1379 = vpop.xlane.xlu0 %1378
      %v1380 = vsub.f32 %v1362, %v1369
      %v1381 = vsub.f32 %v1363, %v1373
      %v1382 = vsub.f32 %v1364, %v1376
      %v1383 = vsub.f32 %v1365, %v1379
      %v1384 = vmul.f32 %v1380, 1.442695
      %v1385 = vpow.pop %v1384
      %v1386 = vmul.f32 %v1381, 1.442695
      %v1387 = vpow.pop %v1386
      %v1388 = vmul.f32 %v1382, 1.442695
      %v1389 = vpow.pop %v1388
      %v1390 = vmul.f32 %v1383, 1.442695
      %v1391 = vpow.pop %v1390
      %v1392 = vsel %vm1366, %v1385, 0.0
      %1393 = vadd.xlane.f32.xlu0 %v1392
      %v1394 = vpop.xlane.xlu0 %1393
      %v1395 = vsel %vm1370, %v1387, 0.0
      %1396 = vadd.xlane.f32.xlu0 %v1395
      %v1397 = vpop.xlane.xlu0 %1396
      %v1398 = vsel %vm1366, %v1389, 0.0
      %1399 = vadd.xlane.f32.xlu0 %v1398
      %v1400 = vpop.xlane.xlu0 %1399
      %v1401 = vsel %vm1370, %v1391, 0.0
      %1402 = vadd.xlane.f32.xlu0 %v1401
      %v1403 = vpop.xlane.xlu0 %1402
      %v1404 = vrcp.pop %v1394
      %v1405 = vrcp.pop %v1397
      %v1406 = vrcp.pop %v1400
      %v1407 = vrcp.pop %v1403
      %v1408 = vmul.f32 %v1385, %v1404
      %v1409 = vmul.f32 %v1387, %v1405
      %v1410 = vmul.f32 %v1389, %v1406
      %v1411 = vmul.f32 %v1391, %v1407
      %v1412 = vpack.c.bf16 %v1409, %v1408
      %v1413 = vpack.c.bf16 %v1411, %v1410
      %1414 = vrot.lane.b32.xlu0 %v1218, 64
      %v1415 = vpop.permute.xlu0 %1414
      %v1417 = vsel %vm1366, %v1412, 0
      %vm1419 = vcmask 1043456
      %vm1420 = vcmask 1044480
      %v1421 = vsel %vm1419, 4294967295, 65535
      %v1422 = vsel %vm1420, %v1421, 0
      %v1424 = vand.u32 %v1415, %v1422
      %1426 = vmatprep.subr.bf16.mxu0 0
      %1427 = vmatpush1.bf16.msra.mxu0 %v1424
      %1428 = vmatprep.subr.bf16.mxu0 0
      %1429 = vmatpush1.bf16.msra.mxu0 0
      %1430 = vmatprep.subr.bf16.mxu0 0
      %1431 = vmatpush1.bf16.msra.mxu0 0
      %1432 = vmatprep.subr.bf16.mxu0 0
      %1433 = vmatpush1.bf16.msra.mxu0 0
      %1434 = vmatprep.subr.bf16.mxu0 0
      %1435 = vmatpush1.bf16.msra.mxu0 0
      %1436 = vmatprep.subr.bf16.mxu0 0
      %1437 = vmatpush1.bf16.msra.mxu0 0
      %1438 = vmatprep.subr.bf16.mxu0 0
      %1439 = vmatpush1.bf16.msra.mxu0 0
      %1440 = vmatprep.subr.bf16.mxu0 0
      %1441 = vmatpush1.bf16.msra.mxu0 0
      %1442 = vmatprep.subr.bf16.mxu0 0
      %1443 = vmatpush1.bf16.msra.mxu0 0
      %1444 = vmatprep.subr.bf16.mxu0 0
      %1445 = vmatpush1.bf16.msra.mxu0 0
      %1446 = vmatprep.subr.bf16.mxu0 0
      %1447 = vmatpush1.bf16.msra.mxu0 0
      %1448 = vmatprep.subr.bf16.mxu0 0
      %1449 = vmatpush1.bf16.msra.mxu0 0
      %1450 = vmatprep.subr.bf16.mxu0 0
      %1451 = vmatpush1.bf16.msra.mxu0 0
      %1452 = vmatprep.subr.bf16.mxu0 0
      %1453 = vmatpush1.bf16.msra.mxu0 0
      %1454 = vmatprep.subr.bf16.mxu0 0
      %1455 = vmatpush1.bf16.msra.mxu0 0
      %1456 = vmatprep.subr.bf16.mxu0 0
      %1457 = vmatpush1.bf16.msra.mxu0 0
      %1458 = vmatprep.mubr.bf16.mxu0 0
      %1459 = vmatmul.mubr.bf16.gmra.mrb[0].mxu0 %v1417
      %v1460 = vpop.f32.mrb[0].mxu0
      %v1461 = vadd.f32 0.0, %v1460
      %v1462 = vpop.f32.mrb[0].mxu0
      %v1463 = vpop.f32.mrb[0].mxu0
      %v1464 = vadd.f32 0.0, %v1463
      %v1465 = vpop.f32.mrb[0].mxu0
      %1466 = vdwg.mxu0
      %1467 = vrot.lane.b32.xlu0 %v1312, 64
      %v1468 = vpop.permute.xlu0 %1467
      %v1470 = vsel %vm1366, %v1413, 0
      %v1473 = vand.u32 %v1468, %v1422
      %1475 = vmatprep.subr.bf16.mxu0 0
      %1476 = vmatpush1.bf16.msra.mxu0 %v1473
      %1477 = vmatprep.subr.bf16.mxu0 0
      %1478 = vmatpush1.bf16.msra.mxu0 0
      %1479 = vmatprep.subr.bf16.mxu0 0
      %1480 = vmatpush1.bf16.msra.mxu0 0
      %1481 = vmatprep.subr.bf16.mxu0 0
      %1482 = vmatpush1.bf16.msra.mxu0 0
      %1483 = vmatprep.subr.bf16.mxu0 0
      %1484 = vmatpush1.bf16.msra.mxu0 0
      %1485 = vmatprep.subr.bf16.mxu0 0
      %1486 = vmatpush1.bf16.msra.mxu0 0
      %1487 = vmatprep.subr.bf16.mxu0 0
      %1488 = vmatpush1.bf16.msra.mxu0 0
      %1489 = vmatprep.subr.bf16.mxu0 0
      %1490 = vmatpush1.bf16.msra.mxu0 0
      %1491 = vmatprep.subr.bf16.mxu0 0
      %1492 = vmatpush1.bf16.msra.mxu0 0
      %1493 = vmatprep.subr.bf16.mxu0 0
      %1494 = vmatpush1.bf16.msra.mxu0 0
      %1495 = vmatprep.subr.bf16.mxu0 0
      %1496 = vmatpush1.bf16.msra.mxu0 0
      %1497 = vmatprep.subr.bf16.mxu0 0
      %1498 = vmatpush1.bf16.msra.mxu0 0
      %1499 = vmatprep.subr.bf16.mxu0 0
      %1500 = vmatpush1.bf16.msra.mxu0 0
      %1501 = vmatprep.subr.bf16.mxu0 0
      %1502 = vmatpush1.bf16.msra.mxu0 0
      %1503 = vmatprep.subr.bf16.mxu0 0
      %1504 = vmatpush1.bf16.msra.mxu0 0
      %1505 = vmatprep.subr.bf16.mxu0 0
      %1506 = vmatpush1.bf16.msra.mxu0 0
      %1507 = vmatprep.mubr.bf16.mxu0 0
      %1508 = vmatmul.mubr.bf16.gmra.mrb[0].mxu0 %v1470
      %v1509 = vpop.f32.mrb[0].mxu0
      %v1510 = vadd.f32 0.0, %v1509
      %v1511 = vpop.f32.mrb[0].mxu0
      %v1512 = vpop.f32.mrb[0].mxu0
      %v1513 = vadd.f32 0.0, %v1512
      %v1514 = vpop.f32.mrb[0].mxu0
      %1515 = vdwg.mxu0
      %1516 = vrot.lane.b32.xlu0 %v1218, 120
      %v1517 = vpop.permute.xlu0 %1516
      %1518 = vrot.lane.b32.xlu0 %v1218, 88
      %v1519 = vpop.permute.xlu0 %1518
      %v1521 = vsel %vm1221, %v1517, 0
      %v1524 = vsel %vm1221, %v1519, 0
      %1526 = vmatprep.subr.bf16.mxu0 0
      %1527 = vmatpush1.bf16.xpose.msra.mxu0 %v1524
      %1528 = vmatprep.subr.bf16.mxu0 0
      %1529 = vmatpush1.bf16.xpose.msra.mxu0 0
      %1530 = vmatprep.subr.bf16.mxu0 0
      %1531 = vmatpush1.bf16.xpose.msra.mxu0 0
      %1532 = vmatprep.subr.bf16.mxu0 0
      %1533 = vmatpush1.bf16.xpose.msra.mxu0 0
      %1534 = vmatprep.subr.bf16.mxu0 0
      %1535 = vmatpush1.bf16.xpose.msra.mxu0 0
      %1536 = vmatprep.subr.bf16.mxu0 0
      %1537 = vmatpush1.bf16.xpose.msra.mxu0 0
      %1538 = vmatprep.subr.bf16.mxu0 0
      %1539 = vmatpush1.bf16.xpose.msra.mxu0 0
      %1540 = vmatprep.subr.bf16.mxu0 0
      %1541 = vmatpush1.bf16.xpose.msra.mxu0 0
      %1542 = vmatprep.subr.bf16.mxu0 0
      %1543 = vmatpush1.bf16.xpose.msra.mxu0 0
      %1544 = vmatprep.subr.bf16.mxu0 0
      %1545 = vmatpush1.bf16.xpose.msra.mxu0 0
      %1546 = vmatprep.subr.bf16.mxu0 0
      %1547 = vmatpush1.bf16.xpose.msra.mxu0 0
      %1548 = vmatprep.subr.bf16.mxu0 0
      %1549 = vmatpush1.bf16.xpose.msra.mxu0 0
      %1550 = vmatprep.subr.bf16.mxu0 0
      %1551 = vmatpush1.bf16.xpose.msra.mxu0 0
      %1552 = vmatprep.subr.bf16.mxu0 0
      %1553 = vmatpush1.bf16.xpose.msra.mxu0 0
      %1554 = vmatprep.subr.bf16.mxu0 0
      %1555 = vmatpush1.bf16.xpose.msra.mxu0 0
      %1556 = vmatprep.subr.bf16.mxu0 0
      %1557 = vmatpush1.bf16.xpose.msra.mxu0 0
      %1558 = vmatprep.mubr.bf16.mxu0 0
      %1559 = vmatmul.mubr.bf16.gmra.mrb[0].mxu0 %v1521
      %v1560 = vpop.f32.mrb[0].mxu0
      %v1561 = vadd.f32 0.0, %v1560
      %v1562 = vpop.f32.mrb[0].mxu0
      %v1563 = vpop.f32.mrb[0].mxu0
      %v1564 = vadd.f32 0.0, %v1563
      %v1565 = vpop.f32.mrb[0].mxu0
      %1566 = vdwg.mxu0
      %1567 = vrot.lane.b32.xlu0 %v1312, 120
      %v1568 = vpop.permute.xlu0 %1567
      %1569 = vrot.lane.b32.xlu0 %v1312, 88
      %v1570 = vpop.permute.xlu0 %1569
      %v1572 = vsel %vm1221, %v1568, 0
      %v1575 = vsel %vm1221, %v1570, 0
      %1577 = vmatprep.subr.bf16.mxu0 0
      %1578 = vmatpush1.bf16.xpose.msra.mxu0 %v1575
      %1579 = vmatprep.subr.bf16.mxu0 0
      %1580 = vmatpush1.bf16.xpose.msra.mxu0 0
      %1581 = vmatprep.subr.bf16.mxu0 0
      %1582 = vmatpush1.bf16.xpose.msra.mxu0 0
      %1583 = vmatprep.subr.bf16.mxu0 0
      %1584 = vmatpush1.bf16.xpose.msra.mxu0 0
      %1585 = vmatprep.subr.bf16.mxu0 0
      %1586 = vmatpush1.bf16.xpose.msra.mxu0 0
      %1587 = vmatprep.subr.bf16.mxu0 0
      %1588 = vmatpush1.bf16.xpose.msra.mxu0 0
      %1589 = vmatprep.subr.bf16.mxu0 0
      %1590 = vmatpush1.bf16.xpose.msra.mxu0 0
      %1591 = vmatprep.subr.bf16.mxu0 0
      %1592 = vmatpush1.bf16.xpose.msra.mxu0 0
      %1593 = vmatprep.subr.bf16.mxu0 0
      %1594 = vmatpush1.bf16.xpose.msra.mxu0 0
      %1595 = vmatprep.subr.bf16.mxu0 0
      %1596 = vmatpush1.bf16.xpose.msra.mxu0 0
      %1597 = vmatprep.subr.bf16.mxu0 0
      %1598 = vmatpush1.bf16.xpose.msra.mxu0 0
      %1599 = vmatprep.subr.bf16.mxu0 0
      %1600 = vmatpush1.bf16.xpose.msra.mxu0 0
      %1601 = vmatprep.subr.bf16.mxu0 0
      %1602 = vmatpush1.bf16.xpose.msra.mxu0 0
      %1603 = vmatprep.subr.bf16.mxu0 0
      %1604 = vmatpush1.bf16.xpose.msra.mxu0 0
      %1605 = vmatprep.subr.bf16.mxu0 0
      %1606 = vmatpush1.bf16.xpose.msra.mxu0 0
      %1607 = vmatprep.subr.bf16.mxu0 0
      %1608 = vmatpush1.bf16.xpose.msra.mxu0 0
      %1609 = vmatprep.mubr.bf16.mxu0 0
      %1610 = vmatmul.mubr.bf16.gmra.mrb[0].mxu0 %v1572
      %v1611 = vpop.f32.mrb[0].mxu0
      %v1612 = vadd.f32 0.0, %v1611
      %v1613 = vpop.f32.mrb[0].mxu0
      %v1614 = vpop.f32.mrb[0].mxu0
      %v1615 = vadd.f32 0.0, %v1614
      %v1616 = vpop.f32.mrb[0].mxu0
      %1617 = vdwg.mxu0
      %v1618 = vmul.f32 %v1561, 0.35355338
      %v1619 = vmul.f32 %v1564, 0.35355338
      %v1620 = vmul.f32 %v1612, 0.35355338
      %v1621 = vmul.f32 %v1615, 0.35355338
      %v1622 = vsel %vm1366, %v1618, -inf
      %1623 = vmax.xlane.f32.xlu0 %v1622
      %v1624 = vpop.xlane.xlu0 %1623
      %v1625 = vsel %vm1370, %v1619, -inf
      %1626 = vmax.xlane.f32.xlu0 %v1625
      %v1627 = vpop.xlane.xlu0 %1626
      %v1628 = vsel %vm1366, %v1620, -inf
      %1629 = vmax.xlane.f32.xlu0 %v1628
      %v1630 = vpop.xlane.xlu0 %1629
      %v1631 = vsel %vm1370, %v1621, -inf
      %1632 = vmax.xlane.f32.xlu0 %v1631
      %v1633 = vpop.xlane.xlu0 %1632
      %v1634 = vsub.f32 %v1618, %v1624
      %v1635 = vsub.f32 %v1619, %v1627
      %v1636 = vsub.f32 %v1620, %v1630
      %v1637 = vsub.f32 %v1621, %v1633
      %v1638 = vmul.f32 %v1634, 1.442695
      %v1639 = vpow.pop %v1638
      %v1640 = vmul.f32 %v1635, 1.442695
      %v1641 = vpow.pop %v1640
      %v1642 = vmul.f32 %v1636, 1.442695
      %v1643 = vpow.pop %v1642
      %v1644 = vmul.f32 %v1637, 1.442695
      %v1645 = vpow.pop %v1644
      %v1646 = vsel %vm1366, %v1639, 0.0
      %1647 = vadd.xlane.f32.xlu0 %v1646
      %v1648 = vpop.xlane.xlu0 %1647
      %v1649 = vsel %vm1370, %v1641, 0.0
      %1650 = vadd.xlane.f32.xlu0 %v1649
      %v1651 = vpop.xlane.xlu0 %1650
      %v1652 = vsel %vm1366, %v1643, 0.0
      %1653 = vadd.xlane.f32.xlu0 %v1652
      %v1654 = vpop.xlane.xlu0 %1653
      %v1655 = vsel %vm1370, %v1645, 0.0
      %1656 = vadd.xlane.f32.xlu0 %v1655
      %v1657 = vpop.xlane.xlu0 %1656
      %v1658 = vrcp.pop %v1648
      %v1659 = vrcp.pop %v1651
      %v1660 = vrcp.pop %v1654
      %v1661 = vrcp.pop %v1657
      %v1662 = vmul.f32 %v1639, %v1658
      %v1663 = vmul.f32 %v1641, %v1659
      %v1664 = vmul.f32 %v1643, %v1660
      %v1665 = vmul.f32 %v1645, %v1661
      %v1666 = vpack.c.bf16 %v1663, %v1662
      %v1667 = vpack.c.bf16 %v1665, %v1664
      %1668 = vrot.lane.b32.xlu0 %v1218, 56
      %v1669 = vpop.permute.xlu0 %1668
      %v1671 = vsel %vm1366, %v1666, 0
      %v1674 = vand.u32 %v1669, %v1422
      %1676 = vmatprep.subr.bf16.mxu0 0
      %1677 = vmatpush1.bf16.msra.mxu0 %v1674
      %1678 = vmatprep.subr.bf16.mxu0 0
      %1679 = vmatpush1.bf16.msra.mxu0 0
      %1680 = vmatprep.subr.bf16.mxu0 0
      %1681 = vmatpush1.bf16.msra.mxu0 0
      %1682 = vmatprep.subr.bf16.mxu0 0
      %1683 = vmatpush1.bf16.msra.mxu0 0
      %1684 = vmatprep.subr.bf16.mxu0 0
      %1685 = vmatpush1.bf16.msra.mxu0 0
      %1686 = vmatprep.subr.bf16.mxu0 0
      %1687 = vmatpush1.bf16.msra.mxu0 0
      %1688 = vmatprep.subr.bf16.mxu0 0
      %1689 = vmatpush1.bf16.msra.mxu0 0
      %1690 = vmatprep.subr.bf16.mxu0 0
      %1691 = vmatpush1.bf16.msra.mxu0 0
      %1692 = vmatprep.subr.bf16.mxu0 0
      %1693 = vmatpush1.bf16.msra.mxu0 0
      %1694 = vmatprep.subr.bf16.mxu0 0
      %1695 = vmatpush1.bf16.msra.mxu0 0
      %1696 = vmatprep.subr.bf16.mxu0 0
      %1697 = vmatpush1.bf16.msra.mxu0 0
      %1698 = vmatprep.subr.bf16.mxu0 0
      %1699 = vmatpush1.bf16.msra.mxu0 0
      %1700 = vmatprep.subr.bf16.mxu0 0
      %1701 = vmatpush1.bf16.msra.mxu0 0
      %1702 = vmatprep.subr.bf16.mxu0 0
      %1703 = vmatpush1.bf16.msra.mxu0 0
      %1704 = vmatprep.subr.bf16.mxu0 0
      %1705 = vmatpush1.bf16.msra.mxu0 0
      %1706 = vmatprep.subr.bf16.mxu0 0
      %1707 = vmatpush1.bf16.msra.mxu0 0
      %1708 = vmatprep.mubr.bf16.mxu0 0
      %1709 = vmatmul.mubr.bf16.gmra.mrb[0].mxu0 %v1671
      %v1710 = vpop.f32.mrb[0].mxu0
      %v1711 = vadd.f32 0.0, %v1710
      %v1712 = vpop.f32.mrb[0].mxu0
      %v1713 = vpop.f32.mrb[0].mxu0
      %v1714 = vadd.f32 0.0, %v1713
      %v1715 = vpop.f32.mrb[0].mxu0
      %1716 = vdwg.mxu0
      %1717 = vrot.lane.b32.xlu0 %v1312, 56
      %v1718 = vpop.permute.xlu0 %1717
      %v1720 = vsel %vm1366, %v1667, 0
      %v1723 = vand.u32 %v1718, %v1422
      %1725 = vmatprep.subr.bf16.mxu0 0
      %1726 = vmatpush1.bf16.msra.mxu0 %v1723
      %1727 = vmatprep.subr.bf16.mxu0 0
      %1728 = vmatpush1.bf16.msra.mxu0 0
      %1729 = vmatprep.subr.bf16.mxu0 0
      %1730 = vmatpush1.bf16.msra.mxu0 0
      %1731 = vmatprep.subr.bf16.mxu0 0
      %1732 = vmatpush1.bf16.msra.mxu0 0
      %1733 = vmatprep.subr.bf16.mxu0 0
      %1734 = vmatpush1.bf16.msra.mxu0 0
      %1735 = vmatprep.subr.bf16.mxu0 0
      %1736 = vmatpush1.bf16.msra.mxu0 0
      %1737 = vmatprep.subr.bf16.mxu0 0
      %1738 = vmatpush1.bf16.msra.mxu0 0
      %1739 = vmatprep.subr.bf16.mxu0 0
      %1740 = vmatpush1.bf16.msra.mxu0 0
      %1741 = vmatprep.subr.bf16.mxu0 0
      %1742 = vmatpush1.bf16.msra.mxu0 0
      %1743 = vmatprep.subr.bf16.mxu0 0
      %1744 = vmatpush1.bf16.msra.mxu0 0
      %1745 = vmatprep.subr.bf16.mxu0 0
      %1746 = vmatpush1.bf16.msra.mxu0 0
      %1747 = vmatprep.subr.bf16.mxu0 0
      %1748 = vmatpush1.bf16.msra.mxu0 0
      %1749 = vmatprep.subr.bf16.mxu0 0
      %1750 = vmatpush1.bf16.msra.mxu0 0
      %1751 = vmatprep.subr.bf16.mxu0 0
      %1752 = vmatpush1.bf16.msra.mxu0 0
      %1753 = vmatprep.subr.bf16.mxu0 0
      %1754 = vmatpush1.bf16.msra.mxu0 0
      %1755 = vmatprep.subr.bf16.mxu0 0
      %1756 = vmatpush1.bf16.msra.mxu0 0
      %1757 = vmatprep.mubr.bf16.mxu0 0
      %1758 = vmatmul.mubr.bf16.gmra.mrb[0].mxu0 %v1720
      %v1759 = vpop.f32.mrb[0].mxu0
      %v1760 = vadd.f32 0.0, %v1759
      %v1761 = vpop.f32.mrb[0].mxu0
      %v1762 = vpop.f32.mrb[0].mxu0
      %v1763 = vadd.f32 0.0, %v1762
      %v1764 = vpop.f32.mrb[0].mxu0
      %1765 = vdwg.mxu0
      %1766 = vrot.lane.b32.xlu0 %v1218, 112
      %v1767 = vpop.permute.xlu0 %1766
      %1768 = vrot.lane.b32.xlu0 %v1218, 80
      %v1769 = vpop.permute.xlu0 %1768
      %v1771 = vsel %vm1221, %v1767, 0
      %v1774 = vsel %vm1221, %v1769, 0
      %1776 = vmatprep.subr.bf16.mxu0 0
      %1777 = vmatpush1.bf16.xpose.msra.mxu0 %v1774
      %1778 = vmatprep.subr.bf16.mxu0 0
      %1779 = vmatpush1.bf16.xpose.msra.mxu0 0
      %1780 = vmatprep.subr.bf16.mxu0 0
      %1781 = vmatpush1.bf16.xpose.msra.mxu0 0
      %1782 = vmatprep.subr.bf16.mxu0 0
      %1783 = vmatpush1.bf16.xpose.msra.mxu0 0
      %1784 = vmatprep.subr.bf16.mxu0 0
      %1785 = vmatpush1.bf16.xpose.msra.mxu0 0
      %1786 = vmatprep.subr.bf16.mxu0 0
      %1787 = vmatpush1.bf16.xpose.msra.mxu0 0
      %1788 = vmatprep.subr.bf16.mxu0 0
      %1789 = vmatpush1.bf16.xpose.msra.mxu0 0
      %1790 = vmatprep.subr.bf16.mxu0 0
      %1791 = vmatpush1.bf16.xpose.msra.mxu0 0
      %1792 = vmatprep.subr.bf16.mxu0 0
      %1793 = vmatpush1.bf16.xpose.msra.mxu0 0
      %1794 = vmatprep.subr.bf16.mxu0 0
      %1795 = vmatpush1.bf16.xpose.msra.mxu0 0
      %1796 = vmatprep.subr.bf16.mxu0 0
      %1797 = vmatpush1.bf16.xpose.msra.mxu0 0
      %1798 = vmatprep.subr.bf16.mxu0 0
      %1799 = vmatpush1.bf16.xpose.msra.mxu0 0
      %1800 = vmatprep.subr.bf16.mxu0 0
      %1801 = vmatpush1.bf16.xpose.msra.mxu0 0
      %1802 = vmatprep.subr.bf16.mxu0 0
      %1803 = vmatpush1.bf16.xpose.msra.mxu0 0
      %1804 = vmatprep.subr.bf16.mxu0 0
      %1805 = vmatpush1.bf16.xpose.msra.mxu0 0
      %1806 = vmatprep.subr.bf16.mxu0 0
      %1807 = vmatpush1.bf16.xpose.msra.mxu0 0
      %1808 = vmatprep.mubr.bf16.mxu0 0
      %1809 = vmatmul.mubr.bf16.gmra.mrb[0].mxu0 %v1771
      %v1810 = vpop.f32.mrb[0].mxu0
      %v1811 = vadd.f32 0.0, %v1810
      %v1812 = vpop.f32.mrb[0].mxu0
      %v1813 = vpop.f32.mrb[0].mxu0
      %v1814 = vadd.f32 0.0, %v1813
      %v1815 = vpop.f32.mrb[0].mxu0
      %1816 = vdwg.mxu0
      %1817 = vrot.lane.b32.xlu0 %v1312, 112
      %v1818 = vpop.permute.xlu0 %1817
      %1819 = vrot.lane.b32.xlu0 %v1312, 80
      %v1820 = vpop.permute.xlu0 %1819
      %v1822 = vsel %vm1221, %v1818, 0
      %v1825 = vsel %vm1221, %v1820, 0
      %1827 = vmatprep.subr.bf16.mxu0 0
      %1828 = vmatpush1.bf16.xpose.msra.mxu0 %v1825
      %1829 = vmatprep.subr.bf16.mxu0 0
      %1830 = vmatpush1.bf16.xpose.msra.mxu0 0
      %1831 = vmatprep.subr.bf16.mxu0 0
      %1832 = vmatpush1.bf16.xpose.msra.mxu0 0
      %1833 = vmatprep.subr.bf16.mxu0 0
      %1834 = vmatpush1.bf16.xpose.msra.mxu0 0
      %1835 = vmatprep.subr.bf16.mxu0 0
      %1836 = vmatpush1.bf16.xpose.msra.mxu0 0
      %1837 = vmatprep.subr.bf16.mxu0 0
      %1838 = vmatpush1.bf16.xpose.msra.mxu0 0
      %1839 = vmatprep.subr.bf16.mxu0 0
      %1840 = vmatpush1.bf16.xpose.msra.mxu0 0
      %1841 = vmatprep.subr.bf16.mxu0 0
      %1842 = vmatpush1.bf16.xpose.msra.mxu0 0
      %1843 = vmatprep.subr.bf16.mxu0 0
      %1844 = vmatpush1.bf16.xpose.msra.mxu0 0
      %1845 = vmatprep.subr.bf16.mxu0 0
      %1846 = vmatpush1.bf16.xpose.msra.mxu0 0
      %1847 = vmatprep.subr.bf16.mxu0 0
      %1848 = vmatpush1.bf16.xpose.msra.mxu0 0
      %1849 = vmatprep.subr.bf16.mxu0 0
      %1850 = vmatpush1.bf16.xpose.msra.mxu0 0
      %1851 = vmatprep.subr.bf16.mxu0 0
      %1852 = vmatpush1.bf16.xpose.msra.mxu0 0
      %1853 = vmatprep.subr.bf16.mxu0 0
      %1854 = vmatpush1.bf16.xpose.msra.mxu0 0
      %1855 = vmatprep.subr.bf16.mxu0 0
      %1856 = vmatpush1.bf16.xpose.msra.mxu0 0
      %1857 = vmatprep.subr.bf16.mxu0 0
      %1858 = vmatpush1.bf16.xpose.msra.mxu0 0
      %1859 = vmatprep.mubr.bf16.mxu0 0
      %1860 = vmatmul.mubr.bf16.gmra.mrb[0].mxu0 %v1822
      %v1861 = vpop.f32.mrb[0].mxu0
      %v1862 = vadd.f32 0.0, %v1861
      %v1863 = vpop.f32.mrb[0].mxu0
      %v1864 = vpop.f32.mrb[0].mxu0
      %v1865 = vadd.f32 0.0, %v1864
      %v1866 = vpop.f32.mrb[0].mxu0
      %1867 = vdwg.mxu0
      %v1868 = vmul.f32 %v1811, 0.35355338
      %v1869 = vmul.f32 %v1814, 0.35355338
      %v1870 = vmul.f32 %v1862, 0.35355338
      %v1871 = vmul.f32 %v1865, 0.35355338
      %v1872 = vsel %vm1366, %v1868, -inf
      %1873 = vmax.xlane.f32.xlu0 %v1872
      %v1874 = vpop.xlane.xlu0 %1873
      %v1875 = vsel %vm1370, %v1869, -inf
      %1876 = vmax.xlane.f32.xlu0 %v1875
      %v1877 = vpop.xlane.xlu0 %1876
      %v1878 = vsel %vm1366, %v1870, -inf
      %1879 = vmax.xlane.f32.xlu0 %v1878
      %v1880 = vpop.xlane.xlu0 %1879
      %v1881 = vsel %vm1370, %v1871, -inf
      %1882 = vmax.xlane.f32.xlu0 %v1881
      %v1883 = vpop.xlane.xlu0 %1882
      %v1884 = vsub.f32 %v1868, %v1874
      %v1885 = vsub.f32 %v1869, %v1877
      %v1886 = vsub.f32 %v1870, %v1880
      %v1887 = vsub.f32 %v1871, %v1883
      %v1888 = vmul.f32 %v1884, 1.442695
      %v1889 = vpow.pop %v1888
      %v1890 = vmul.f32 %v1885, 1.442695
      %v1891 = vpow.pop %v1890
      %v1892 = vmul.f32 %v1886, 1.442695
      %v1893 = vpow.pop %v1892
      %v1894 = vmul.f32 %v1887, 1.442695
      %v1895 = vpow.pop %v1894
      %v1896 = vsel %vm1366, %v1889, 0.0
      %1897 = vadd.xlane.f32.xlu0 %v1896
      %v1898 = vpop.xlane.xlu0 %1897
      %v1899 = vsel %vm1370, %v1891, 0.0
      %1900 = vadd.xlane.f32.xlu0 %v1899
      %v1901 = vpop.xlane.xlu0 %1900
      %v1902 = vsel %vm1366, %v1893, 0.0
      %1903 = vadd.xlane.f32.xlu0 %v1902
      %v1904 = vpop.xlane.xlu0 %1903
      %v1905 = vsel %vm1370, %v1895, 0.0
      %1906 = vadd.xlane.f32.xlu0 %v1905
      %v1907 = vpop.xlane.xlu0 %1906
      %v1908 = vrcp.pop %v1898
      %v1909 = vrcp.pop %v1901
      %v1910 = vrcp.pop %v1904
      %v1911 = vrcp.pop %v1907
      %v1912 = vmul.f32 %v1889, %v1908
      %v1913 = vmul.f32 %v1891, %v1909
      %v1914 = vmul.f32 %v1893, %v1910
      %v1915 = vmul.f32 %v1895, %v1911
      %v1916 = vpack.c.bf16 %v1913, %v1912
      %v1917 = vpack.c.bf16 %v1915, %v1914
      %1918 = vrot.lane.b32.xlu0 %v1218, 48
      %v1919 = vpop.permute.xlu0 %1918
      %v1921 = vsel %vm1366, %v1916, 0
      %v1924 = vand.u32 %v1919, %v1422
      %1926 = vmatprep.subr.bf16.mxu0 0
      %1927 = vmatpush1.bf16.msra.mxu0 %v1924
      %1928 = vmatprep.subr.bf16.mxu0 0
      %1929 = vmatpush1.bf16.msra.mxu0 0
      %1930 = vmatprep.subr.bf16.mxu0 0
      %1931 = vmatpush1.bf16.msra.mxu0 0
      %1932 = vmatprep.subr.bf16.mxu0 0
      %1933 = vmatpush1.bf16.msra.mxu0 0
      %1934 = vmatprep.subr.bf16.mxu0 0
      %1935 = vmatpush1.bf16.msra.mxu0 0
      %1936 = vmatprep.subr.bf16.mxu0 0
      %1937 = vmatpush1.bf16.msra.mxu0 0
      %1938 = vmatprep.subr.bf16.mxu0 0
      %1939 = vmatpush1.bf16.msra.mxu0 0
      %1940 = vmatprep.subr.bf16.mxu0 0
      %1941 = vmatpush1.bf16.msra.mxu0 0
      %1942 = vmatprep.subr.bf16.mxu0 0
      %1943 = vmatpush1.bf16.msra.mxu0 0
      %1944 = vmatprep.subr.bf16.mxu0 0
      %1945 = vmatpush1.bf16.msra.mxu0 0
      %1946 = vmatprep.subr.bf16.mxu0 0
      %1947 = vmatpush1.bf16.msra.mxu0 0
      %1948 = vmatprep.subr.bf16.mxu0 0
      %1949 = vmatpush1.bf16.msra.mxu0 0
      %1950 = vmatprep.subr.bf16.mxu0 0
      %1951 = vmatpush1.bf16.msra.mxu0 0
      %1952 = vmatprep.subr.bf16.mxu0 0
      %1953 = vmatpush1.bf16.msra.mxu0 0
      %1954 = vmatprep.subr.bf16.mxu0 0
      %1955 = vmatpush1.bf16.msra.mxu0 0
      %1956 = vmatprep.subr.bf16.mxu0 0
      %1957 = vmatpush1.bf16.msra.mxu0 0
      %1958 = vmatprep.mubr.bf16.mxu0 0
      %1959 = vmatmul.mubr.bf16.gmra.mrb[0].mxu0 %v1921
      %v1960 = vpop.f32.mrb[0].mxu0
      %v1961 = vadd.f32 0.0, %v1960
      %v1962 = vpop.f32.mrb[0].mxu0
      %v1963 = vpop.f32.mrb[0].mxu0
      %v1964 = vadd.f32 0.0, %v1963
      %v1965 = vpop.f32.mrb[0].mxu0
      %1966 = vdwg.mxu0
      %1967 = vrot.lane.b32.xlu0 %v1312, 48
      %v1968 = vpop.permute.xlu0 %1967
      %v1970 = vsel %vm1366, %v1917, 0
      %v1973 = vand.u32 %v1968, %v1422
      %1975 = vmatprep.subr.bf16.mxu0 0
      %1976 = vmatpush1.bf16.msra.mxu0 %v1973
      %1977 = vmatprep.subr.bf16.mxu0 0
      %1978 = vmatpush1.bf16.msra.mxu0 0
      %1979 = vmatprep.subr.bf16.mxu0 0
      %1980 = vmatpush1.bf16.msra.mxu0 0
      %1981 = vmatprep.subr.bf16.mxu0 0
      %1982 = vmatpush1.bf16.msra.mxu0 0
      %1983 = vmatprep.subr.bf16.mxu0 0
      %1984 = vmatpush1.bf16.msra.mxu0 0
      %1985 = vmatprep.subr.bf16.mxu0 0
      %1986 = vmatpush1.bf16.msra.mxu0 0
      %1987 = vmatprep.subr.bf16.mxu0 0
      %1988 = vmatpush1.bf16.msra.mxu0 0
      %1989 = vmatprep.subr.bf16.mxu0 0
      %1990 = vmatpush1.bf16.msra.mxu0 0
      %1991 = vmatprep.subr.bf16.mxu0 0
      %1992 = vmatpush1.bf16.msra.mxu0 0
      %1993 = vmatprep.subr.bf16.mxu0 0
      %1994 = vmatpush1.bf16.msra.mxu0 0
      %1995 = vmatprep.subr.bf16.mxu0 0
      %1996 = vmatpush1.bf16.msra.mxu0 0
      %1997 = vmatprep.subr.bf16.mxu0 0
      %1998 = vmatpush1.bf16.msra.mxu0 0
      %1999 = vmatprep.subr.bf16.mxu0 0
      %2000 = vmatpush1.bf16.msra.mxu0 0
      %2001 = vmatprep.subr.bf16.mxu0 0
      %2002 = vmatpush1.bf16.msra.mxu0 0
      %2003 = vmatprep.subr.bf16.mxu0 0
      %2004 = vmatpush1.bf16.msra.mxu0 0
      %2005 = vmatprep.subr.bf16.mxu0 0
      %2006 = vmatpush1.bf16.msra.mxu0 0
      %2007 = vmatprep.mubr.bf16.mxu0 0
      %2008 = vmatmul.mubr.bf16.gmra.mrb[0].mxu0 %v1970
      %v2009 = vpop.f32.mrb[0].mxu0
      %v2010 = vadd.f32 0.0, %v2009
      %v2011 = vpop.f32.mrb[0].mxu0
      %v2012 = vpop.f32.mrb[0].mxu0
      %v2013 = vadd.f32 0.0, %v2012
      %v2014 = vpop.f32.mrb[0].mxu0
      %2015 = vdwg.mxu0
      %2016 = vrot.lane.b32.xlu0 %v1218, 104
      %v2017 = vpop.permute.xlu0 %2016
      %2018 = vrot.lane.b32.xlu0 %v1218, 72
      %v2019 = vpop.permute.xlu0 %2018
      %v2021 = vsel %vm1221, %v2017, 0
      %v2024 = vsel %vm1221, %v2019, 0
      %2026 = vmatprep.subr.bf16.mxu0 0
      %2027 = vmatpush1.bf16.xpose.msra.mxu0 %v2024
      %2028 = vmatprep.subr.bf16.mxu0 0
      %2029 = vmatpush1.bf16.xpose.msra.mxu0 0
      %2030 = vmatprep.subr.bf16.mxu0 0
      %2031 = vmatpush1.bf16.xpose.msra.mxu0 0
      %2032 = vmatprep.subr.bf16.mxu0 0
      %2033 = vmatpush1.bf16.xpose.msra.mxu0 0
      %2034 = vmatprep.subr.bf16.mxu0 0
      %2035 = vmatpush1.bf16.xpose.msra.mxu0 0
      %2036 = vmatprep.subr.bf16.mxu0 0
      %2037 = vmatpush1.bf16.xpose.msra.mxu0 0
      %2038 = vmatprep.subr.bf16.mxu0 0
      %2039 = vmatpush1.bf16.xpose.msra.mxu0 0
      %2040 = vmatprep.subr.bf16.mxu0 0
      %2041 = vmatpush1.bf16.xpose.msra.mxu0 0
      %2042 = vmatprep.subr.bf16.mxu0 0
      %2043 = vmatpush1.bf16.xpose.msra.mxu0 0
      %2044 = vmatprep.subr.bf16.mxu0 0
      %2045 = vmatpush1.bf16.xpose.msra.mxu0 0
      %2046 = vmatprep.subr.bf16.mxu0 0
      %2047 = vmatpush1.bf16.xpose.msra.mxu0 0
      %2048 = vmatprep.subr.bf16.mxu0 0
      %2049 = vmatpush1.bf16.xpose.msra.mxu0 0
      %2050 = vmatprep.subr.bf16.mxu0 0
      %2051 = vmatpush1.bf16.xpose.msra.mxu0 0
      %2052 = vmatprep.subr.bf16.mxu0 0
      %2053 = vmatpush1.bf16.xpose.msra.mxu0 0
      %2054 = vmatprep.subr.bf16.mxu0 0
      %2055 = vmatpush1.bf16.xpose.msra.mxu0 0
      %2056 = vmatprep.subr.bf16.mxu0 0
      %2057 = vmatpush1.bf16.xpose.msra.mxu0 0
      %2058 = vmatprep.mubr.bf16.mxu0 0
      %2059 = vmatmul.mubr.bf16.gmra.mrb[0].mxu0 %v2021
      %v2060 = vpop.f32.mrb[0].mxu0
      %v2061 = vadd.f32 0.0, %v2060
      %v2062 = vpop.f32.mrb[0].mxu0
      %v2063 = vpop.f32.mrb[0].mxu0
      %v2064 = vadd.f32 0.0, %v2063
      %v2065 = vpop.f32.mrb[0].mxu0
      %2066 = vdwg.mxu0
      %2067 = vrot.lane.b32.xlu0 %v1312, 104
      %v2068 = vpop.permute.xlu0 %2067
      %2069 = vrot.lane.b32.xlu0 %v1312, 72
      %v2070 = vpop.permute.xlu0 %2069
      %v2072 = vsel %vm1221, %v2068, 0
      %v2075 = vsel %vm1221, %v2070, 0
      %2077 = vmatprep.subr.bf16.mxu0 0
      %2078 = vmatpush1.bf16.xpose.msra.mxu0 %v2075
      %2079 = vmatprep.subr.bf16.mxu0 0
      %2080 = vmatpush1.bf16.xpose.msra.mxu0 0
      %2081 = vmatprep.subr.bf16.mxu0 0
      %2082 = vmatpush1.bf16.xpose.msra.mxu0 0
      %2083 = vmatprep.subr.bf16.mxu0 0
      %2084 = vmatpush1.bf16.xpose.msra.mxu0 0
      %2085 = vmatprep.subr.bf16.mxu0 0
      %2086 = vmatpush1.bf16.xpose.msra.mxu0 0
      %2087 = vmatprep.subr.bf16.mxu0 0
      %2088 = vmatpush1.bf16.xpose.msra.mxu0 0
      %2089 = vmatprep.subr.bf16.mxu0 0
      %2090 = vmatpush1.bf16.xpose.msra.mxu0 0
      %2091 = vmatprep.subr.bf16.mxu0 0
      %2092 = vmatpush1.bf16.xpose.msra.mxu0 0
      %2093 = vmatprep.subr.bf16.mxu0 0
      %2094 = vmatpush1.bf16.xpose.msra.mxu0 0
      %2095 = vmatprep.subr.bf16.mxu0 0
      %2096 = vmatpush1.bf16.xpose.msra.mxu0 0
      %2097 = vmatprep.subr.bf16.mxu0 0
      %2098 = vmatpush1.bf16.xpose.msra.mxu0 0
      %2099 = vmatprep.subr.bf16.mxu0 0
      %2100 = vmatpush1.bf16.xpose.msra.mxu0 0
      %2101 = vmatprep.subr.bf16.mxu0 0
      %2102 = vmatpush1.bf16.xpose.msra.mxu0 0
      %2103 = vmatprep.subr.bf16.mxu0 0
      %2104 = vmatpush1.bf16.xpose.msra.mxu0 0
      %2105 = vmatprep.subr.bf16.mxu0 0
      %2106 = vmatpush1.bf16.xpose.msra.mxu0 0
      %2107 = vmatprep.subr.bf16.mxu0 0
      %2108 = vmatpush1.bf16.xpose.msra.mxu0 0
      %2109 = vmatprep.mubr.bf16.mxu0 0
      %2110 = vmatmul.mubr.bf16.gmra.mrb[0].mxu0 %v2072
      %v2111 = vpop.f32.mrb[0].mxu0
      %v2112 = vadd.f32 0.0, %v2111
      %v2113 = vpop.f32.mrb[0].mxu0
      %v2114 = vpop.f32.mrb[0].mxu0
      %v2115 = vadd.f32 0.0, %v2114
      %v2116 = vpop.f32.mrb[0].mxu0
      %2117 = vdwg.mxu0
      %v2118 = vmul.f32 %v2061, 0.35355338
      %v2119 = vmul.f32 %v2064, 0.35355338
      %v2120 = vmul.f32 %v2112, 0.35355338
      %v2121 = vmul.f32 %v2115, 0.35355338
      %v2122 = vsel %vm1366, %v2118, -inf
      %2123 = vmax.xlane.f32.xlu0 %v2122
      %v2124 = vpop.xlane.xlu0 %2123
      %v2125 = vsel %vm1370, %v2119, -inf
      %2126 = vmax.xlane.f32.xlu0 %v2125
      %v2127 = vpop.xlane.xlu0 %2126
      %v2128 = vsel %vm1366, %v2120, -inf
      %2129 = vmax.xlane.f32.xlu0 %v2128
      %v2130 = vpop.xlane.xlu0 %2129
      %v2131 = vsel %vm1370, %v2121, -inf
      %2132 = vmax.xlane.f32.xlu0 %v2131
      %v2133 = vpop.xlane.xlu0 %2132
      %v2134 = vsub.f32 %v2118, %v2124
      %v2135 = vsub.f32 %v2119, %v2127
      %v2136 = vsub.f32 %v2120, %v2130
      %v2137 = vsub.f32 %v2121, %v2133
      %v2138 = vmul.f32 %v2134, 1.442695
      %v2139 = vpow.pop %v2138
      %v2140 = vmul.f32 %v2135, 1.442695
      %v2141 = vpow.pop %v2140
      %v2142 = vmul.f32 %v2136, 1.442695
      %v2143 = vpow.pop %v2142
      %v2144 = vmul.f32 %v2137, 1.442695
      %v2145 = vpow.pop %v2144
      %v2146 = vsel %vm1366, %v2139, 0.0
      %2147 = vadd.xlane.f32.xlu0 %v2146
      %v2148 = vpop.xlane.xlu0 %2147
      %v2149 = vsel %vm1370, %v2141, 0.0
      %2150 = vadd.xlane.f32.xlu0 %v2149
      %v2151 = vpop.xlane.xlu0 %2150
      %v2152 = vsel %vm1366, %v2143, 0.0
      %2153 = vadd.xlane.f32.xlu0 %v2152
      %v2154 = vpop.xlane.xlu0 %2153
      %v2155 = vsel %vm1370, %v2145, 0.0
      %2156 = vadd.xlane.f32.xlu0 %v2155
      %v2157 = vpop.xlane.xlu0 %2156
      %v2158 = vrcp.pop %v2148
      %v2159 = vrcp.pop %v2151
      %v2160 = vrcp.pop %v2154
      %v2161 = vrcp.pop %v2157
      %v2162 = vmul.f32 %v2139, %v2158
      %v2163 = vmul.f32 %v2141, %v2159
      %v2164 = vmul.f32 %v2143, %v2160
      %v2165 = vmul.f32 %v2145, %v2161
      %v2166 = vpack.c.bf16 %v2163, %v2162
      %v2167 = vpack.c.bf16 %v2165, %v2164
      %2168 = vrot.lane.b32.xlu0 %v1218, 40
      %v2169 = vpop.permute.xlu0 %2168
      %v2171 = vsel %vm1366, %v2166, 0
      %v2174 = vand.u32 %v2169, %v1422
      %2176 = vmatprep.subr.bf16.mxu0 0
      %2177 = vmatpush1.bf16.msra.mxu0 %v2174
      %2178 = vmatprep.subr.bf16.mxu0 0
      %2179 = vmatpush1.bf16.msra.mxu0 0
      %2180 = vmatprep.subr.bf16.mxu0 0
      %2181 = vmatpush1.bf16.msra.mxu0 0
      %2182 = vmatprep.subr.bf16.mxu0 0
      %2183 = vmatpush1.bf16.msra.mxu0 0
      %2184 = vmatprep.subr.bf16.mxu0 0
      %2185 = vmatpush1.bf16.msra.mxu0 0
      %2186 = vmatprep.subr.bf16.mxu0 0
      %2187 = vmatpush1.bf16.msra.mxu0 0
      %2188 = vmatprep.subr.bf16.mxu0 0
      %2189 = vmatpush1.bf16.msra.mxu0 0
      %2190 = vmatprep.subr.bf16.mxu0 0
      %2191 = vmatpush1.bf16.msra.mxu0 0
      %2192 = vmatprep.subr.bf16.mxu0 0
      %2193 = vmatpush1.bf16.msra.mxu0 0
      %2194 = vmatprep.subr.bf16.mxu0 0
      %2195 = vmatpush1.bf16.msra.mxu0 0
      %2196 = vmatprep.subr.bf16.mxu0 0
      %2197 = vmatpush1.bf16.msra.mxu0 0
      %2198 = vmatprep.subr.bf16.mxu0 0
      %2199 = vmatpush1.bf16.msra.mxu0 0
      %2200 = vmatprep.subr.bf16.mxu0 0
      %2201 = vmatpush1.bf16.msra.mxu0 0
      %2202 = vmatprep.subr.bf16.mxu0 0
      %2203 = vmatpush1.bf16.msra.mxu0 0
      %2204 = vmatprep.subr.bf16.mxu0 0
      %2205 = vmatpush1.bf16.msra.mxu0 0
      %2206 = vmatprep.subr.bf16.mxu0 0
      %2207 = vmatpush1.bf16.msra.mxu0 0
      %2208 = vmatprep.mubr.bf16.mxu0 0
      %2209 = vmatmul.mubr.bf16.gmra.mrb[0].mxu0 %v2171
      %v2210 = vpop.f32.mrb[0].mxu0
      %v2211 = vadd.f32 0.0, %v2210
      %v2212 = vpop.f32.mrb[0].mxu0
      %v2213 = vpop.f32.mrb[0].mxu0
      %v2214 = vadd.f32 0.0, %v2213
      %v2215 = vpop.f32.mrb[0].mxu0
      %2216 = vdwg.mxu0
      %2217 = vrot.lane.b32.xlu0 %v1312, 40
      %v2218 = vpop.permute.xlu0 %2217
      %v2220 = vsel %vm1366, %v2167, 0
      %v2223 = vand.u32 %v2218, %v1422
      %2225 = vmatprep.subr.bf16.mxu0 0
      %2226 = vmatpush1.bf16.msra.mxu0 %v2223
      %2227 = vmatprep.subr.bf16.mxu0 0
      %2228 = vmatpush1.bf16.msra.mxu0 0
      %2229 = vmatprep.subr.bf16.mxu0 0
      %2230 = vmatpush1.bf16.msra.mxu0 0
      %2231 = vmatprep.subr.bf16.mxu0 0
      %2232 = vmatpush1.bf16.msra.mxu0 0
      %2233 = vmatprep.subr.bf16.mxu0 0
      %2234 = vmatpush1.bf16.msra.mxu0 0
      %2235 = vmatprep.subr.bf16.mxu0 0
      %2236 = vmatpush1.bf16.msra.mxu0 0
      %2237 = vmatprep.subr.bf16.mxu0 0
      %2238 = vmatpush1.bf16.msra.mxu0 0
      %2239 = vmatprep.subr.bf16.mxu0 0
      %2240 = vmatpush1.bf16.msra.mxu0 0
      %2241 = vmatprep.subr.bf16.mxu0 0
      %2242 = vmatpush1.bf16.msra.mxu0 0
      %2243 = vmatprep.subr.bf16.mxu0 0
      %2244 = vmatpush1.bf16.msra.mxu0 0
      %2245 = vmatprep.subr.bf16.mxu0 0
      %2246 = vmatpush1.bf16.msra.mxu0 0
      %2247 = vmatprep.subr.bf16.mxu0 0
      %2248 = vmatpush1.bf16.msra.mxu0 0
      %2249 = vmatprep.subr.bf16.mxu0 0
      %2250 = vmatpush1.bf16.msra.mxu0 0
      %2251 = vmatprep.subr.bf16.mxu0 0
      %2252 = vmatpush1.bf16.msra.mxu0 0
      %2253 = vmatprep.subr.bf16.mxu0 0
      %2254 = vmatpush1.bf16.msra.mxu0 0
      %2255 = vmatprep.subr.bf16.mxu0 0
      %2256 = vmatpush1.bf16.msra.mxu0 0
      %2257 = vmatprep.mubr.bf16.mxu0 0
      %2258 = vmatmul.mubr.bf16.gmra.mrb[0].mxu0 %v2220
      %v2259 = vpop.f32.mrb[0].mxu0
      %v2260 = vadd.f32 0.0, %v2259
      %v2261 = vpop.f32.mrb[0].mxu0
      %v2262 = vpop.f32.mrb[0].mxu0
      %v2263 = vadd.f32 0.0, %v2262
      %v2264 = vpop.f32.mrb[0].mxu0
      %2265 = vdwg.mxu0
      %2270 = vrot.lane.b32.xlu0 %v1711, 8
      %v2271 = vpop.permute.xlu0 %2270
      %2272 = vrot.lane.b32.xlu0 %v1714, 8
      %v2273 = vpop.permute.xlu0 %2272
      %2274 = vrot.lane.b32.xlu0 %v1760, 8
      %v2275 = vpop.permute.xlu0 %2274
      %2276 = vrot.lane.b32.xlu0 %v1763, 8
      %v2277 = vpop.permute.xlu0 %2276
      %2286 = vrot.lane.b32.xlu0 %v1961, 16
      %v2287 = vpop.permute.xlu0 %2286
      %2288 = vrot.lane.b32.xlu0 %v1964, 16
      %v2289 = vpop.permute.xlu0 %2288
      %2290 = vrot.lane.b32.xlu0 %v2010, 16
      %v2291 = vpop.permute.xlu0 %2290
      %2292 = vrot.lane.b32.xlu0 %v2013, 16
      %v2293 = vpop.permute.xlu0 %2292
      %2302 = vrot.lane.b32.xlu0 %v2211, 24
      %v2303 = vpop.permute.xlu0 %2302
      %2304 = vrot.lane.b32.xlu0 %v2214, 24
      %v2305 = vpop.permute.xlu0 %2304
      %2306 = vrot.lane.b32.xlu0 %v2260, 24
      %v2307 = vpop.permute.xlu0 %2306
      %2308 = vrot.lane.b32.xlu0 %v2263, 24
      %v2309 = vpop.permute.xlu0 %2308
      %v2314 = vsel %vm1221, %v1461, %v2271
      %v2315 = vsel %vm1221, %v1464, %v2273
      %v2316 = vsel %vm1221, %v1510, %v2275
      %v2317 = vsel %vm1221, %v1513, %v2277
      %vm2318 = vcmask 130048
      %v2319 = vsel %vm2318, %v2314, %v2287
      %v2320 = vsel %vm2318, %v2315, %v2289
      %v2321 = vsel %vm2318, %v2316, %v2291
      %v2322 = vsel %vm2318, %v2317, %v2293
      %vm2323 = vcmask 195584
      %v2324 = vsel %vm2323, %v2319, %v2303
      %v2325 = vsel %vm2323, %v2320, %v2305
      %v2326 = vsel %vm2323, %v2321, %v2307
      %v2327 = vsel %vm2323, %v2322, %v2309
      %v2332 = vcombine.high %v2324, %v2324
      %v2334 = vunpack.c.l.s4 1966171168
      %v2335 = vunpack.c.0.s8 %v2334
      %v2336 = vlaneseq
      %v2337 = vshrl.u32 %v2336, 7
      %v2338 = vsub.s32 %v2335, %v2337
      %v2339 = vrot.slane %v2324, %v2338
      %v2341 = vunpack.c.l.s4 1966171168
      %v2342 = vunpack.c.0.s8 %v2341
      %v2343 = vlaneseq
      %v2344 = vshrl.u32 %v2343, 7
      %v2345 = vsub.s32 %v2342, %v2344
      %v2346 = vrot.slane %v2332, %v2345
      %v2347 = vcombine.high %v2339, %v2339
      %v2348 = vcombine.high %v2346, %v2346
      %v2350 = vunpack.c.l.s4 1966171168
      %v2351 = vunpack.c.0.s8 %v2350
      %v2352 = vlaneseq
      %v2353 = vshrl.u32 %v2352, 7
      %v2354 = vsub.s32 %v2351, %v2353
      %v2355 = vrot.slane %v2339, %v2354
      %v2357 = vunpack.c.l.s4 1966171168
      %v2358 = vunpack.c.0.s8 %v2357
      %v2359 = vlaneseq
      %v2360 = vshrl.u32 %v2359, 7
      %v2361 = vsub.s32 %v2358, %v2360
      %v2362 = vrot.slane %v2346, %v2361
      %v2364 = vunpack.c.l.s4 1966171168
      %v2365 = vunpack.c.0.s8 %v2364
      %v2366 = vlaneseq
      %v2367 = vshrl.u32 %v2366, 7
      %v2368 = vsub.s32 %v2365, %v2367
      %v2369 = vrot.slane %v2347, %v2368
      %v2371 = vunpack.c.l.s4 1966171168
      %v2372 = vunpack.c.0.s8 %v2371
      %v2373 = vlaneseq
      %v2374 = vshrl.u32 %v2373, 7
      %v2375 = vsub.s32 %v2372, %v2374
      %v2376 = vrot.slane %v2348, %v2375
      %v2377 = vcombine.high %v2355, %v2355
      %v2378 = vcombine.high %v2362, %v2362
      %v2379 = vcombine.high %v2369, %v2369
      %v2380 = vcombine.high %v2376, %v2376
      %v2382 = vunpack.c.l.s4 1966171168
      %v2383 = vunpack.c.0.s8 %v2382
      %v2384 = vlaneseq
      %v2385 = vshrl.u32 %v2384, 7
      %v2386 = vsub.s32 %v2383, %v2385
      %v2387 = vrot.slane %v2325, %v2386
      %v2389 = vunpack.c.l.s4 1966171168
      %v2390 = vunpack.c.0.s8 %v2389
      %v2391 = vlaneseq
      %v2392 = vshrl.u32 %v2391, 7
      %v2393 = vsub.s32 %v2390, %v2392
      %v2394 = vrot.slane %v2387, %v2393
      %v2395 = vcombine.high %v2326, %v2326
      %v2397 = vunpack.c.l.s4 1966171168
      %v2398 = vunpack.c.0.s8 %v2397
      %v2399 = vlaneseq
      %v2400 = vshrl.u32 %v2399, 7
      %v2401 = vsub.s32 %v2398, %v2400
      %v2402 = vrot.slane %v2326, %v2401
      %v2404 = vunpack.c.l.s4 1966171168
      %v2405 = vunpack.c.0.s8 %v2404
      %v2406 = vlaneseq
      %v2407 = vshrl.u32 %v2406, 7
      %v2408 = vsub.s32 %v2405, %v2407
      %v2409 = vrot.slane %v2395, %v2408
      %v2410 = vcombine.high %v2402, %v2402
      %v2411 = vcombine.high %v2409, %v2409
      %v2413 = vunpack.c.l.s4 1966171168
      %v2414 = vunpack.c.0.s8 %v2413
      %v2415 = vlaneseq
      %v2416 = vshrl.u32 %v2415, 7
      %v2417 = vsub.s32 %v2414, %v2416
      %v2418 = vrot.slane %v2402, %v2417
      %v2420 = vunpack.c.l.s4 1966171168
      %v2421 = vunpack.c.0.s8 %v2420
      %v2422 = vlaneseq
      %v2423 = vshrl.u32 %v2422, 7
      %v2424 = vsub.s32 %v2421, %v2423
      %v2425 = vrot.slane %v2409, %v2424
      %v2427 = vunpack.c.l.s4 1966171168
      %v2428 = vunpack.c.0.s8 %v2427
      %v2429 = vlaneseq
      %v2430 = vshrl.u32 %v2429, 7
      %v2431 = vsub.s32 %v2428, %v2430
      %v2432 = vrot.slane %v2410, %v2431
      %v2434 = vunpack.c.l.s4 1966171168
      %v2435 = vunpack.c.0.s8 %v2434
      %v2436 = vlaneseq
      %v2437 = vshrl.u32 %v2436, 7
      %v2438 = vsub.s32 %v2435, %v2437
      %v2439 = vrot.slane %v2411, %v2438
      %v2440 = vcombine.high %v2418, %v2418
      %v2441 = vcombine.high %v2425, %v2425
      %v2442 = vcombine.high %v2432, %v2432
      %v2443 = vcombine.high %v2439, %v2439
      %v2445 = vunpack.c.l.s4 1966171168
      %v2446 = vunpack.c.0.s8 %v2445
      %v2447 = vlaneseq
      %v2448 = vshrl.u32 %v2447, 7
      %v2449 = vsub.s32 %v2446, %v2448
      %v2450 = vrot.slane %v2327, %v2449
      %v2452 = vunpack.c.l.s4 1966171168
      %v2453 = vunpack.c.0.s8 %v2452
      %v2454 = vlaneseq
      %v2455 = vshrl.u32 %v2454, 7
      %v2456 = vsub.s32 %v2453, %v2455
      %v2457 = vrot.slane %v2450, %v2456
      %v2458 = vcombine.low %v2355, %v2369
      %v2459 = vcombine.low %v2377, %v2379
      %v2460 = vcombine.low %v2362, %v2376
      %v2461 = vcombine.low %v2378, %v2380
      %v2463 = vunpack.c.l.s4 1966171168
      %v2464 = vunpack.c.0.s8 %v2463
      %v2465 = vlaneseq
      %v2466 = vshrl.u32 %v2465, 7
      %v2467 = vsub.s32 %v2464, %v2466
      %v2468 = vrot.slane %v2458, %v2467
      %v2470 = vunpack.c.l.s4 1966171168
      %v2471 = vunpack.c.0.s8 %v2470
      %v2472 = vlaneseq
      %v2473 = vshrl.u32 %v2472, 7
      %v2474 = vsub.s32 %v2471, %v2473
      %v2475 = vrot.slane %v2459, %v2474
      %v2477 = vunpack.c.l.s4 1966171168
      %v2478 = vunpack.c.0.s8 %v2477
      %v2479 = vlaneseq
      %v2480 = vshrl.u32 %v2479, 7
      %v2481 = vsub.s32 %v2478, %v2480
      %v2482 = vrot.slane %v2460, %v2481
      %v2484 = vunpack.c.l.s4 1966171168
      %v2485 = vunpack.c.0.s8 %v2484
      %v2486 = vlaneseq
      %v2487 = vshrl.u32 %v2486, 7
      %v2488 = vsub.s32 %v2485, %v2487
      %v2489 = vrot.slane %v2461, %v2488
      %v2490 = vcombine.low %v2468, %v2475
      %v2491 = vcombine.low %v2482, %v2489
      %v2493 = vunpack.c.l.s4 1966171168
      %v2494 = vunpack.c.0.s8 %v2493
      %v2495 = vlaneseq
      %v2496 = vshrl.u32 %v2495, 7
      %v2497 = vsub.s32 %v2494, %v2496
      %v2498 = vrot.slane %v2490, %v2497
      %v2500 = vunpack.c.l.s4 1966171168
      %v2501 = vunpack.c.0.s8 %v2500
      %v2502 = vlaneseq
      %v2503 = vshrl.u32 %v2502, 7
      %v2504 = vsub.s32 %v2501, %v2503
      %v2505 = vrot.slane %v2491, %v2504
      %v2506 = vcombine.low %v2498, %v2505
      %v2507 = vcombine.low %v2394, %v2418
      %v2508 = vcombine.low %v2432, %v2440
      %v2509 = vcombine.low %v2442, %v2425
      %v2510 = vcombine.low %v2439, %v2441
      %v2512 = vunpack.c.l.s4 1966171168
      %v2513 = vunpack.c.0.s8 %v2512
      %v2514 = vlaneseq
      %v2515 = vshrl.u32 %v2514, 7
      %v2516 = vsub.s32 %v2513, %v2515
      %v2517 = vrot.slane %v2507, %v2516
      %v2519 = vunpack.c.l.s4 1966171168
      %v2520 = vunpack.c.0.s8 %v2519
      %v2521 = vlaneseq
      %v2522 = vshrl.u32 %v2521, 7
      %v2523 = vsub.s32 %v2520, %v2522
      %v2524 = vrot.slane %v2508, %v2523
      %v2526 = vunpack.c.l.s4 1966171168
      %v2527 = vunpack.c.0.s8 %v2526
      %v2528 = vlaneseq
      %v2529 = vshrl.u32 %v2528, 7
      %v2530 = vsub.s32 %v2527, %v2529
      %v2531 = vrot.slane %v2509, %v2530
      %v2533 = vunpack.c.l.s4 1966171168
      %v2534 = vunpack.c.0.s8 %v2533
      %v2535 = vlaneseq
      %v2536 = vshrl.u32 %v2535, 7
      %v2537 = vsub.s32 %v2534, %v2536
      %v2538 = vrot.slane %v2510, %v2537
      %v2539 = vcombine.low %v2517, %v2524
      %v2540 = vcombine.low %v2531, %v2538
      %v2542 = vunpack.c.l.s4 1966171168
      %v2543 = vunpack.c.0.s8 %v2542
      %v2544 = vlaneseq
      %v2545 = vshrl.u32 %v2544, 7
      %v2546 = vsub.s32 %v2543, %v2545
      %v2547 = vrot.slane %v2539, %v2546
      %v2549 = vunpack.c.l.s4 1966171168
      %v2550 = vunpack.c.0.s8 %v2549
      %v2551 = vlaneseq
      %v2552 = vshrl.u32 %v2551, 7
      %v2553 = vsub.s32 %v2550, %v2552
      %v2554 = vrot.slane %v2540, %v2553
      %v2555 = vcombine.low %v2547, %v2554
      %v2556 = vcombine.low %v2443, %v2457
      %v2558 = vunpack.c.l.s4 1966171168
      %v2559 = vunpack.c.0.s8 %v2558
      %v2560 = vlaneseq
      %v2561 = vshrl.u32 %v2560, 7
      %v2562 = vsub.s32 %v2559, %v2561
      %v2563 = vrot.slane %v2556, %v2562
      %v2565 = vunpack.c.l.s4 1966171168
      %v2566 = vunpack.c.0.s8 %v2565
      %v2567 = vlaneseq
      %v2568 = vshrl.u32 %v2567, 7
      %v2569 = vsub.s32 %v2566, %v2568
      %v2570 = vrot.slane %v2563, %v2569
      %v2574 = vpack.c.bf16 %v2555, %v2506
      %v2575 = vpack.c.bf16 %v2570, %v2570
      %v2576 = vld [vmem:[%s647] sm:$0xf]
      %v2577 = vld [vmem:[%s647 + $0x4] sm:$0xf]
      %v2578 = vld [vmem:[%s647 + $0x8] sm:$0xf]
      %v2579 = vld [vmem:[%s647 + $0xc] sm:$0xf]
      %v2580 = vld [vmem:[%s650] sm:$0x1]
      %v2582 = vlaneseq
      %v2583 = vshrl.u32 %v2582, 7
      %v2584 = vsub.s32 0, %v2583
      %v2585 = vrot.slane %v2580, %v2584
      %v2591 = vunpack.c.l.b16 %v2576
      %v2592 = vunpack.c.l.b16 %v2577
      %v2593 = vunpack.c.l.b16 %v2578
      %v2594 = vunpack.c.l.b16 %v2579
      %v2595 = vpack.c.b16 %v2592, %v2591
      %v2596 = vpack.c.b16 %v2594, %v2593
      %v2600 = vsel %vm951, %v2574, 0
      %v2603 = vsel %vm951, %v2575, 0
      %2605 = vmatprep.subr.bf16.mxu0 0
      %2606 = vmatpush1.bf16.msra.mxu0 %v2595
      %2607 = vmatprep.subr.bf16.mxu0 0
      %2608 = vmatpush1.bf16.msra.mxu0 %v2596
      %2609 = vmatprep.subr.bf16.mxu0 0
      %2610 = vmatpush1.bf16.msra.mxu0 0
      %2611 = vmatprep.subr.bf16.mxu0 0
      %2612 = vmatpush1.bf16.msra.mxu0 0
      %2613 = vmatprep.subr.bf16.mxu0 0
      %2614 = vmatpush1.bf16.msra.mxu0 0
      %2615 = vmatprep.subr.bf16.mxu0 0
      %2616 = vmatpush1.bf16.msra.mxu0 0
      %2617 = vmatprep.subr.bf16.mxu0 0
      %2618 = vmatpush1.bf16.msra.mxu0 0
      %2619 = vmatprep.subr.bf16.mxu0 0
      %2620 = vmatpush1.bf16.msra.mxu0 0
      %2621 = vmatprep.subr.bf16.mxu0 0
      %2622 = vmatpush1.bf16.msra.mxu0 0
      %2623 = vmatprep.subr.bf16.mxu0 0
      %2624 = vmatpush1.bf16.msra.mxu0 0
      %2625 = vmatprep.subr.bf16.mxu0 0
      %2626 = vmatpush1.bf16.msra.mxu0 0
      %2627 = vmatprep.subr.bf16.mxu0 0
      %2628 = vmatpush1.bf16.msra.mxu0 0
      %2629 = vmatprep.subr.bf16.mxu0 0
      %2630 = vmatpush1.bf16.msra.mxu0 0
      %2631 = vmatprep.subr.bf16.mxu0 0
      %2632 = vmatpush1.bf16.msra.mxu0 0
      %2633 = vmatprep.subr.bf16.mxu0 0
      %2634 = vmatpush1.bf16.msra.mxu0 0
      %2635 = vmatprep.subr.bf16.mxu0 0
      %2636 = vmatpush1.bf16.msra.mxu0 0
      %2637 = vmatprep.mubr.bf16.mxu0 0
      %2638 = vmatmul.mubr.bf16.gmra.mrb[0].mxu0 %v2600
      %v2639 = vpop.f32.mrb[0].mxu0
      %v2640 = vadd.f32 %v2585, %v2639
      %v2641 = vpop.f32.mrb[0].mxu0
      %v2642 = vpop.f32.mrb[0].mxu0
      %v2643 = vadd.f32 %v2585, %v2642
      %v2644 = vpop.f32.mrb[0].mxu0
      %2645 = vmatprep.mubr.bf16.mxu0 0
      %2646 = vmatmul.mubr.bf16.gmra.mrb[0].mxu0 %v2603
      %v2647 = vpop.f32.mrb[0].mxu0
      %v2648 = vadd.f32 %v2585, %v2647
      %v2649 = vpop.f32.mrb[0].mxu0
      %v2650 = vpop.f32.mrb[0].mxu0
      %v2651 = vpop.f32.mrb[0].mxu0
      %2652 = vdwg.mxu0
      %v2653 = vadd.f32 %v946, %v2640
      %v2654 = vadd.f32 %v947, %v2643
      %v2655 = vadd.f32 %v948, %v2648
      %v2656 = vld [vmem:[%s653] sm:$0x1]
      %v2657 = vld [vmem:[%s656] sm:$0x1]
      %v2658 = vsel %vm951, %v2653, 0.0
      %2659 = vadd.xlane.f32.xlu0 %v2658
      %v2660 = vpop.xlane.xlu0 %2659
      %v2661 = vsel %vm951, %v2654, 0.0
      %2662 = vadd.xlane.f32.xlu0 %v2661
      %v2663 = vpop.xlane.xlu0 %2662
      %v2664 = vsel %vm958, %v2655, 0.0
      %2665 = vadd.xlane.f32.xlu0 %v2664
      %v2666 = vpop.xlane.xlu0 %2665
      %v2667 = vmul.f32 %v2660, %v962
      %v2668 = vmul.f32 %v2663, %v962
      %v2669 = vmul.f32 %v2666, %v962
      %v2670 = vsub.f32 %v2653, %v2667
      %v2671 = vsub.f32 %v2654, %v2668
      %v2672 = vsub.f32 %v2655, %v2669
      %v2673 = vmul.f32 %v2670, %v2670
      %v2674 = vmul.f32 %v2671, %v2671
      %v2675 = vmul.f32 %v2672, %v2672
      %v2676 = vsel %vm951, %v2673, 0.0
      %2677 = vadd.xlane.f32.xlu0 %v2676
      %v2678 = vpop.xlane.xlu0 %2677
      %v2679 = vsel %vm951, %v2674, 0.0
      %2680 = vadd.xlane.f32.xlu0 %v2679
      %v2681 = vpop.xlane.xlu0 %2680
      %v2682 = vsel %vm958, %v2675, 0.0
      %2683 = vadd.xlane.f32.xlu0 %v2682
      %v2684 = vpop.xlane.xlu0 %2683
      %v2685 = vmul.f32 %v2678, %v962
      %v2686 = vmul.f32 %v2681, %v962
      %v2687 = vmul.f32 %v2684, %v962
      %v2688 = vadd.f32 %v2685, 1e-05
      %v2689 = vadd.f32 %v2686, 1e-05
      %v2690 = vadd.f32 %v2687, 1e-05
      %v2691 = vrsqrt.pop %v2688
      %v2692 = vrsqrt.pop %v2689
      %v2693 = vrsqrt.pop %v2690
      %v2694 = vmul.f32 %v2670, %v2691
      %v2695 = vmul.f32 %v2671, %v2692
      %v2696 = vmul.f32 %v2672, %v2693
      %v2698 = vlaneseq
      %v2699 = vshrl.u32 %v2698, 7
      %v2700 = vsub.s32 0, %v2699
      %v2701 = vrot.slane %v2656, %v2700
      %v2703 = vmul.f32 %v2694, %v2701
      %v2704 = vmul.f32 %v2695, %v2701
      %v2705 = vmul.f32 %v2696, %v2701
      %v2707 = vlaneseq
      %v2708 = vshrl.u32 %v2707, 7
      %v2709 = vsub.s32 0, %v2708
      %v2710 = vrot.slane %v2657, %v2709
      %v2712 = vadd.f32 %v2703, %v2710
      %v2713 = vadd.f32 %v2704, %v2710
      %v2714 = vadd.f32 %v2705, %v2710
      %v2715 = vpack.c.bf16 %v2713, %v2712
      %v2716 = vpack.c.bf16 %v2714, %v2714
      %v2717 = vld [vmem:[%s661] sm:$0xf]
      %v2718 = vld [vmem:[%s661 + $0x4] sm:$0xf]
      %v2719 = vld [vmem:[%s661 + $0x8] sm:$0xf]
      %v2720 = vld [vmem:[%s661 + $0xc] sm:$0xf]
      %v2721 = vld [vmem:[%s664] sm:$0x1]
      %v2723 = vlaneseq
      %v2724 = vshrl.u32 %v2723, 7
      %v2725 = vsub.s32 0, %v2724
      %v2726 = vrot.slane %v2721, %v2725
      %v2732 = vunpack.c.l.b16 %v2717
      %v2733 = vunpack.c.l.b16 %v2718
      %v2734 = vunpack.c.l.b16 %v2719
      %v2735 = vunpack.c.l.b16 %v2720
      %v2736 = vpack.c.b16 %v2733, %v2732
      %v2737 = vpack.c.b16 %v2735, %v2734
      %v2741 = vsel %vm951, %v2715, 0
      %v2744 = vsel %vm951, %v2716, 0
      %2746 = vmatprep.subr.bf16.mxu0 0
      %2747 = vmatpush1.bf16.msra.mxu0 %v2736
      %2748 = vmatprep.subr.bf16.mxu0 0
      %2749 = vmatpush1.bf16.msra.mxu0 %v2737
      %2750 = vmatprep.subr.bf16.mxu0 0
      %2751 = vmatpush1.bf16.msra.mxu0 0
      %2752 = vmatprep.subr.bf16.mxu0 0
      %2753 = vmatpush1.bf16.msra.mxu0 0
      %2754 = vmatprep.subr.bf16.mxu0 0
      %2755 = vmatpush1.bf16.msra.mxu0 0
      %2756 = vmatprep.subr.bf16.mxu0 0
      %2757 = vmatpush1.bf16.msra.mxu0 0
      %2758 = vmatprep.subr.bf16.mxu0 0
      %2759 = vmatpush1.bf16.msra.mxu0 0
      %2760 = vmatprep.subr.bf16.mxu0 0
      %2761 = vmatpush1.bf16.msra.mxu0 0
      %2762 = vmatprep.subr.bf16.mxu0 0
      %2763 = vmatpush1.bf16.msra.mxu0 0
      %2764 = vmatprep.subr.bf16.mxu0 0
      %2765 = vmatpush1.bf16.msra.mxu0 0
      %2766 = vmatprep.subr.bf16.mxu0 0
      %2767 = vmatpush1.bf16.msra.mxu0 0
      %2768 = vmatprep.subr.bf16.mxu0 0
      %2769 = vmatpush1.bf16.msra.mxu0 0
      %2770 = vmatprep.subr.bf16.mxu0 0
      %2771 = vmatpush1.bf16.msra.mxu0 0
      %2772 = vmatprep.subr.bf16.mxu0 0
      %2773 = vmatpush1.bf16.msra.mxu0 0
      %2774 = vmatprep.subr.bf16.mxu0 0
      %2775 = vmatpush1.bf16.msra.mxu0 0
      %2776 = vmatprep.subr.bf16.mxu0 0
      %2777 = vmatpush1.bf16.msra.mxu0 0
      %2778 = vmatprep.mubr.bf16.mxu0 0
      %2779 = vmatmul.mubr.bf16.gmra.mrb[0].mxu0 %v2741
      %v2780 = vpop.f32.mrb[0].mxu0
      %v2781 = vadd.f32 %v2726, %v2780
      %v2782 = vpop.f32.mrb[0].mxu0
      %v2783 = vpop.f32.mrb[0].mxu0
      %v2784 = vadd.f32 %v2726, %v2783
      %v2785 = vpop.f32.mrb[0].mxu0
      %2786 = vmatprep.mubr.bf16.mxu0 0
      %2787 = vmatmul.mubr.bf16.gmra.mrb[0].mxu0 %v2744
      %v2788 = vpop.f32.mrb[0].mxu0
      %v2789 = vadd.f32 %v2726, %v2788
      %v2790 = vpop.f32.mrb[0].mxu0
      %v2791 = vpop.f32.mrb[0].mxu0
      %v2792 = vpop.f32.mrb[0].mxu0
      %2793 = vdwg.mxu0
      %v2794 = vmul.f32 %v2781, 1.702
      %v2795 = vmul.f32 %v2784, 1.702
      %v2796 = vmul.f32 %v2789, 1.702
      %v2797 = vxor.u32 %v2794, 2147483648
      %v2798 = vxor.u32 %v2795, 2147483648
      %v2799 = vxor.u32 %v2796, 2147483648
      %v2800 = vmul.f32 %v2797, 1.442695
      %v2801 = vpow.pop %v2800
      %v2802 = vmul.f32 %v2798, 1.442695
      %v2803 = vpow.pop %v2802
      %v2804 = vmul.f32 %v2799, 1.442695
      %v2805 = vpow.pop %v2804
      %v2806 = vadd.f32 %v2801, 1.0
      %v2807 = vadd.f32 %v2803, 1.0
      %v2808 = vadd.f32 %v2805, 1.0
      %v2809 = vrcp.pop %v2806
      %v2810 = vmul.f32 1.0, %v2809
      %v2811 = vrcp.pop %v2807
      %v2812 = vmul.f32 1.0, %v2811
      %v2813 = vrcp.pop %v2808
      %v2814 = vmul.f32 1.0, %v2813
      %v2815 = vmul.f32 %v2781, %v2810
      %v2816 = vmul.f32 %v2784, %v2812
      %v2817 = vmul.f32 %v2789, %v2814
      %v2818 = vpack.c.bf16 %v2816, %v2815
      %v2819 = vpack.c.bf16 %v2817, %v2817
      %v2820 = vld [vmem:[%s669] sm:$0xf]
      %v2821 = vld [vmem:[%s669 + $0x4] sm:$0xf]
      %v2822 = vld [vmem:[%s669 + $0x8] sm:$0xf]
      %v2823 = vld [vmem:[%s669 + $0xc] sm:$0xf]
      %v2824 = vld [vmem:[%s669 + $0x10] sm:$0xf]
      %v2825 = vld [vmem:[%s669 + $0x14] sm:$0xf]
      %v2826 = vld [vmem:[%s669 + $0x18] sm:$0xf]
      %v2827 = vld [vmem:[%s669 + $0x1c] sm:$0xf]
      %v2828 = vld [vmem:[%s669 + $0x20] sm:$0xf]
      %v2829 = vld [vmem:[%s669 + $0x24] sm:$0xf]
      %v2830 = vld [vmem:[%s669 + $0x28] sm:$0xf]
      %v2831 = vld [vmem:[%s669 + $0x2c] sm:$0xf]
      %v2832 = vld [vmem:[%s669 + $0x30] sm:$0xf]
      %v2833 = vld [vmem:[%s669 + $0x34] sm:$0xf]
      %v2834 = vld [vmem:[%s669 + $0x38] sm:$0xf]
      %v2835 = vld [vmem:[%s669 + $0x3c] sm:$0xf]
      %v2836 = vld [vmem:[%s672] sm:$0x1]
      %v2838 = vlaneseq
      %v2839 = vshrl.u32 %v2838, 7
      %v2840 = vsub.s32 0, %v2839
      %v2841 = vrot.slane %v2836, %v2840
      %v2859 = vunpack.c.l.b16 %v2820
      %v2860 = vunpack.c.l.b16 %v2821
      %v2861 = vunpack.c.l.b16 %v2822
      %v2862 = vunpack.c.l.b16 %v2823
      %v2863 = vunpack.c.l.b16 %v2824
      %v2864 = vunpack.c.l.b16 %v2825
      %v2865 = vunpack.c.l.b16 %v2826
      %v2866 = vunpack.c.l.b16 %v2827
      %v2867 = vunpack.c.l.b16 %v2828
      %v2868 = vunpack.c.l.b16 %v2829
      %v2869 = vunpack.c.l.b16 %v2830
      %v2870 = vunpack.c.l.b16 %v2831
      %v2871 = vunpack.c.l.b16 %v2832
      %v2872 = vunpack.c.l.b16 %v2833
      %v2873 = vunpack.c.l.b16 %v2834
      %v2874 = vunpack.c.l.b16 %v2835
      %v2875 = vpack.c.b16 %v2860, %v2859
      %v2876 = vpack.c.b16 %v2862, %v2861
      %v2877 = vpack.c.b16 %v2864, %v2863
      %v2878 = vpack.c.b16 %v2866, %v2865
      %v2879 = vpack.c.b16 %v2868, %v2867
      %v2880 = vpack.c.b16 %v2870, %v2869
      %v2881 = vpack.c.b16 %v2872, %v2871
      %v2882 = vpack.c.b16 %v2874, %v2873
      %2891 = vmatprep.subr.bf16.mxu0 0
      %2892 = vmatpush1.bf16.msra.mxu0 %v2875
      %2893 = vmatprep.subr.bf16.mxu0 0
      %2894 = vmatpush1.bf16.msra.mxu0 %v2876
      %2895 = vmatprep.subr.bf16.mxu0 0
      %2896 = vmatpush1.bf16.msra.mxu0 %v2877
      %2897 = vmatprep.subr.bf16.mxu0 0
      %2898 = vmatpush1.bf16.msra.mxu0 %v2878
      %2899 = vmatprep.subr.bf16.mxu0 0
      %2900 = vmatpush1.bf16.msra.mxu0 %v2879
      %2901 = vmatprep.subr.bf16.mxu0 0
      %2902 = vmatpush1.bf16.msra.mxu0 %v2880
      %2903 = vmatprep.subr.bf16.mxu0 0
      %2904 = vmatpush1.bf16.msra.mxu0 %v2881
      %2905 = vmatprep.subr.bf16.mxu0 0
      %2906 = vmatpush1.bf16.msra.mxu0 %v2882
      %2907 = vmatprep.subr.bf16.mxu0 0
      %2908 = vmatpush1.bf16.msra.mxu0 0
      %2909 = vmatprep.subr.bf16.mxu0 0
      %2910 = vmatpush1.bf16.msra.mxu0 0
      %2911 = vmatprep.subr.bf16.mxu0 0
      %2912 = vmatpush1.bf16.msra.mxu0 0
      %2913 = vmatprep.subr.bf16.mxu0 0
      %2914 = vmatpush1.bf16.msra.mxu0 0
      %2915 = vmatprep.subr.bf16.mxu0 0
      %2916 = vmatpush1.bf16.msra.mxu0 0
      %2917 = vmatprep.subr.bf16.mxu0 0
      %2918 = vmatpush1.bf16.msra.mxu0 0
      %2919 = vmatprep.subr.bf16.mxu0 0
      %2920 = vmatpush1.bf16.msra.mxu0 0
      %2921 = vmatprep.subr.bf16.mxu0 0
      %2922 = vmatpush1.bf16.msra.mxu0 0
      %2923 = vmatprep.mubr.bf16.mxu0 0
      %2924 = vmatmul.mubr.bf16.gmra.mrb[0].mxu0 %v2818
      %v2925 = vpop.f32.mrb[0].mxu0
      %v2926 = vadd.f32 %v2841, %v2925
      %v2927 = vpop.f32.mrb[0].mxu0
      %v2928 = vpop.f32.mrb[0].mxu0
      %v2929 = vadd.f32 %v2841, %v2928
      %v2930 = vpop.f32.mrb[0].mxu0
      %2931 = vmatprep.mubr.bf16.mxu0 0
      %2932 = vmatmul.mubr.bf16.gmra.mrb[0].mxu0 %v2819
      %v2933 = vpop.f32.mrb[0].mxu0
      %v2934 = vadd.f32 %v2841, %v2933
      %v2935 = vpop.f32.mrb[0].mxu0
      %v2936 = vpop.f32.mrb[0].mxu0
      %v2937 = vpop.f32.mrb[0].mxu0
      %2938 = vdwg.mxu0
      %v2939 = vadd.f32 %v2653, %v2926
      %v2940 = vadd.f32 %v2654, %v2929
      %v2941 = vadd.f32 %v2655, %v2934
      %2942 = vst.msk [vmem:[#allocation2] sm:$0xff] %vm951, %v2939
      %2943 = vst.msk [vmem:[#allocation2 + $0x8] sm:$0xff] %vm951, %v2940
      %2944 = vst.msk [vmem:[#allocation2 + $0x10] sm:$0x3] %vm958, %v2941
      %p2945 = scmp.eq.s32.totalorder %s30, 1
      // Predicated region
      $region81: #{mim_head_forward.4} parent=75 // pred_check
        %p2946 = pneg %p2945
      $region82: #{mim_head_forward.4} parent=75 // pred_check_branch
        %2948 = sbr.rel (%p2946) target = $region84
      $region83: #{mim_head_forward.4} parent=75 // pred_region
        %v2952 = vcombine.high %v2939, %v2939
        %v2954 = vunpack.c.l.s4 1966171168
        %v2955 = vunpack.c.0.s8 %v2954
        %v2956 = vlaneseq
        %v2957 = vshrl.u32 %v2956, 7
        %v2958 = vsub.s32 %v2955, %v2957
        %v2959 = vrot.slane %v2939, %v2958
        %v2961 = vunpack.c.l.s4 1966171168
        %v2962 = vunpack.c.0.s8 %v2961
        %v2963 = vlaneseq
        %v2964 = vshrl.u32 %v2963, 7
        %v2965 = vsub.s32 %v2962, %v2964
        %v2966 = vrot.slane %v2952, %v2965
        %v2967 = vcombine.high %v2959, %v2959
        %v2968 = vcombine.high %v2966, %v2966
        %v2970 = vunpack.c.l.s4 1966171168
        %v2971 = vunpack.c.0.s8 %v2970
        %v2972 = vlaneseq
        %v2973 = vshrl.u32 %v2972, 7
        %v2974 = vsub.s32 %v2971, %v2973
        %v2975 = vrot.slane %v2959, %v2974
        %v2977 = vunpack.c.l.s4 1966171168
        %v2978 = vunpack.c.0.s8 %v2977
        %v2979 = vlaneseq
        %v2980 = vshrl.u32 %v2979, 7
        %v2981 = vsub.s32 %v2978, %v2980
        %v2982 = vrot.slane %v2966, %v2981
        %v2984 = vunpack.c.l.s4 1966171168
        %v2985 = vunpack.c.0.s8 %v2984
        %v2986 = vlaneseq
        %v2987 = vshrl.u32 %v2986, 7
        %v2988 = vsub.s32 %v2985, %v2987
        %v2989 = vrot.slane %v2967, %v2988
        %v2991 = vunpack.c.l.s4 1966171168
        %v2992 = vunpack.c.0.s8 %v2991
        %v2993 = vlaneseq
        %v2994 = vshrl.u32 %v2993, 7
        %v2995 = vsub.s32 %v2992, %v2994
        %v2996 = vrot.slane %v2968, %v2995
        %v2997 = vcombine.high %v2975, %v2975
        %v2998 = vcombine.high %v2982, %v2982
        %v2999 = vcombine.high %v2989, %v2989
        %v3000 = vcombine.high %v2996, %v2996
        %v3001 = vcombine.high %v2940, %v2940
        %v3003 = vunpack.c.l.s4 1966171168
        %v3004 = vunpack.c.0.s8 %v3003
        %v3005 = vlaneseq
        %v3006 = vshrl.u32 %v3005, 7
        %v3007 = vsub.s32 %v3004, %v3006
        %v3008 = vrot.slane %v2940, %v3007
        %v3010 = vunpack.c.l.s4 1966171168
        %v3011 = vunpack.c.0.s8 %v3010
        %v3012 = vlaneseq
        %v3013 = vshrl.u32 %v3012, 7
        %v3014 = vsub.s32 %v3011, %v3013
        %v3015 = vrot.slane %v3001, %v3014
        %v3016 = vcombine.high %v3008, %v3008
        %v3017 = vcombine.high %v3015, %v3015
        %v3019 = vunpack.c.l.s4 1966171168
        %v3020 = vunpack.c.0.s8 %v3019
        %v3021 = vlaneseq
        %v3022 = vshrl.u32 %v3021, 7
        %v3023 = vsub.s32 %v3020, %v3022
        %v3024 = vrot.slane %v3008, %v3023
        %v3026 = vunpack.c.l.s4 1966171168
        %v3027 = vunpack.c.0.s8 %v3026
        %v3028 = vlaneseq
        %v3029 = vshrl.u32 %v3028, 7
        %v3030 = vsub.s32 %v3027, %v3029
        %v3031 = vrot.slane %v3015, %v3030
        %v3033 = vunpack.c.l.s4 1966171168
        %v3034 = vunpack.c.0.s8 %v3033
        %v3035 = vlaneseq
        %v3036 = vshrl.u32 %v3035, 7
        %v3037 = vsub.s32 %v3034, %v3036
        %v3038 = vrot.slane %v3016, %v3037
        %v3040 = vunpack.c.l.s4 1966171168
        %v3041 = vunpack.c.0.s8 %v3040
        %v3042 = vlaneseq
        %v3043 = vshrl.u32 %v3042, 7
        %v3044 = vsub.s32 %v3041, %v3043
        %v3045 = vrot.slane %v3017, %v3044
        %v3046 = vcombine.high %v3024, %v3024
        %v3047 = vcombine.high %v3031, %v3031
        %v3048 = vcombine.high %v3038, %v3038
        %v3049 = vcombine.high %v3045, %v3045
        %v3051 = vunpack.c.l.s4 1966171168
        %v3052 = vunpack.c.0.s8 %v3051
        %v3053 = vlaneseq
        %v3054 = vshrl.u32 %v3053, 7
        %v3055 = vsub.s32 %v3052, %v3054
        %v3056 = vrot.slane %v2941, %v3055
        %v3057 = vcombine.high %v3056, %v3056
        %v3059 = vunpack.c.l.s4 1966171168
        %v3060 = vunpack.c.0.s8 %v3059
        %v3061 = vlaneseq
        %v3062 = vshrl.u32 %v3061, 7
        %v3063 = vsub.s32 %v3060, %v3062
        %v3064 = vrot.slane %v3056, %v3063
        %v3066 = vunpack.c.l.s4 1966171168
        %v3067 = vunpack.c.0.s8 %v3066
        %v3068 = vlaneseq
        %v3069 = vshrl.u32 %v3068, 7
        %v3070 = vsub.s32 %v3067, %v3069
        %v3071 = vrot.slane %v3057, %v3070
        %v3072 = vcombine.low %v2975, %v2989
        %v3073 = vcombine.low %v2997, %v2999
        %v3074 = vcombine.low %v2982, %v2996
        %v3075 = vcombine.low %v2998, %v3000
        %v3077 = vunpack.c.l.s4 1966171168
        %v3078 = vunpack.c.0.s8 %v3077
        %v3079 = vlaneseq
        %v3080 = vshrl.u32 %v3079, 7
        %v3081 = vsub.s32 %v3078, %v3080
        %v3082 = vrot.slane %v3072, %v3081
        %v3084 = vunpack.c.l.s4 1966171168
        %v3085 = vunpack.c.0.s8 %v3084
        %v3086 = vlaneseq
        %v3087 = vshrl.u32 %v3086, 7
        %v3088 = vsub.s32 %v3085, %v3087
        %v3089 = vrot.slane %v3073, %v3088
        %v3091 = vunpack.c.l.s4 1966171168
        %v3092 = vunpack.c.0.s8 %v3091
        %v3093 = vlaneseq
        %v3094 = vshrl.u32 %v3093, 7
        %v3095 = vsub.s32 %v3092, %v3094
        %v3096 = vrot.slane %v3074, %v3095
        %v3098 = vunpack.c.l.s4 1966171168
        %v3099 = vunpack.c.0.s8 %v3098
        %v3100 = vlaneseq
        %v3101 = vshrl.u32 %v3100, 7
        %v3102 = vsub.s32 %v3099, %v3101
        %v3103 = vrot.slane %v3075, %v3102
        %v3104 = vcombine.low %v3082, %v3089
        %v3105 = vcombine.low %v3096, %v3103
        %v3107 = vunpack.c.l.s4 1966171168
        %v3108 = vunpack.c.0.s8 %v3107
        %v3109 = vlaneseq
        %v3110 = vshrl.u32 %v3109, 7
        %v3111 = vsub.s32 %v3108, %v3110
        %v3112 = vrot.slane %v3104, %v3111
        %v3114 = vunpack.c.l.s4 1966171168
        %v3115 = vunpack.c.0.s8 %v3114
        %v3116 = vlaneseq
        %v3117 = vshrl.u32 %v3116, 7
        %v3118 = vsub.s32 %v3115, %v3117
        %v3119 = vrot.slane %v3105, %v3118
        %v3120 = vcombine.low %v3112, %v3119
        %v3122 = vunpack.c.l.s4 1966171168
        %v3123 = vunpack.c.0.s8 %v3122
        %v3124 = vlaneseq
        %v3125 = vshrl.u32 %v3124, 7
        %v3126 = vsub.s32 %v3123, %v3125
        %v3127 = vrot.slane %v3024, %v3126
        %v3129 = vunpack.c.l.s4 1966171168
        %v3130 = vunpack.c.0.s8 %v3129
        %v3131 = vlaneseq
        %v3132 = vshrl.u32 %v3131, 7
        %v3133 = vsub.s32 %v3130, %v3132
        %v3134 = vrot.slane %v3127, %v3133
        %v3135 = vcombine.low %v3038, %v3046
        %v3136 = vcombine.low %v3048, %v3031
        %v3137 = vcombine.low %v3045, %v3047
        %v3138 = vcombine.low %v3049, %v3064
        %v3140 = vunpack.c.l.s4 1966171168
        %v3141 = vunpack.c.0.s8 %v3140
        %v3142 = vlaneseq
        %v3143 = vshrl.u32 %v3142, 7
        %v3144 = vsub.s32 %v3141, %v3143
        %v3145 = vrot.slane %v3135, %v3144
        %v3147 = vunpack.c.l.s4 1966171168
        %v3148 = vunpack.c.0.s8 %v3147
        %v3149 = vlaneseq
        %v3150 = vshrl.u32 %v3149, 7
        %v3151 = vsub.s32 %v3148, %v3150
        %v3152 = vrot.slane %v3136, %v3151
        %v3154 = vunpack.c.l.s4 1966171168
        %v3155 = vunpack.c.0.s8 %v3154
        %v3156 = vlaneseq
        %v3157 = vshrl.u32 %v3156, 7
        %v3158 = vsub.s32 %v3155, %v3157
        %v3159 = vrot.slane %v3137, %v3158
        %v3161 = vunpack.c.l.s4 1966171168
        %v3162 = vunpack.c.0.s8 %v3161
        %v3163 = vlaneseq
        %v3164 = vshrl.u32 %v3163, 7
        %v3165 = vsub.s32 %v3162, %v3164
        %v3166 = vrot.slane %v3138, %v3165
        %v3167 = vcombine.low %v3145, %v3152
        %v3168 = vcombine.low %v3159, %v3166
        %v3170 = vunpack.c.l.s4 1966171168
        %v3171 = vunpack.c.0.s8 %v3170
        %v3172 = vlaneseq
        %v3173 = vshrl.u32 %v3172, 7
        %v3174 = vsub.s32 %v3171, %v3173
        %v3175 = vrot.slane %v3167, %v3174
        %v3177 = vunpack.c.l.s4 1966171168
        %v3178 = vunpack.c.0.s8 %v3177
        %v3179 = vlaneseq
        %v3180 = vshrl.u32 %v3179, 7
        %v3181 = vsub.s32 %v3178, %v3180
        %v3182 = vrot.slane %v3168, %v3181
        %v3183 = vcombine.low %v3175, %v3182
        %v3185 = vunpack.c.l.s4 1966171168
        %v3186 = vunpack.c.0.s8 %v3185
        %v3187 = vlaneseq
        %v3188 = vshrl.u32 %v3187, 7
        %v3189 = vsub.s32 %v3186, %v3188
        %v3190 = vrot.slane %v3071, %v3189
        %v3192 = vunpack.c.l.s4 1966171168
        %v3193 = vunpack.c.0.s8 %v3192
        %v3194 = vlaneseq
        %v3195 = vshrl.u32 %v3194, 7
        %v3196 = vsub.s32 %v3193, %v3195
        %v3197 = vrot.slane %v3190, %v3196
        %3202 = vst.msk [vmem:[%s678] sm:$0xff] %vm951, %v3120
        %vm3203 = vcmask 253952
        %3204 = vst.msk [vmem:[%s678 + $0x8] sm:$0x1] %vm3203, %v3134
        %3205 = vst.msk [vmem:[%s678 + $0x10] sm:$0xff] %vm951, %v3183
        %3206 = vst.msk [vmem:[%s678 + $0x18] sm:$0x1] %vm3203, %v3197
      $region84: #{mim_head_forward.4} parent=75 // pred_fallthru
        _
      %s3207 = smul.u32 2, %s29
      %p3208 = scmp.lt.s32.totalorder %s3207, 1
      %s3209 = scalar_select %p3208, %s3207, 1
      %s3210 = smul.addr %s3209, 2
      %s3211 = smul.addr %s3210, 8
      %s3212 = scalar_lea.vmem %s14, %s3211
      // Predicated region
      $region85: #{mim_head_forward.4} parent=75 // pred_check
        %p3213 = pneg %p414
      $region86: #{mim_head_forward.4} parent=75 // pred_check_branch
        %3215 = sbr.rel (%p3213) target = $region88
      $region87: #{mim_head_forward.4} parent=75 // pred_region
        %s3216 = smul.u32 2, %s29
      $region88: #{mim_head_forward.4} parent=75 // pred_fallthru
        _
      // Predicated region
      $region89: #{mim_head_forward.4} parent=75 // pred_check
        %p3217 = pneg %p414
      $region90: #{mim_head_forward.4} parent=75 // pred_check_branch
        %3219 = sbr.rel (%p3217) target = $region92
      $region91: #{mim_head_forward.4} parent=75 // pred_region
        %s3220 = smul.u32 2, %s29
        %p3221 = scmp.lt.s32.totalorder %s3220, 1
        %s3222 = scalar_select %p3221, %s3220, 1
        %s3223 = smul.addr %s3222, 2
        %s3224 = smul.addr %s3223, 8
        %s3225 = scalar_lea.vmem %s14, %s3224
      $region92: #{mim_head_forward.4} parent=75 // pred_fallthru
        _
    $region76: #{mim_head_forward.4} parent=5 // pred_fallthru
      _
    %p3226 = scmp.le.s32.totalorder 2, %s20
    // Predicated region
    $region93: #{mim_head_forward.4} parent=5 // pred_check
      %p3227 = pneg %p3226
    $region94: #{mim_head_forward.4} parent=5 // pred_check_branch
      %3229 = sbr.rel (%p3227) target = $region96
    $region95: #{mim_head_forward.4} parent=5 // pred_region
      %s3230 = ssub.s32 %s20, 2
    $region96: #{mim_head_forward.4} parent=5 // pred_fallthru
      _
  $region6: #{mim_head_forward.4} parent=0 // loop_footer
    %s24 = sadd.s32 1, %s20
  $region7: #{mim_head_forward.4} parent=0 // loop_footer_branch
    %19 = sbr.rel target = $region3
  $region8: #{mim_head_forward.4} parent=0 // loop_exit
    _

</llo_original>
